<compile_context>
chip_gen: v7x
topology: tpu7x:2x2x1
jax: 0.10.0
libtpu: 0.0.40
codegen_flags: <defaults>
</compile_context>

<pallas_src>
import jax
import jax.numpy as jnp
from jax.experimental import pallas as pl
from jax.experimental.pallas import tpu as pltpu

# --- configuration (small shapes, consistent with the module defaults) -------
INPUT_DIM   = 16
NUM_CLASSES = 10
EMBED_DIM   = 32          # embed_dim constructor arg (kept small)
NUM_HEADS   = 4
NUM_LAYERS  = 2
FFN_DIM     = 2048        # nn.TransformerEncoderLayer default dim_feedforward
HEAD_DIM    = EMBED_DIM // NUM_HEADS
LN_EPS      = 1e-5        # nn.LayerNorm default eps
OUT_PAD     = 128         # lane-dense classifier output width (sliced to NUM_CLASSES)


def _layernorm(x, gamma, beta):
    mu  = jnp.mean(x, axis=-1, keepdims=True)
    var = jnp.mean((x - mu) ** 2, axis=-1, keepdims=True)
    return (x - mu) * jax.lax.rsqrt(var + LN_EPS) * gamma + beta


# ------------------------------- kernel --------------------------------------
def transformer_kernel(x_ref, w_emb_ref, b_emb_ref,
                       wqkv_ref, bqkv_ref, wo_ref, bo_ref,
                       g1_ref, be1_ref, g2_ref, be2_ref, bf1_ref, bf2_ref,
                       w1_ref, w2_ref,
                       wfc_ref, bfc_ref, out_ref, h_ref):
    f32 = jnp.float32
    l = pl.program_id(0)

    # Grid step 0: embedding linear.  h lives in VMEM scratch across layers.
    @pl.when(l == 0)
    def _():
        h_ref[...] = (jnp.dot(x_ref[...], w_emb_ref[...],
                              preferred_element_type=f32) + b_emb_ref[...])

    h = h_ref[...]                                                        # (N, E)

    # --------- multi-head self attention (seq=N, batch=1) -------------------
    # Fused QKV projection: single lane-dense (N,E)@(E,3E) MXU op.
    scale = 1.0 / (HEAD_DIM ** 0.5)
    qkv = jnp.dot(h, wqkv_ref[l], preferred_element_type=f32) + bqkv_ref[l]   # (N, 3E)
    q = qkv[:, :EMBED_DIM] * scale
    k = qkv[:, EMBED_DIM:2 * EMBED_DIM]
    v = qkv[:, 2 * EMBED_DIM:]

    # Per-head scores/context are inherently (N, dh)/(N, N) tiny tensors at this
    # config (H=4, dh=8, N=8); heads are re-packed into lanes before the single
    # (N,E)@(E,E) output projection.
    ctxs = []
    for hd in range(NUM_HEADS):
        s0 = hd * HEAD_DIM
        qh = q[:, s0:s0 + HEAD_DIM]
        kh = k[:, s0:s0 + HEAD_DIM]
        vh = v[:, s0:s0 + HEAD_DIM]
        sc = jnp.dot(qh, kh.T, preferred_element_type=f32)                # (N, N)
        sc = sc - jnp.max(sc, axis=-1, keepdims=True)
        p = jnp.exp(sc)
        p = p * pl.reciprocal(jnp.sum(p, axis=-1, keepdims=True), approx=True)
        ctxs.append(jnp.dot(p, vh, preferred_element_type=f32))          # (N, dh)
    ctx = jnp.concatenate(ctxs, axis=-1)                                  # (N, E)

    attn = jnp.dot(ctx, wo_ref[l], preferred_element_type=f32) + bo_ref[l]
    # dropout1 -> identity (eval)
    h = _layernorm(h + attn, g1_ref[l], be1_ref[l])

    # ---------------- feed-forward (relu activation, post-LN) ----------------
    # w1/w2 are stored bf16 in HBM; bf16 operands + f32 accumulation on the MXU.
    ff = (jnp.dot(h.astype(jnp.bfloat16), w1_ref[0],
                  preferred_element_type=f32) + bf1_ref[l])               # (N, F)
    ff = jnp.maximum(ff, 0.0)
    ff = (jnp.dot(ff.astype(jnp.bfloat16), w2_ref[0],
                  preferred_element_type=f32) + bf2_ref[l])               # (N, E)
    # dropout2 -> identity (eval)
    h = _layernorm(h + ff, g2_ref[l], be2_ref[l])
    h_ref[...] = h

    # Last grid step: final dropout -> identity; lane-dense classifier head.
    @pl.when(l == pl.num_programs(0) - 1)
    def _():
        out_ref[...] = (jnp.dot(h, wfc_ref[...], preferred_element_type=f32)
                        + bfc_ref[...]).astype(out_ref.dtype)


# ------------------------------- wrapper --------------------------------------
def transformer_classifier(x, params):
    (w_emb, b_emb, wqkv, bqkv, wo, bo, g1, be1, g2, be2,
     w1, bf1, w2, bf2, wfc, bfc) = params
    n = x.shape[0]

    # Dominant-DMA FFN weights stored bf16 (halves HBM bytes; key on v5e).
    w1_b = w1.astype(jnp.bfloat16)
    w2_b = w2.astype(jnp.bfloat16)

    # Lane-dense classifier weights / output (pad NUM_CLASSES -> 128 lanes).
    wfc_p = jnp.zeros((EMBED_DIM, OUT_PAD), jnp.float32).at[:, :NUM_CLASSES].set(wfc)
    bfc_p = jnp.zeros((1, OUT_PAD), jnp.float32).at[:, :NUM_CLASSES].set(bfc)

    def full_spec(a):
        zeros = (0,) * a.ndim
        return pl.BlockSpec(a.shape, lambda l: zeros)            # VMEM-resident

    def per_layer_spec(a):
        zeros = (0,) * (a.ndim - 1)
        return pl.BlockSpec((1,) + a.shape[1:], lambda l: (l,) + zeros)  # double-buffered

    args = (x, w_emb, b_emb,
            wqkv, bqkv, wo, bo, g1, be1, g2, be2, bf1, bf2,   # resident, indexed by l
            w1_b, w2_b,                                       # per-layer pipelined
            wfc_p, bfc_p)
    in_specs = [full_spec(x), full_spec(w_emb), full_spec(b_emb),
                full_spec(wqkv), full_spec(bqkv), full_spec(wo), full_spec(bo),
                full_spec(g1), full_spec(be1), full_spec(g2), full_spec(be2),
                full_spec(bf1), full_spec(bf2),
                per_layer_spec(w1_b), per_layer_spec(w2_b),
                full_spec(wfc_p), full_spec(bfc_p)]

    # Advisory cost estimate for XLA's scheduler.
    E, F, H = EMBED_DIM, FFN_DIM, NUM_HEADS
    per_layer_flops = (2 * n * E * (3 * E)        # fused qkv projection
                       + 2 * 2 * n * n * E        # scores + context (all heads)
                       + 2 * n * E * E            # output projection
                       + 2 * 2 * n * E * F)       # FFN
    flops = 2 * n * INPUT_DIM * E + NUM_LAYERS * per_layer_flops + 2 * n * E * OUT_PAD
    transcendentals = NUM_LAYERS * (H * n * n + H * n + 2 * n)
    bytes_accessed = (sum(int(a.size) * a.dtype.itemsize for a in args)
                      + n * OUT_PAD * 4)

    out_p = pl.pallas_call(
        transformer_kernel,
        out_shape=jax.ShapeDtypeStruct((n, OUT_PAD), jnp.float32),
        grid_spec=pltpu.PrefetchScalarGridSpec(
            num_scalar_prefetch=0,
            grid=(NUM_LAYERS,),
            in_specs=in_specs,
            out_specs=pl.BlockSpec((n, OUT_PAD), lambda l: (0, 0)),
            scratch_shapes=[pltpu.VMEM((n, EMBED_DIM), jnp.float32)],   # resident h
        ),
        compiler_params=pltpu.CompilerParams(
            dimension_semantics=("arbitrary",),          # layer axis is sequential
            vmem_limit_bytes=16 * 1024 * 1024,
        ),
        cost_estimate=pl.CostEstimate(flops=flops,
                                      transcendentals=transcendentals,
                                      bytes_accessed=bytes_accessed),
    )(*args)
    return out_p[:, :NUM_CLASSES]


# --------------------------- deterministic params ----------------------------
def init_params(key):
    ks = iter(jax.random.split(key, 32))

    def w(shape, scale=0.05):
        return (scale * jax.random.normal(next(ks), shape)).astype(jnp.float32)

    L, E, F, C, D = NUM_LAYERS, EMBED_DIM, FFN_DIM, NUM_CLASSES, INPUT_DIM
    w_emb = w((D, E));                 b_emb = w((1, E))
    wqkv  = w((L, E, 3 * E));          bqkv  = w((L, 1, 3 * E))
    wo    = w((L, E, E));              bo    = w((L, 1, E))
    g1    = (1.0 + 0.1 * jax.random.normal(next(ks), (L, 1, E))).astype(jnp.float32)
    be1   = (0.05 * jax.random.normal(next(ks), (L, 1, E))).astype(jnp.float32)
    g2    = (1.0 + 0.1 * jax.random.normal(next(ks), (L, 1, E))).astype(jnp.float32)
    be2   = (0.05 * jax.random.normal(next(ks), (L, 1, E))).astype(jnp.float32)
    w1    = w((L, E, F));              bf1   = w((L, 1, F))
    w2    = w((L, F, E), scale=0.02);  bf2   = w((L, 1, E))
    wfc   = w((E, C));                 bfc   = w((1, C))
    return (w_emb, b_emb, wqkv, bqkv, wo, bo, g1, be1, g2, be2,
            w1, bf1, w2, bf2, wfc, bfc)


# --------------------------- pure-JAX reference -------------------------------
def reference_forward(x, params):
    (w_emb, b_emb, wqkv, bqkv, wo, bo, g1, be1, g2, be2,
     w1, bf1, w2, bf2, wfc, bfc) = params
    h = x @ w_emb + b_emb
    for l in range(NUM_LAYERS):
        qkv = h @ wqkv[l] + bqkv[l]
        q, k, v = qkv[:, :EMBED_DIM], qkv[:, EMBED_DIM:2 * EMBED_DIM], qkv[:, 2 * EMBED_DIM:]
        outs = []
        for hd in range(NUM_HEADS):
            s0 = hd * HEAD_DIM
            sc = (q[:, s0:s0 + HEAD_DIM] / (HEAD_DIM ** 0.5)) @ k[:, s0:s0 + HEAD_DIM].T
            p = jax.nn.softmax(sc, axis=-1)
            outs.append(p @ v[:, s0:s0 + HEAD_DIM])
        attn = jnp.concatenate(outs, axis=-1) @ wo[l] + bo[l]
        h = _layernorm(h + attn, g1[l], be1[l])
        ff = jnp.maximum(h @ w1[l] + bf1[l], 0.0) @ w2[l] + bf2[l]
        h = _layernorm(h + ff, g2[l], be2[l])
    return h @ wfc + bfc


if __name__ == "__main__":
    key = jax.random.PRNGKey(0)
    k_x, k_p = jax.random.split(key)
    N = 8
    x = jax.random.normal(k_x, (N, INPUT_DIM), dtype=jnp.float32)
    params = init_params(k_p)

    out = transformer_classifier(x, params)
    out = jax.block_until_ready(out)

    with jax.default_matmul_precision("highest"):
        ref = reference_forward(x, params)
    ref = jax.block_until_ready(ref)

    assert out.shape == (N, NUM_CLASSES)
    # Tolerance accounts for bf16 storage of the FFN weights + default MXU precision
    # in the kernel vs the 'highest'-precision f32 reference.
    assert jnp.allclose(out, ref, atol=3e-3, rtol=3e-3), "mismatch vs JAX reference"
    print("KERNEL_OK")
</pallas_src>

<mosaic_0001>
module attributes {stable_mosaic.version = 11 : i64} {
  func.func @transformer_kernel(%arg0: i32, %arg1: memref<8x16xf32, #tpu.memory_space<vmem>>, %arg2: memref<16x32xf32, #tpu.memory_space<vmem>>, %arg3: memref<1x32xf32, #tpu.memory_space<vmem>>, %arg4: memref<2x32x96xf32, #tpu.memory_space<vmem>>, %arg5: memref<2x1x96xf32, #tpu.memory_space<vmem>>, %arg6: memref<2x32x32xf32, #tpu.memory_space<vmem>>, %arg7: memref<2x1x32xf32, #tpu.memory_space<vmem>>, %arg8: memref<2x1x32xf32, #tpu.memory_space<vmem>>, %arg9: memref<2x1x32xf32, #tpu.memory_space<vmem>>, %arg10: memref<2x1x32xf32, #tpu.memory_space<vmem>>, %arg11: memref<2x1x32xf32, #tpu.memory_space<vmem>>, %arg12: memref<2x1x2048xf32, #tpu.memory_space<vmem>>, %arg13: memref<2x1x32xf32, #tpu.memory_space<vmem>>, %arg14: memref<1x32x2048xbf16, #tpu.memory_space<vmem>>, %arg15: memref<1x2048x32xbf16, #tpu.memory_space<vmem>>, %arg16: memref<32x128xf32, #tpu.memory_space<vmem>>, %arg17: memref<1x128xf32, #tpu.memory_space<vmem>>, %arg18: memref<8x128xf32, #tpu.memory_space<vmem>>, %arg19: memref<8x32xf32, #tpu.memory_space<vmem>>) attributes {dimension_semantics = [#tpu.dimension_semantics<arbitrary>], iteration_bounds = array<i64: 2>, scalar_prefetch = 0 : i64, scratch_operands = 1 : i64, tpu.core_type = #tpu.core_type<tc>, window_params = [{pipeline_mode = #tpu.pipeline_mode<synchronous>, transform_indices = @transform_0, window_bounds = array<i64: 8, 16>}, {pipeline_mode = #tpu.pipeline_mode<synchronous>, transform_indices = @transform_1, window_bounds = array<i64: 16, 32>}, {pipeline_mode = #tpu.pipeline_mode<synchronous>, transform_indices = @transform_2, window_bounds = array<i64: 1, 32>}, {pipeline_mode = #tpu.pipeline_mode<synchronous>, transform_indices = @transform_3, window_bounds = array<i64: 2, 32, 96>}, {pipeline_mode = #tpu.pipeline_mode<synchronous>, transform_indices = @transform_4, window_bounds = array<i64: 2, 1, 96>}, {pipeline_mode = #tpu.pipeline_mode<synchronous>, transform_indices = @transform_5, window_bounds = array<i64: 2, 32, 32>}, {pipeline_mode = #tpu.pipeline_mode<synchronous>, transform_indices = @transform_6, window_bounds = array<i64: 2, 1, 32>}, {pipeline_mode = #tpu.pipeline_mode<synchronous>, transform_indices = @transform_7, window_bounds = array<i64: 2, 1, 32>}, {pipeline_mode = #tpu.pipeline_mode<synchronous>, transform_indices = @transform_8, window_bounds = array<i64: 2, 1, 32>}, {pipeline_mode = #tpu.pipeline_mode<synchronous>, transform_indices = @transform_9, window_bounds = array<i64: 2, 1, 32>}, {pipeline_mode = #tpu.pipeline_mode<synchronous>, transform_indices = @transform_10, window_bounds = array<i64: 2, 1, 32>}, {pipeline_mode = #tpu.pipeline_mode<synchronous>, transform_indices = @transform_11, window_bounds = array<i64: 2, 1, 2048>}, {pipeline_mode = #tpu.pipeline_mode<synchronous>, transform_indices = @transform_12, window_bounds = array<i64: 2, 1, 32>}, {transform_indices = @transform_13, window_bounds = array<i64: 1, 32, 2048>}, {transform_indices = @transform_14, window_bounds = array<i64: 1, 2048, 32>}, {pipeline_mode = #tpu.pipeline_mode<synchronous>, transform_indices = @transform_15, window_bounds = array<i64: 32, 128>}, {pipeline_mode = #tpu.pipeline_mode<synchronous>, transform_indices = @transform_16, window_bounds = array<i64: 1, 128>}, {pipeline_mode = #tpu.pipeline_mode<synchronous>, transform_indices = @transform_17, window_bounds = array<i64: 8, 128>}]} {
    %c0_i32 = arith.constant 0 : i32
    %0 = arith.cmpi eq, %arg0, %c0_i32 : i32
    %1 = arith.extui %0 : i1 to i32
    %c0_i32_0 = arith.constant 0 : i32
    %2 = arith.cmpi ne, %1, %c0_i32_0 : i32
    scf.if %2 {
      %c0_62 = arith.constant 0 : index
      %c0_63 = arith.constant 0 : index
      %174 = vector.load %arg1[%c0_62, %c0_63] : memref<8x16xf32, #tpu.memory_space<vmem>>, vector<8x16xf32>
      %c0_64 = arith.constant 0 : index
      %c0_65 = arith.constant 0 : index
      %175 = vector.load %arg2[%c0_64, %c0_65] : memref<16x32xf32, #tpu.memory_space<vmem>>, vector<16x32xf32>
      %cst_66 = arith.constant dense<0.000000e+00> : vector<8x32xf32>
      %176 = tpu.matmul %174, %175, %cst_66 {dimension_numbers = #tpu.dot_dimension_numbers<[1], [0], [0], [1], [0, 0, 1, 1], [], []>} : vector<8x16xf32>, vector<16x32xf32>, vector<8x32xf32> -> vector<8x32xf32>
      %c0_67 = arith.constant 0 : index
      %c0_68 = arith.constant 0 : index
      %177 = vector.load %arg3[%c0_67, %c0_68] : memref<1x32xf32, #tpu.memory_space<vmem>>, vector<1x32xf32>
      %178 = vector.broadcast %177 : vector<1x32xf32> to vector<8x32xf32>
      %179 = arith.addf %176, %178 : vector<8x32xf32>
      %c0_69 = arith.constant 0 : index
      %c0_70 = arith.constant 0 : index
      %180 = vector.load %arg19[%c0_69, %c0_70] : memref<8x32xf32, #tpu.memory_space<vmem>>, vector<8x32xf32>
      tpu.vector_store %arg19[%c0_69, %c0_70], %179 {strides = array<i32>} : memref<8x32xf32, #tpu.memory_space<vmem>>, vector<8x32xf32>,
    } else {
    }
    %c0 = arith.constant 0 : index
    %c0_1 = arith.constant 0 : index
    %3 = vector.load %arg19[%c0, %c0_1] : memref<8x32xf32, #tpu.memory_space<vmem>>, vector<8x32xf32>
    %4 = arith.index_cast %arg0 : i32 to index
    %c0_2 = arith.constant 0 : index
    %c0_3 = arith.constant 0 : index
    %5 = vector.load %arg4[%4, %c0_2, %c0_3] : memref<2x32x96xf32, #tpu.memory_space<vmem>>, vector<1x32x96xf32>
    %6 = vector.shape_cast %5 : vector<1x32x96xf32> to vector<32x96xf32>
    %cst = arith.constant dense<0.000000e+00> : vector<8x96xf32>
    %7 = tpu.matmul %3, %6, %cst {dimension_numbers = #tpu.dot_dimension_numbers<[1], [0], [0], [1], [0, 0, 1, 1], [], []>} : vector<8x32xf32>, vector<32x96xf32>, vector<8x96xf32> -> vector<8x96xf32>
    %8 = arith.index_cast %arg0 : i32 to index
    %c0_4 = arith.constant 0 : index
    %c0_5 = arith.constant 0 : index
    %9 = vector.load %arg5[%8, %c0_4, %c0_5] : memref<2x1x96xf32, #tpu.memory_space<vmem>>, vector<1x1x96xf32>
    %10 = vector.shape_cast %9 : vector<1x1x96xf32> to vector<1x96xf32>
    %11 = vector.broadcast %10 : vector<1x96xf32> to vector<8x96xf32>
    %12 = arith.addf %7, %11 : vector<8x96xf32>
    %13 = vector.extract_strided_slice %12 {offsets = [0, 0], sizes = [8, 32], strides = [1, 1]} : vector<8x96xf32> to vector<8x32xf32>
    %cst_6 = arith.constant 0.353553385 : f32
    %14 = vector.broadcast %cst_6 : f32 to vector<8x32xf32>
    %15 = arith.mulf %13, %14 : vector<8x32xf32>
    %16 = vector.extract_strided_slice %12 {offsets = [0, 32], sizes = [8, 32], strides = [1, 1]} : vector<8x96xf32> to vector<8x32xf32>
    %17 = vector.extract_strided_slice %12 {offsets = [0, 64], sizes = [8, 32], strides = [1, 1]} : vector<8x96xf32> to vector<8x32xf32>
    %18 = vector.extract_strided_slice %15 {offsets = [0, 0], sizes = [8, 8], strides = [1, 1]} : vector<8x32xf32> to vector<8x8xf32>
    %19 = vector.extract_strided_slice %16 {offsets = [0, 0], sizes = [8, 8], strides = [1, 1]} : vector<8x32xf32> to vector<8x8xf32>
    %20 = vector.extract_strided_slice %17 {offsets = [0, 0], sizes = [8, 8], strides = [1, 1]} : vector<8x32xf32> to vector<8x8xf32>
    %21 = tpu.transpose %19, [1, 0] : vector<8x8xf32> -> vector<8x8xf32>
    %cst_7 = arith.constant dense<0.000000e+00> : vector<8x8xf32>
    %22 = tpu.matmul %18, %21, %cst_7 {dimension_numbers = #tpu.dot_dimension_numbers<[1], [0], [0], [1], [0, 0, 1, 1], [], []>} : vector<8x8xf32>, vector<8x8xf32>, vector<8x8xf32> -> vector<8x8xf32>
    %cst_8 = arith.constant dense<0xFF800000> : vector<8xf32>
    %23 = vector.multi_reduction <maximumf>, %22, %cst_8 [1] : vector<8x8xf32> to vector<8xf32>
    %24 = vector.shape_cast %23 : vector<8xf32> to vector<8x1xf32>
    %25 = vector.broadcast %24 : vector<8x1xf32> to vector<8x8xf32>
    %26 = arith.subf %22, %25 : vector<8x8xf32>
    %27 = math.exp %26 : vector<8x8xf32>
    %cst_9 = arith.constant dense<0.000000e+00> : vector<8xf32>
    %28 = vector.multi_reduction <add>, %27, %cst_9 [1] : vector<8x8xf32> to vector<8xf32>
    %29 = vector.shape_cast %28 : vector<8xf32> to vector<8x1xf32>
    %30 = tpu.reciprocal %29 {approx = true} : vector<8x1xf32> -> vector<8x1xf32>
    %31 = vector.broadcast %30 : vector<8x1xf32> to vector<8x8xf32>
    %32 = arith.mulf %27, %31 : vector<8x8xf32>
    %cst_10 = arith.constant dense<0.000000e+00> : vector<8x8xf32>
    %33 = tpu.matmul %32, %20, %cst_10 {dimension_numbers = #tpu.dot_dimension_numbers<[1], [0], [0], [1], [0, 0, 1, 1], [], []>} : vector<8x8xf32>, vector<8x8xf32>, vector<8x8xf32> -> vector<8x8xf32>
    %34 = vector.extract_strided_slice %15 {offsets = [0, 8], sizes = [8, 8], strides = [1, 1]} : vector<8x32xf32> to vector<8x8xf32>
    %35 = vector.extract_strided_slice %16 {offsets = [0, 8], sizes = [8, 8], strides = [1, 1]} : vector<8x32xf32> to vector<8x8xf32>
    %36 = vector.extract_strided_slice %17 {offsets = [0, 8], sizes = [8, 8], strides = [1, 1]} : vector<8x32xf32> to vector<8x8xf32>
    %37 = tpu.transpose %35, [1, 0] : vector<8x8xf32> -> vector<8x8xf32>
    %cst_11 = arith.constant dense<0.000000e+00> : vector<8x8xf32>
    %38 = tpu.matmul %34, %37, %cst_11 {dimension_numbers = #tpu.dot_dimension_numbers<[1], [0], [0], [1], [0, 0, 1, 1], [], []>} : vector<8x8xf32>, vector<8x8xf32>, vector<8x8xf32> -> vector<8x8xf32>
    %cst_12 = arith.constant dense<0xFF800000> : vector<8xf32>
    %39 = vector.multi_reduction <maximumf>, %38, %cst_12 [1] : vector<8x8xf32> to vector<8xf32>
    %40 = vector.shape_cast %39 : vector<8xf32> to vector<8x1xf32>
    %41 = vector.broadcast %40 : vector<8x1xf32> to vector<8x8xf32>
    %42 = arith.subf %38, %41 : vector<8x8xf32>
    %43 = math.exp %42 : vector<8x8xf32>
    %cst_13 = arith.constant dense<0.000000e+00> : vector<8xf32>
    %44 = vector.multi_reduction <add>, %43, %cst_13 [1] : vector<8x8xf32> to vector<8xf32>
    %45 = vector.shape_cast %44 : vector<8xf32> to vector<8x1xf32>
    %46 = tpu.reciprocal %45 {approx = true} : vector<8x1xf32> -> vector<8x1xf32>
    %47 = vector.broadcast %46 : vector<8x1xf32> to vector<8x8xf32>
    %48 = arith.mulf %43, %47 : vector<8x8xf32>
    %cst_14 = arith.constant dense<0.000000e+00> : vector<8x8xf32>
    %49 = tpu.matmul %48, %36, %cst_14 {dimension_numbers = #tpu.dot_dimension_numbers<[1], [0], [0], [1], [0, 0, 1, 1], [], []>} : vector<8x8xf32>, vector<8x8xf32>, vector<8x8xf32> -> vector<8x8xf32>
    %50 = vector.extract_strided_slice %15 {offsets = [0, 16], sizes = [8, 8], strides = [1, 1]} : vector<8x32xf32> to vector<8x8xf32>
    %51 = vector.extract_strided_slice %16 {offsets = [0, 16], sizes = [8, 8], strides = [1, 1]} : vector<8x32xf32> to vector<8x8xf32>
    %52 = vector.extract_strided_slice %17 {offsets = [0, 16], sizes = [8, 8], strides = [1, 1]} : vector<8x32xf32> to vector<8x8xf32>
    %53 = tpu.transpose %51, [1, 0] : vector<8x8xf32> -> vector<8x8xf32>
    %cst_15 = arith.constant dense<0.000000e+00> : vector<8x8xf32>
    %54 = tpu.matmul %50, %53, %cst_15 {dimension_numbers = #tpu.dot_dimension_numbers<[1], [0], [0], [1], [0, 0, 1, 1], [], []>} : vector<8x8xf32>, vector<8x8xf32>, vector<8x8xf32> -> vector<8x8xf32>
    %cst_16 = arith.constant dense<0xFF800000> : vector<8xf32>
    %55 = vector.multi_reduction <maximumf>, %54, %cst_16 [1] : vector<8x8xf32> to vector<8xf32>
    %56 = vector.shape_cast %55 : vector<8xf32> to vector<8x1xf32>
    %57 = vector.broadcast %56 : vector<8x1xf32> to vector<8x8xf32>
    %58 = arith.subf %54, %57 : vector<8x8xf32>
    %59 = math.exp %58 : vector<8x8xf32>
    %cst_17 = arith.constant dense<0.000000e+00> : vector<8xf32>
    %60 = vector.multi_reduction <add>, %59, %cst_17 [1] : vector<8x8xf32> to vector<8xf32>
    %61 = vector.shape_cast %60 : vector<8xf32> to vector<8x1xf32>
    %62 = tpu.reciprocal %61 {approx = true} : vector<8x1xf32> -> vector<8x1xf32>
    %63 = vector.broadcast %62 : vector<8x1xf32> to vector<8x8xf32>
    %64 = arith.mulf %59, %63 : vector<8x8xf32>
    %cst_18 = arith.constant dense<0.000000e+00> : vector<8x8xf32>
    %65 = tpu.matmul %64, %52, %cst_18 {dimension_numbers = #tpu.dot_dimension_numbers<[1], [0], [0], [1], [0, 0, 1, 1], [], []>} : vector<8x8xf32>, vector<8x8xf32>, vector<8x8xf32> -> vector<8x8xf32>
    %66 = vector.extract_strided_slice %15 {offsets = [0, 24], sizes = [8, 8], strides = [1, 1]} : vector<8x32xf32> to vector<8x8xf32>
    %67 = vector.extract_strided_slice %16 {offsets = [0, 24], sizes = [8, 8], strides = [1, 1]} : vector<8x32xf32> to vector<8x8xf32>
    %68 = vector.extract_strided_slice %17 {offsets = [0, 24], sizes = [8, 8], strides = [1, 1]} : vector<8x32xf32> to vector<8x8xf32>
    %69 = tpu.transpose %67, [1, 0] : vector<8x8xf32> -> vector<8x8xf32>
    %cst_19 = arith.constant dense<0.000000e+00> : vector<8x8xf32>
    %70 = tpu.matmul %66, %69, %cst_19 {dimension_numbers = #tpu.dot_dimension_numbers<[1], [0], [0], [1], [0, 0, 1, 1], [], []>} : vector<8x8xf32>, vector<8x8xf32>, vector<8x8xf32> -> vector<8x8xf32>
    %cst_20 = arith.constant dense<0xFF800000> : vector<8xf32>
    %71 = vector.multi_reduction <maximumf>, %70, %cst_20 [1] : vector<8x8xf32> to vector<8xf32>
    %72 = vector.shape_cast %71 : vector<8xf32> to vector<8x1xf32>
    %73 = vector.broadcast %72 : vector<8x1xf32> to vector<8x8xf32>
    %74 = arith.subf %70, %73 : vector<8x8xf32>
    %75 = math.exp %74 : vector<8x8xf32>
    %cst_21 = arith.constant dense<0.000000e+00> : vector<8xf32>
    %76 = vector.multi_reduction <add>, %75, %cst_21 [1] : vector<8x8xf32> to vector<8xf32>
    %77 = vector.shape_cast %76 : vector<8xf32> to vector<8x1xf32>
    %78 = tpu.reciprocal %77 {approx = true} : vector<8x1xf32> -> vector<8x1xf32>
    %79 = vector.broadcast %78 : vector<8x1xf32> to vector<8x8xf32>
    %80 = arith.mulf %75, %79 : vector<8x8xf32>
    %cst_22 = arith.constant dense<0.000000e+00> : vector<8x8xf32>
    %81 = tpu.matmul %80, %68, %cst_22 {dimension_numbers = #tpu.dot_dimension_numbers<[1], [0], [0], [1], [0, 0, 1, 1], [], []>} : vector<8x8xf32>, vector<8x8xf32>, vector<8x8xf32> -> vector<8x8xf32>
    %82 = tpu.concatenate %33, %49, %65, %81 in 1 : vector<8x8xf32>, vector<8x8xf32>, vector<8x8xf32>, vector<8x8xf32> -> vector<8x32xf32>
    %83 = arith.index_cast %arg0 : i32 to index
    %c0_23 = arith.constant 0 : index
    %c0_24 = arith.constant 0 : index
    %84 = vector.load %arg6[%83, %c0_23, %c0_24] : memref<2x32x32xf32, #tpu.memory_space<vmem>>, vector<1x32x32xf32>
    %85 = vector.shape_cast %84 : vector<1x32x32xf32> to vector<32x32xf32>
    %cst_25 = arith.constant dense<0.000000e+00> : vector<8x32xf32>
    %86 = tpu.matmul %82, %85, %cst_25 {dimension_numbers = #tpu.dot_dimension_numbers<[1], [0], [0], [1], [0, 0, 1, 1], [], []>} : vector<8x32xf32>, vector<32x32xf32>, vector<8x32xf32> -> vector<8x32xf32>
    %87 = arith.index_cast %arg0 : i32 to index
    %c0_26 = arith.constant 0 : index
    %c0_27 = arith.constant 0 : index
    %88 = vector.load %arg7[%87, %c0_26, %c0_27] : memref<2x1x32xf32, #tpu.memory_space<vmem>>, vector<1x1x32xf32>
    %89 = vector.shape_cast %88 : vector<1x1x32xf32> to vector<1x32xf32>
    %90 = vector.broadcast %89 : vector<1x32xf32> to vector<8x32xf32>
    %91 = arith.addf %86, %90 : vector<8x32xf32>
    %92 = arith.addf %3, %91 : vector<8x32xf32>
    %93 = arith.index_cast %arg0 : i32 to index
    %c0_28 = arith.constant 0 : index
    %c0_29 = arith.constant 0 : index
    %94 = vector.load %arg8[%93, %c0_28, %c0_29] : memref<2x1x32xf32, #tpu.memory_space<vmem>>, vector<1x1x32xf32>
    %95 = vector.shape_cast %94 : vector<1x1x32xf32> to vector<1x32xf32>
    %96 = arith.index_cast %arg0 : i32 to index
    %c0_30 = arith.constant 0 : index
    %c0_31 = arith.constant 0 : index
    %97 = vector.load %arg9[%96, %c0_30, %c0_31] : memref<2x1x32xf32, #tpu.memory_space<vmem>>, vector<1x1x32xf32>
    %98 = vector.shape_cast %97 : vector<1x1x32xf32> to vector<1x32xf32>
    %cst_32 = arith.constant dense<0.000000e+00> : vector<8xf32>
    %99 = vector.multi_reduction <add>, %92, %cst_32 [1] : vector<8x32xf32> to vector<8xf32>
    %100 = vector.shape_cast %99 : vector<8xf32> to vector<8x1xf32>
    %cst_33 = arith.constant 3.200000e+01 : f32
    %101 = vector.broadcast %cst_33 : f32 to vector<8x1xf32>
    %102 = arith.divf %100, %101 : vector<8x1xf32>
    %103 = vector.broadcast %102 : vector<8x1xf32> to vector<8x32xf32>
    %104 = arith.subf %92, %103 : vector<8x32xf32>
    %105 = arith.mulf %104, %104 : vector<8x32xf32>
    %cst_34 = arith.constant dense<0.000000e+00> : vector<8xf32>
    %106 = vector.multi_reduction <add>, %105, %cst_34 [1] : vector<8x32xf32> to vector<8xf32>
    %107 = vector.shape_cast %106 : vector<8xf32> to vector<8x1xf32>
    %cst_35 = arith.constant 3.200000e+01 : f32
    %108 = vector.broadcast %cst_35 : f32 to vector<8x1xf32>
    %109 = arith.divf %107, %108 : vector<8x1xf32>
    %110 = vector.broadcast %102 : vector<8x1xf32> to vector<8x32xf32>
    %111 = arith.subf %92, %110 : vector<8x32xf32>
    %cst_36 = arith.constant 9.99999974E-6 : f32
    %112 = vector.broadcast %cst_36 : f32 to vector<8x1xf32>
    %113 = arith.addf %109, %112 : vector<8x1xf32>
    %114 = math.rsqrt %113 : vector<8x1xf32>
    %115 = vector.broadcast %114 : vector<8x1xf32> to vector<8x32xf32>
    %116 = arith.mulf %111, %115 : vector<8x32xf32>
    %117 = vector.broadcast %95 : vector<1x32xf32> to vector<8x32xf32>
    %118 = arith.mulf %116, %117 : vector<8x32xf32>
    %119 = vector.broadcast %98 : vector<1x32xf32> to vector<8x32xf32>
    %120 = arith.addf %118, %119 : vector<8x32xf32>
    %121 = arith.truncf %120 : vector<8x32xf32> to vector<8x32xbf16>
    %c0_37 = arith.constant 0 : index
    %c0_38 = arith.constant 0 : index
    %c0_39 = arith.constant 0 : index
    %122 = vector.load %arg14[%c0_37, %c0_38, %c0_39] : memref<1x32x2048xbf16, #tpu.memory_space<vmem>>, vector<1x32x2048xbf16>
    %123 = vector.shape_cast %122 : vector<1x32x2048xbf16> to vector<32x2048xbf16>
    %cst_40 = arith.constant dense<0.000000e+00> : vector<8x2048xf32>
    %124 = tpu.matmul %121, %123, %cst_40 {dimension_numbers = #tpu.dot_dimension_numbers<[1], [0], [0], [1], [0, 0, 1, 1], [], []>} : vector<8x32xbf16>, vector<32x2048xbf16>, vector<8x2048xf32> -> vector<8x2048xf32>
    %125 = arith.index_cast %arg0 : i32 to index
    %c0_41 = arith.constant 0 : index
    %c0_42 = arith.constant 0 : index
    %126 = vector.load %arg12[%125, %c0_41, %c0_42] : memref<2x1x2048xf32, #tpu.memory_space<vmem>>, vector<1x1x2048xf32>
    %127 = vector.shape_cast %126 : vector<1x1x2048xf32> to vector<1x2048xf32>
    %128 = vector.broadcast %127 : vector<1x2048xf32> to vector<8x2048xf32>
    %129 = arith.addf %124, %128 : vector<8x2048xf32>
    %cst_43 = arith.constant 0.000000e+00 : f32
    %130 = vector.broadcast %cst_43 : f32 to vector<8x2048xf32>
    %131 = arith.maximumf %129, %130 : vector<8x2048xf32>
    %132 = arith.truncf %131 : vector<8x2048xf32> to vector<8x2048xbf16>
    %c0_44 = arith.constant 0 : index
    %c0_45 = arith.constant 0 : index
    %c0_46 = arith.constant 0 : index
    %133 = vector.load %arg15[%c0_44, %c0_45, %c0_46] : memref<1x2048x32xbf16, #tpu.memory_space<vmem>>, vector<1x2048x32xbf16>
    %134 = vector.shape_cast %133 : vector<1x2048x32xbf16> to vector<2048x32xbf16>
    %cst_47 = arith.constant dense<0.000000e+00> : vector<8x32xf32>
    %135 = tpu.matmul %132, %134, %cst_47 {dimension_numbers = #tpu.dot_dimension_numbers<[1], [0], [0], [1], [0, 0, 1, 1], [], []>} : vector<8x2048xbf16>, vector<2048x32xbf16>, vector<8x32xf32> -> vector<8x32xf32>
    %136 = arith.index_cast %arg0 : i32 to index
    %c0_48 = arith.constant 0 : index
    %c0_49 = arith.constant 0 : index
    %137 = vector.load %arg13[%136, %c0_48, %c0_49] : memref<2x1x32xf32, #tpu.memory_space<vmem>>, vector<1x1x32xf32>
    %138 = vector.shape_cast %137 : vector<1x1x32xf32> to vector<1x32xf32>
    %139 = vector.broadcast %138 : vector<1x32xf32> to vector<8x32xf32>
    %140 = arith.addf %135, %139 : vector<8x32xf32>
    %141 = arith.addf %120, %140 : vector<8x32xf32>
    %142 = arith.index_cast %arg0 : i32 to index
    %c0_50 = arith.constant 0 : index
    %c0_51 = arith.constant 0 : index
    %143 = vector.load %arg10[%142, %c0_50, %c0_51] : memref<2x1x32xf32, #tpu.memory_space<vmem>>, vector<1x1x32xf32>
    %144 = vector.shape_cast %143 : vector<1x1x32xf32> to vector<1x32xf32>
    %145 = arith.index_cast %arg0 : i32 to index
    %c0_52 = arith.constant 0 : index
    %c0_53 = arith.constant 0 : index
    %146 = vector.load %arg11[%145, %c0_52, %c0_53] : memref<2x1x32xf32, #tpu.memory_space<vmem>>, vector<1x1x32xf32>
    %147 = vector.shape_cast %146 : vector<1x1x32xf32> to vector<1x32xf32>
    %cst_54 = arith.constant dense<0.000000e+00> : vector<8xf32>
    %148 = vector.multi_reduction <add>, %141, %cst_54 [1] : vector<8x32xf32> to vector<8xf32>
    %149 = vector.shape_cast %148 : vector<8xf32> to vector<8x1xf32>
    %cst_55 = arith.constant 3.200000e+01 : f32
    %150 = vector.broadcast %cst_55 : f32 to vector<8x1xf32>
    %151 = arith.divf %149, %150 : vector<8x1xf32>
    %152 = vector.broadcast %151 : vector<8x1xf32> to vector<8x32xf32>
    %153 = arith.subf %141, %152 : vector<8x32xf32>
    %154 = arith.mulf %153, %153 : vector<8x32xf32>
    %cst_56 = arith.constant dense<0.000000e+00> : vector<8xf32>
    %155 = vector.multi_reduction <add>, %154, %cst_56 [1] : vector<8x32xf32> to vector<8xf32>
    %156 = vector.shape_cast %155 : vector<8xf32> to vector<8x1xf32>
    %cst_57 = arith.constant 3.200000e+01 : f32
    %157 = vector.broadcast %cst_57 : f32 to vector<8x1xf32>
    %158 = arith.divf %156, %157 : vector<8x1xf32>
    %159 = vector.broadcast %151 : vector<8x1xf32> to vector<8x32xf32>
    %160 = arith.subf %141, %159 : vector<8x32xf32>
    %cst_58 = arith.constant 9.99999974E-6 : f32
    %161 = vector.broadcast %cst_58 : f32 to vector<8x1xf32>
    %162 = arith.addf %158, %161 : vector<8x1xf32>
    %163 = math.rsqrt %162 : vector<8x1xf32>
    %164 = vector.broadcast %163 : vector<8x1xf32> to vector<8x32xf32>
    %165 = arith.mulf %160, %164 : vector<8x32xf32>
    %166 = vector.broadcast %144 : vector<1x32xf32> to vector<8x32xf32>
    %167 = arith.mulf %165, %166 : vector<8x32xf32>
    %168 = vector.broadcast %147 : vector<1x32xf32> to vector<8x32xf32>
    %169 = arith.addf %167, %168 : vector<8x32xf32>
    %c0_59 = arith.constant 0 : index
    %c0_60 = arith.constant 0 : index
    %170 = vector.load %arg19[%c0_59, %c0_60] : memref<8x32xf32, #tpu.memory_space<vmem>>, vector<8x32xf32>
    tpu.vector_store %arg19[%c0_59, %c0_60], %169 {strides = array<i32>} : memref<8x32xf32, #tpu.memory_space<vmem>>, vector<8x32xf32>,
    %c1_i32 = arith.constant 1 : i32
    %171 = arith.cmpi eq, %arg0, %c1_i32 : i32
    %172 = arith.extui %171 : i1 to i32
    %c0_i32_61 = arith.constant 0 : i32
    %173 = arith.cmpi ne, %172, %c0_i32_61 : i32
    scf.if %173 {
      %c0_62 = arith.constant 0 : index
      %c0_63 = arith.constant 0 : index
      %174 = vector.load %arg16[%c0_62, %c0_63] : memref<32x128xf32, #tpu.memory_space<vmem>>, vector<32x128xf32>
      %cst_64 = arith.constant dense<0.000000e+00> : vector<8x128xf32>
      %175 = tpu.matmul %169, %174, %cst_64 {dimension_numbers = #tpu.dot_dimension_numbers<[1], [0], [0], [1], [0, 0, 1, 1], [], []>} : vector<8x32xf32>, vector<32x128xf32>, vector<8x128xf32> -> vector<8x128xf32>
      %c0_65 = arith.constant 0 : index
      %c0_66 = arith.constant 0 : index
      %176 = vector.load %arg17[%c0_65, %c0_66] : memref<1x128xf32, #tpu.memory_space<vmem>>, vector<1x128xf32>
      %177 = vector.broadcast %176 : vector<1x128xf32> to vector<8x128xf32>
      %178 = arith.addf %175, %177 : vector<8x128xf32>
      %c0_67 = arith.constant 0 : index
      %c0_68 = arith.constant 0 : index
      %179 = vector.load %arg18[%c0_67, %c0_68] : memref<8x128xf32, #tpu.memory_space<vmem>>, vector<8x128xf32>
      tpu.vector_store %arg18[%c0_67, %c0_68], %178 {strides = array<i32>} : memref<8x128xf32, #tpu.memory_space<vmem>>, vector<8x128xf32>,
    } else {
    }
    return
  }
  func.func @transform_0(%arg0: i32) -> (i32, i32) {
    %c0_i32 = arith.constant 0 : i32
    %c0_i32_0 = arith.constant 0 : i32
    %c0_i32_1 = arith.constant 0 : i32
    return %c0_i32, %c0_i32_0 : i32, i32
  }
  func.func @transform_1(%arg0: i32) -> (i32, i32) {
    %c0_i32 = arith.constant 0 : i32
    %c0_i32_0 = arith.constant 0 : i32
    %c0_i32_1 = arith.constant 0 : i32
    return %c0_i32, %c0_i32_0 : i32, i32
  }
  func.func @transform_2(%arg0: i32) -> (i32, i32) {
    %c0_i32 = arith.constant 0 : i32
    %c0_i32_0 = arith.constant 0 : i32
    %c0_i32_1 = arith.constant 0 : i32
    return %c0_i32, %c0_i32_0 : i32, i32
  }
  func.func @transform_3(%arg0: i32) -> (i32, i32, i32) {
    %c0_i32 = arith.constant 0 : i32
    %c0_i32_0 = arith.constant 0 : i32
    %c0_i32_1 = arith.constant 0 : i32
    %c0_i32_2 = arith.constant 0 : i32
    return %c0_i32, %c0_i32_0, %c0_i32_1 : i32, i32, i32
  }
  func.func @transform_4(%arg0: i32) -> (i32, i32, i32) {
    %c0_i32 = arith.constant 0 : i32
    %c0_i32_0 = arith.constant 0 : i32
    %c0_i32_1 = arith.constant 0 : i32
    %c0_i32_2 = arith.constant 0 : i32
    return %c0_i32, %c0_i32_0, %c0_i32_1 : i32, i32, i32
  }
  func.func @transform_5(%arg0: i32) -> (i32, i32, i32) {
    %c0_i32 = arith.constant 0 : i32
    %c0_i32_0 = arith.constant 0 : i32
    %c0_i32_1 = arith.constant 0 : i32
    %c0_i32_2 = arith.constant 0 : i32
    return %c0_i32, %c0_i32_0, %c0_i32_1 : i32, i32, i32
  }
  func.func @transform_6(%arg0: i32) -> (i32, i32, i32) {
    %c0_i32 = arith.constant 0 : i32
    %c0_i32_0 = arith.constant 0 : i32
    %c0_i32_1 = arith.constant 0 : i32
    %c0_i32_2 = arith.constant 0 : i32
    return %c0_i32, %c0_i32_0, %c0_i32_1 : i32, i32, i32
  }
  func.func @transform_7(%arg0: i32) -> (i32, i32, i32) {
    %c0_i32 = arith.constant 0 : i32
    %c0_i32_0 = arith.constant 0 : i32
    %c0_i32_1 = arith.constant 0 : i32
    %c0_i32_2 = arith.constant 0 : i32
    return %c0_i32, %c0_i32_0, %c0_i32_1 : i32, i32, i32
  }
  func.func @transform_8(%arg0: i32) -> (i32, i32, i32) {
    %c0_i32 = arith.constant 0 : i32
    %c0_i32_0 = arith.constant 0 : i32
    %c0_i32_1 = arith.constant 0 : i32
    %c0_i32_2 = arith.constant 0 : i32
    return %c0_i32, %c0_i32_0, %c0_i32_1 : i32, i32, i32
  }
  func.func @transform_9(%arg0: i32) -> (i32, i32, i32) {
    %c0_i32 = arith.constant 0 : i32
    %c0_i32_0 = arith.constant 0 : i32
    %c0_i32_1 = arith.constant 0 : i32
    %c0_i32_2 = arith.constant 0 : i32
    return %c0_i32, %c0_i32_0, %c0_i32_1 : i32, i32, i32
  }
  func.func @transform_10(%arg0: i32) -> (i32, i32, i32) {
    %c0_i32 = arith.constant 0 : i32
    %c0_i32_0 = arith.constant 0 : i32
    %c0_i32_1 = arith.constant 0 : i32
    %c0_i32_2 = arith.constant 0 : i32
    return %c0_i32, %c0_i32_0, %c0_i32_1 : i32, i32, i32
  }
  func.func @transform_11(%arg0: i32) -> (i32, i32, i32) {
    %c0_i32 = arith.constant 0 : i32
    %c0_i32_0 = arith.constant 0 : i32
    %c0_i32_1 = arith.constant 0 : i32
    %c0_i32_2 = arith.constant 0 : i32
    return %c0_i32, %c0_i32_0, %c0_i32_1 : i32, i32, i32
  }
  func.func @transform_12(%arg0: i32) -> (i32, i32, i32) {
    %c0_i32 = arith.constant 0 : i32
    %c0_i32_0 = arith.constant 0 : i32
    %c0_i32_1 = arith.constant 0 : i32
    %c0_i32_2 = arith.constant 0 : i32
    return %c0_i32, %c0_i32_0, %c0_i32_1 : i32, i32, i32
  }
  func.func @transform_13(%arg0: i32) -> (i32, i32, i32) {
    %c0_i32 = arith.constant 0 : i32
    %c0_i32_0 = arith.constant 0 : i32
    %c0_i32_1 = arith.constant 0 : i32
    return %arg0, %c0_i32, %c0_i32_0 : i32, i32, i32
  }
  func.func @transform_14(%arg0: i32) -> (i32, i32, i32) {
    %c0_i32 = arith.constant 0 : i32
    %c0_i32_0 = arith.constant 0 : i32
    %c0_i32_1 = arith.constant 0 : i32
    return %arg0, %c0_i32, %c0_i32_0 : i32, i32, i32
  }
  func.func @transform_15(%arg0: i32) -> (i32, i32) {
    %c0_i32 = arith.constant 0 : i32
    %c0_i32_0 = arith.constant 0 : i32
    %c0_i32_1 = arith.constant 0 : i32
    return %c0_i32, %c0_i32_0 : i32, i32
  }
  func.func @transform_16(%arg0: i32) -> (i32, i32) {
    %c0_i32 = arith.constant 0 : i32
    %c0_i32_0 = arith.constant 0 : i32
    %c0_i32_1 = arith.constant 0 : i32
    return %c0_i32, %c0_i32_0 : i32, i32
  }
  func.func @transform_17(%arg0: i32) -> (i32, i32) {
    %c0_i32 = arith.constant 0 : i32
    %c0_i32_0 = arith.constant 0 : i32
    %c0_i32_1 = arith.constant 0 : i32
    return %c0_i32, %c0_i32_0 : i32, i32
  }
}

</mosaic_0001>

<llo_original>
// kernel: tpu_custom_call.1
$region0: #{tpu_custom_call.1}
  #allocation0 [shape = 'u32[]', space=smem, size = 0x4, offset = 0x4, fixed_abs, tag = 'smem constant byte address 0x4 - core index']
  #allocation1 [shape = 'u32[144,128]{1,0:T(1,128)}', space=vmem, size = 0x12000, scoped, tag = 'internal scratch']
  #allocation2 [shape = 'f32[8,32]{1,0:T(8,128)}', space=vmem, size = 0x1000, scoped, tag = 'scratch operand']
  %s0 = inlined_call_operand.vmem [shape: f32[8,16], index: 0, kind: input, shape index: {}]
  %s1 = inlined_call_operand.vmem [shape: f32[16,32], index: 1, kind: input, shape index: {}]
  %s2 = inlined_call_operand.vmem [shape: f32[1,32], index: 2, kind: input, shape index: {}]
  %s3 = inlined_call_operand.vmem [shape: f32[2,32,96], index: 3, kind: input, shape index: {}]
  %s4 = inlined_call_operand.vmem [shape: f32[2,1,96], index: 4, kind: input, shape index: {}]
  %s5 = inlined_call_operand.vmem [shape: f32[2,32,32], index: 5, kind: input, shape index: {}]
  %s6 = inlined_call_operand.vmem [shape: f32[2,1,32], index: 6, kind: input, shape index: {}]
  %s7 = inlined_call_operand.vmem [shape: f32[2,1,32], index: 7, kind: input, shape index: {}]
  %s8 = inlined_call_operand.vmem [shape: f32[2,1,32], index: 8, kind: input, shape index: {}]
  %s9 = inlined_call_operand.vmem [shape: f32[2,1,32], index: 9, kind: input, shape index: {}]
  %s10 = inlined_call_operand.vmem [shape: f32[2,1,32], index: 10, kind: input, shape index: {}]
  %s11 = inlined_call_operand.vmem [shape: f32[2,1,2048], index: 11, kind: input, shape index: {}]
  %s12 = inlined_call_operand.vmem [shape: f32[2,1,32], index: 12, kind: input, shape index: {}]
  %s13 = inlined_call_operand.vmem [shape: bf16[2,32,2048], index: 13, kind: input, shape index: {}]
  %s14 = inlined_call_operand.vmem [shape: bf16[2,2048,32], index: 14, kind: input, shape index: {}]
  %s15 = inlined_call_operand.vmem [shape: f32[32,128], index: 15, kind: input, shape index: {}]
  %s16 = inlined_call_operand.vmem [shape: f32[1,128], index: 16, kind: input, shape index: {}]
  %s17 = inlined_call_operand.hbm [shape: f32[8,128], index: 17, kind: output, shape index: {}]
  %s18 = sld [smem:[#allocation0]]
  $region109: #{tpu_custom_call.1} parent=0
    _
  %s20 = ssub.s32 1, %s18
  %s21 = scalar_select 0, %s20, %s18
  $region1: #{tpu_custom_call.1} parent=0
    #allocation3 [shape = 'u8[4096]{0}', space=vmem, size = 0x1000, scoped, tag = 'output window, operand 0, single buffered']
    #allocation4 [shape = 's32[2]{0}', space=sflag, size = 0x8, scoped, tag = 'scoped memory for tpu_custom_call.1']
    %22 = vsyncpa [#allocation4], 0
    loop: start=0, step=1, limit=4
    $region2: #{tpu_custom_call.1} parent=1 // loop_pre_header
      _
    $region3: #{tpu_custom_call.1} parent=1 // loop_header
      %s24 = sphi 0, %s28
      %p25 = scmp.ge.s32.totalorder %s24, 4
      %s32 = sphi 0, %s32
      %s34 = sphi 0, %s32
      %s35 = sphi 0, %s34
      %s49 = sphi 0, %s35
      %s53 = sphi 0, %s53
      %s55 = sphi 0, %s53
      %s56 = sphi 0, %s55
      %s70 = sphi 0, %s56
      %s74 = sphi 0, %s74
      %s76 = sphi 0, %s74
      %s77 = sphi 0, %s76
      %s91 = sphi 0, %s77
      %s95 = sphi 0, %s95
      %s97 = sphi 0, %s95
      %s98 = sphi 0, %s97
      %s112 = sphi 0, %s98
      %s116 = sphi 0, %s116
      %s118 = sphi 0, %s116
      %s119 = sphi 0, %s118
      %s133 = sphi 0, %s119
      %s137 = sphi 0, %s137
      %s139 = sphi 0, %s137
      %s140 = sphi 0, %s139
      %s154 = sphi 0, %s140
      %s158 = sphi 0, %s158
      %s160 = sphi 0, %s158
      %s161 = sphi 0, %s160
      %s175 = sphi 0, %s161
      %s179 = sphi 0, %s179
      %s181 = sphi 0, %s179
      %s182 = sphi 0, %s181
      %s196 = sphi 0, %s182
      %s200 = sphi 0, %s200
      %s202 = sphi 0, %s200
      %s203 = sphi 0, %s202
      %s217 = sphi 0, %s203
      %s221 = sphi 0, %s221
      %s223 = sphi 0, %s221
      %s224 = sphi 0, %s223
      %s238 = sphi 0, %s224
      %s242 = sphi 0, %s242
      %s244 = sphi 0, %s242
      %s245 = sphi 0, %s244
      %s259 = sphi 0, %s245
      %s263 = sphi 0, %s263
      %s265 = sphi 0, %s263
      %s266 = sphi 0, %s265
      %s280 = sphi 0, %s266
      %s284 = sphi 0, %s284
      %s286 = sphi 0, %s284
      %s287 = sphi 0, %s286
      %s301 = sphi 0, %s287
      %s307 = sphi 0, %s309
      %s310 = sphi 0, %s307
      %s311 = sphi 0, %s310
      %s327 = sphi 0, %s311
      %s333 = sphi 0, %s335
      %s336 = sphi 0, %s333
      %s337 = sphi 0, %s336
      %s353 = sphi 0, %s337
      %s357 = sphi 0, %s357
      %s359 = sphi 0, %s357
      %s360 = sphi 0, %s359
      %s374 = sphi 0, %s360
      %s378 = sphi 0, %s378
      %s380 = sphi 0, %s378
      %s381 = sphi 0, %s380
      %s395 = sphi 0, %s381
      %s399 = sphi 0, %s399
      %s401 = sphi 0, %s399
      %s402 = sphi 0, %s401
      %s416 = sphi 0, %s402
    $region4: #{tpu_custom_call.1} parent=1 // loop_header_branch
      %27 = sbr.rel (%p25) target = $region8
    $region5: #{tpu_custom_call.1} parent=1 // loop_body
      %s29 = ssub.s32 %s24, 1
      %s30 = ssub.s32 %s24, 2
      %s31 = sadd.s32 %s24, 1
      %s33 = sadd.s32 %s32, 1
      %p36 = scmp.eq.s32.totalorder %s24, 1
      %p37 = scmp.ne.s32.totalorder %s32, %s34
      %p38 = scmp.eq.s32.totalorder %s24, 0
      %p39 = por %p37, %p38
      %p40 = scmp.ne.s32.totalorder %s32, %s34
      %p41 = scmp.eq.s32.totalorder %s29, 1
      %p42 = por %p40, %p41
      %p43 = scmp.ne.s32.totalorder %s34, %s35
      %p44 = scmp.eq.s32.totalorder %s29, 0
      %p45 = por %p43, %p44
      %p46 = scmp.ne.s32.totalorder %s34, %s35
      %p47 = scmp.eq.s32.totalorder %s30, 1
      %p48 = por %p46, %p47
      %p50 = scmp.ne.s32.totalorder %s35, %s49
      %p51 = scmp.eq.s32.totalorder %s30, 0
      %p52 = por %p50, %p51
      %s54 = sadd.s32 %s53, 1
      %p57 = scmp.eq.s32.totalorder %s24, 1
      %p58 = scmp.ne.s32.totalorder %s53, %s55
      %p59 = scmp.eq.s32.totalorder %s24, 0
      %p60 = por %p58, %p59
      %p61 = scmp.ne.s32.totalorder %s53, %s55
      %p62 = scmp.eq.s32.totalorder %s29, 1
      %p63 = por %p61, %p62
      %p64 = scmp.ne.s32.totalorder %s55, %s56
      %p65 = scmp.eq.s32.totalorder %s29, 0
      %p66 = por %p64, %p65
      %p67 = scmp.ne.s32.totalorder %s55, %s56
      %p68 = scmp.eq.s32.totalorder %s30, 1
      %p69 = por %p67, %p68
      %p71 = scmp.ne.s32.totalorder %s56, %s70
      %p72 = scmp.eq.s32.totalorder %s30, 0
      %p73 = por %p71, %p72
      %s75 = sadd.s32 %s74, 1
      %p78 = scmp.eq.s32.totalorder %s24, 1
      %p79 = scmp.ne.s32.totalorder %s74, %s76
      %p80 = scmp.eq.s32.totalorder %s24, 0
      %p81 = por %p79, %p80
      %p82 = scmp.ne.s32.totalorder %s74, %s76
      %p83 = scmp.eq.s32.totalorder %s29, 1
      %p84 = por %p82, %p83
      %p85 = scmp.ne.s32.totalorder %s76, %s77
      %p86 = scmp.eq.s32.totalorder %s29, 0
      %p87 = por %p85, %p86
      %p88 = scmp.ne.s32.totalorder %s76, %s77
      %p89 = scmp.eq.s32.totalorder %s30, 1
      %p90 = por %p88, %p89
      %p92 = scmp.ne.s32.totalorder %s77, %s91
      %p93 = scmp.eq.s32.totalorder %s30, 0
      %p94 = por %p92, %p93
      %s96 = sadd.s32 %s95, 1
      %p99 = scmp.eq.s32.totalorder %s24, 1
      %p100 = scmp.ne.s32.totalorder %s95, %s97
      %p101 = scmp.eq.s32.totalorder %s24, 0
      %p102 = por %p100, %p101
      %p103 = scmp.ne.s32.totalorder %s95, %s97
      %p104 = scmp.eq.s32.totalorder %s29, 1
      %p105 = por %p103, %p104
      %p106 = scmp.ne.s32.totalorder %s97, %s98
      %p107 = scmp.eq.s32.totalorder %s29, 0
      %p108 = por %p106, %p107
      %p109 = scmp.ne.s32.totalorder %s97, %s98
      %p110 = scmp.eq.s32.totalorder %s30, 1
      %p111 = por %p109, %p110
      %p113 = scmp.ne.s32.totalorder %s98, %s112
      %p114 = scmp.eq.s32.totalorder %s30, 0
      %p115 = por %p113, %p114
      %s117 = sadd.s32 %s116, 1
      %p120 = scmp.eq.s32.totalorder %s24, 1
      %p121 = scmp.ne.s32.totalorder %s116, %s118
      %p122 = scmp.eq.s32.totalorder %s24, 0
      %p123 = por %p121, %p122
      %p124 = scmp.ne.s32.totalorder %s116, %s118
      %p125 = scmp.eq.s32.totalorder %s29, 1
      %p126 = por %p124, %p125
      %p127 = scmp.ne.s32.totalorder %s118, %s119
      %p128 = scmp.eq.s32.totalorder %s29, 0
      %p129 = por %p127, %p128
      %p130 = scmp.ne.s32.totalorder %s118, %s119
      %p131 = scmp.eq.s32.totalorder %s30, 1
      %p132 = por %p130, %p131
      %p134 = scmp.ne.s32.totalorder %s119, %s133
      %p135 = scmp.eq.s32.totalorder %s30, 0
      %p136 = por %p134, %p135
      %s138 = sadd.s32 %s137, 1
      %p141 = scmp.eq.s32.totalorder %s24, 1
      %p142 = scmp.ne.s32.totalorder %s137, %s139
      %p143 = scmp.eq.s32.totalorder %s24, 0
      %p144 = por %p142, %p143
      %p145 = scmp.ne.s32.totalorder %s137, %s139
      %p146 = scmp.eq.s32.totalorder %s29, 1
      %p147 = por %p145, %p146
      %p148 = scmp.ne.s32.totalorder %s139, %s140
      %p149 = scmp.eq.s32.totalorder %s29, 0
      %p150 = por %p148, %p149
      %p151 = scmp.ne.s32.totalorder %s139, %s140
      %p152 = scmp.eq.s32.totalorder %s30, 1
      %p153 = por %p151, %p152
      %p155 = scmp.ne.s32.totalorder %s140, %s154
      %p156 = scmp.eq.s32.totalorder %s30, 0
      %p157 = por %p155, %p156
      %s159 = sadd.s32 %s158, 1
      %p162 = scmp.eq.s32.totalorder %s24, 1
      %p163 = scmp.ne.s32.totalorder %s158, %s160
      %p164 = scmp.eq.s32.totalorder %s24, 0
      %p165 = por %p163, %p164
      %p166 = scmp.ne.s32.totalorder %s158, %s160
      %p167 = scmp.eq.s32.totalorder %s29, 1
      %p168 = por %p166, %p167
      %p169 = scmp.ne.s32.totalorder %s160, %s161
      %p170 = scmp.eq.s32.totalorder %s29, 0
      %p171 = por %p169, %p170
      %p172 = scmp.ne.s32.totalorder %s160, %s161
      %p173 = scmp.eq.s32.totalorder %s30, 1
      %p174 = por %p172, %p173
      %p176 = scmp.ne.s32.totalorder %s161, %s175
      %p177 = scmp.eq.s32.totalorder %s30, 0
      %p178 = por %p176, %p177
      %s180 = sadd.s32 %s179, 1
      %p183 = scmp.eq.s32.totalorder %s24, 1
      %p184 = scmp.ne.s32.totalorder %s179, %s181
      %p185 = scmp.eq.s32.totalorder %s24, 0
      %p186 = por %p184, %p185
      %p187 = scmp.ne.s32.totalorder %s179, %s181
      %p188 = scmp.eq.s32.totalorder %s29, 1
      %p189 = por %p187, %p188
      %p190 = scmp.ne.s32.totalorder %s181, %s182
      %p191 = scmp.eq.s32.totalorder %s29, 0
      %p192 = por %p190, %p191
      %p193 = scmp.ne.s32.totalorder %s181, %s182
      %p194 = scmp.eq.s32.totalorder %s30, 1
      %p195 = por %p193, %p194
      %p197 = scmp.ne.s32.totalorder %s182, %s196
      %p198 = scmp.eq.s32.totalorder %s30, 0
      %p199 = por %p197, %p198
      %s201 = sadd.s32 %s200, 1
      %p204 = scmp.eq.s32.totalorder %s24, 1
      %p205 = scmp.ne.s32.totalorder %s200, %s202
      %p206 = scmp.eq.s32.totalorder %s24, 0
      %p207 = por %p205, %p206
      %p208 = scmp.ne.s32.totalorder %s200, %s202
      %p209 = scmp.eq.s32.totalorder %s29, 1
      %p210 = por %p208, %p209
      %p211 = scmp.ne.s32.totalorder %s202, %s203
      %p212 = scmp.eq.s32.totalorder %s29, 0
      %p213 = por %p211, %p212
      %p214 = scmp.ne.s32.totalorder %s202, %s203
      %p215 = scmp.eq.s32.totalorder %s30, 1
      %p216 = por %p214, %p215
      %p218 = scmp.ne.s32.totalorder %s203, %s217
      %p219 = scmp.eq.s32.totalorder %s30, 0
      %p220 = por %p218, %p219
      %s222 = sadd.s32 %s221, 1
      %p225 = scmp.eq.s32.totalorder %s24, 1
      %p226 = scmp.ne.s32.totalorder %s221, %s223
      %p227 = scmp.eq.s32.totalorder %s24, 0
      %p228 = por %p226, %p227
      %p229 = scmp.ne.s32.totalorder %s221, %s223
      %p230 = scmp.eq.s32.totalorder %s29, 1
      %p231 = por %p229, %p230
      %p232 = scmp.ne.s32.totalorder %s223, %s224
      %p233 = scmp.eq.s32.totalorder %s29, 0
      %p234 = por %p232, %p233
      %p235 = scmp.ne.s32.totalorder %s223, %s224
      %p236 = scmp.eq.s32.totalorder %s30, 1
      %p237 = por %p235, %p236
      %p239 = scmp.ne.s32.totalorder %s224, %s238
      %p240 = scmp.eq.s32.totalorder %s30, 0
      %p241 = por %p239, %p240
      %s243 = sadd.s32 %s242, 1
      %p246 = scmp.eq.s32.totalorder %s24, 1
      %p247 = scmp.ne.s32.totalorder %s242, %s244
      %p248 = scmp.eq.s32.totalorder %s24, 0
      %p249 = por %p247, %p248
      %p250 = scmp.ne.s32.totalorder %s242, %s244
      %p251 = scmp.eq.s32.totalorder %s29, 1
      %p252 = por %p250, %p251
      %p253 = scmp.ne.s32.totalorder %s244, %s245
      %p254 = scmp.eq.s32.totalorder %s29, 0
      %p255 = por %p253, %p254
      %p256 = scmp.ne.s32.totalorder %s244, %s245
      %p257 = scmp.eq.s32.totalorder %s30, 1
      %p258 = por %p256, %p257
      %p260 = scmp.ne.s32.totalorder %s245, %s259
      %p261 = scmp.eq.s32.totalorder %s30, 0
      %p262 = por %p260, %p261
      %s264 = sadd.s32 %s263, 1
      %p267 = scmp.eq.s32.totalorder %s24, 1
      %p268 = scmp.ne.s32.totalorder %s263, %s265
      %p269 = scmp.eq.s32.totalorder %s24, 0
      %p270 = por %p268, %p269
      %p271 = scmp.ne.s32.totalorder %s263, %s265
      %p272 = scmp.eq.s32.totalorder %s29, 1
      %p273 = por %p271, %p272
      %p274 = scmp.ne.s32.totalorder %s265, %s266
      %p275 = scmp.eq.s32.totalorder %s29, 0
      %p276 = por %p274, %p275
      %p277 = scmp.ne.s32.totalorder %s265, %s266
      %p278 = scmp.eq.s32.totalorder %s30, 1
      %p279 = por %p277, %p278
      %p281 = scmp.ne.s32.totalorder %s266, %s280
      %p282 = scmp.eq.s32.totalorder %s30, 0
      %p283 = por %p281, %p282
      %s285 = sadd.s32 %s284, 1
      %p288 = scmp.eq.s32.totalorder %s24, 1
      %p289 = scmp.ne.s32.totalorder %s284, %s286
      %p290 = scmp.eq.s32.totalorder %s24, 0
      %p291 = por %p289, %p290
      %p292 = scmp.ne.s32.totalorder %s284, %s286
      %p293 = scmp.eq.s32.totalorder %s29, 1
      %p294 = por %p292, %p293
      %p295 = scmp.ne.s32.totalorder %s286, %s287
      %p296 = scmp.eq.s32.totalorder %s29, 0
      %p297 = por %p295, %p296
      %p298 = scmp.ne.s32.totalorder %s286, %s287
      %p299 = scmp.eq.s32.totalorder %s30, 1
      %p300 = por %p298, %p299
      %p302 = scmp.ne.s32.totalorder %s287, %s301
      %p303 = scmp.eq.s32.totalorder %s30, 0
      %p304 = por %p302, %p303
      %s305 = ssub.s32 %s24, %s31
      %p306 = scmp.eq.s32.totalorder %s305, 0
      %s308 = sadd.s32 %s307, 1
      %s309 = scalar_select %p306, %s307, %s308
      %p312 = pneg %p306
      %p313 = scmp.eq.s32.totalorder %s24, 1
      %p314 = por %p312, %p313
      %p315 = scmp.ne.s32.totalorder %s307, %s310
      %p316 = scmp.eq.s32.totalorder %s24, 0
      %p317 = por %p315, %p316
      %p318 = scmp.ne.s32.totalorder %s307, %s310
      %p319 = scmp.eq.s32.totalorder %s29, 1
      %p320 = por %p318, %p319
      %p321 = scmp.ne.s32.totalorder %s310, %s311
      %p322 = scmp.eq.s32.totalorder %s29, 0
      %p323 = por %p321, %p322
      %p324 = scmp.ne.s32.totalorder %s310, %s311
      %p325 = scmp.eq.s32.totalorder %s30, 1
      %p326 = por %p324, %p325
      %p328 = scmp.ne.s32.totalorder %s311, %s327
      %p329 = scmp.eq.s32.totalorder %s30, 0
      %p330 = por %p328, %p329
      %s331 = ssub.s32 %s24, %s31
      %p332 = scmp.eq.s32.totalorder %s331, 0
      %s334 = sadd.s32 %s333, 1
      %s335 = scalar_select %p332, %s333, %s334
      %p338 = pneg %p332
      %p339 = scmp.eq.s32.totalorder %s24, 1
      %p340 = por %p338, %p339
      %p341 = scmp.ne.s32.totalorder %s333, %s336
      %p342 = scmp.eq.s32.totalorder %s24, 0
      %p343 = por %p341, %p342
      %p344 = scmp.ne.s32.totalorder %s333, %s336
      %p345 = scmp.eq.s32.totalorder %s29, 1
      %p346 = por %p344, %p345
      %p347 = scmp.ne.s32.totalorder %s336, %s337
      %p348 = scmp.eq.s32.totalorder %s29, 0
      %p349 = por %p347, %p348
      %p350 = scmp.ne.s32.totalorder %s336, %s337
      %p351 = scmp.eq.s32.totalorder %s30, 1
      %p352 = por %p350, %p351
      %p354 = scmp.ne.s32.totalorder %s337, %s353
      %p355 = scmp.eq.s32.totalorder %s30, 0
      %p356 = por %p354, %p355
      %s358 = sadd.s32 %s357, 1
      %p361 = scmp.eq.s32.totalorder %s24, 1
      %p362 = scmp.ne.s32.totalorder %s357, %s359
      %p363 = scmp.eq.s32.totalorder %s24, 0
      %p364 = por %p362, %p363
      %p365 = scmp.ne.s32.totalorder %s357, %s359
      %p366 = scmp.eq.s32.totalorder %s29, 1
      %p367 = por %p365, %p366
      %p368 = scmp.ne.s32.totalorder %s359, %s360
      %p369 = scmp.eq.s32.totalorder %s29, 0
      %p370 = por %p368, %p369
      %p371 = scmp.ne.s32.totalorder %s359, %s360
      %p372 = scmp.eq.s32.totalorder %s30, 1
      %p373 = por %p371, %p372
      %p375 = scmp.ne.s32.totalorder %s360, %s374
      %p376 = scmp.eq.s32.totalorder %s30, 0
      %p377 = por %p375, %p376
      %s379 = sadd.s32 %s378, 1
      %p382 = scmp.eq.s32.totalorder %s24, 1
      %p383 = scmp.ne.s32.totalorder %s378, %s380
      %p384 = scmp.eq.s32.totalorder %s24, 0
      %p385 = por %p383, %p384
      %p386 = scmp.ne.s32.totalorder %s378, %s380
      %p387 = scmp.eq.s32.totalorder %s29, 1
      %p388 = por %p386, %p387
      %p389 = scmp.ne.s32.totalorder %s380, %s381
      %p390 = scmp.eq.s32.totalorder %s29, 0
      %p391 = por %p389, %p390
      %p392 = scmp.ne.s32.totalorder %s380, %s381
      %p393 = scmp.eq.s32.totalorder %s30, 1
      %p394 = por %p392, %p393
      %p396 = scmp.ne.s32.totalorder %s381, %s395
      %p397 = scmp.eq.s32.totalorder %s30, 0
      %p398 = por %p396, %p397
      %s400 = sadd.s32 %s399, 1
      %p403 = scmp.eq.s32.totalorder %s24, 1
      %p404 = scmp.ne.s32.totalorder %s399, %s401
      %p405 = scmp.eq.s32.totalorder %s24, 0
      %p406 = por %p404, %p405
      %p407 = scmp.ne.s32.totalorder %s399, %s401
      %p408 = scmp.eq.s32.totalorder %s29, 1
      %p409 = por %p407, %p408
      %p410 = scmp.ne.s32.totalorder %s401, %s402
      %p411 = scmp.eq.s32.totalorder %s29, 0
      %p412 = por %p410, %p411
      %p413 = scmp.ne.s32.totalorder %s401, %s402
      %p414 = scmp.eq.s32.totalorder %s30, 1
      %p415 = por %p413, %p414
      %p417 = scmp.ne.s32.totalorder %s402, %s416
      %p418 = scmp.eq.s32.totalorder %s30, 0
      %p419 = por %p417, %p418
      %p420 = scmp.le.s32.totalorder 1, %s24
      %p421 = scmp.lt.s32.totalorder %s24, 3
      %p422 = pnand %p420, %p421
      %p423 = pneg %p422
      // Predicated region
      $region9: #{tpu_custom_call.1} parent=5 // pred_check
        _
      $region10: #{tpu_custom_call.1} parent=5 // pred_check_branch
        %425 = sbr.rel (%p422) target = $region12
      $region11: #{tpu_custom_call.1} parent=5 // pred_region
        %s426 = ssub.s32 %s24, 1
        // Predicated region
        $region13: #{tpu_custom_call.1} parent=11 // pred_check
          %p427 = pneg %p45
        $region14: #{tpu_custom_call.1} parent=11 // pred_check_branch
          %429 = sbr.rel (%p427) target = $region16
        $region15: #{tpu_custom_call.1} parent=11 // pred_region
          _
        $region16: #{tpu_custom_call.1} parent=11 // pred_fallthru
          _
        // Predicated region
        $region17: #{tpu_custom_call.1} parent=11 // pred_check
          %p430 = pneg %p66
        $region18: #{tpu_custom_call.1} parent=11 // pred_check_branch
          %432 = sbr.rel (%p430) target = $region20
        $region19: #{tpu_custom_call.1} parent=11 // pred_region
          _
        $region20: #{tpu_custom_call.1} parent=11 // pred_fallthru
          _
        // Predicated region
        $region21: #{tpu_custom_call.1} parent=11 // pred_check
          %p433 = pneg %p87
        $region22: #{tpu_custom_call.1} parent=11 // pred_check_branch
          %435 = sbr.rel (%p433) target = $region24
        $region23: #{tpu_custom_call.1} parent=11 // pred_region
          _
        $region24: #{tpu_custom_call.1} parent=11 // pred_fallthru
          _
        // Predicated region
        $region25: #{tpu_custom_call.1} parent=11 // pred_check
          %p436 = pneg %p108
        $region26: #{tpu_custom_call.1} parent=11 // pred_check_branch
          %438 = sbr.rel (%p436) target = $region28
        $region27: #{tpu_custom_call.1} parent=11 // pred_region
          _
        $region28: #{tpu_custom_call.1} parent=11 // pred_fallthru
          _
        // Predicated region
        $region29: #{tpu_custom_call.1} parent=11 // pred_check
          %p439 = pneg %p129
        $region30: #{tpu_custom_call.1} parent=11 // pred_check_branch
          %441 = sbr.rel (%p439) target = $region32
        $region31: #{tpu_custom_call.1} parent=11 // pred_region
          _
        $region32: #{tpu_custom_call.1} parent=11 // pred_fallthru
          _
        // Predicated region
        $region33: #{tpu_custom_call.1} parent=11 // pred_check
          %p442 = pneg %p150
        $region34: #{tpu_custom_call.1} parent=11 // pred_check_branch
          %444 = sbr.rel (%p442) target = $region36
        $region35: #{tpu_custom_call.1} parent=11 // pred_region
          _
        $region36: #{tpu_custom_call.1} parent=11 // pred_fallthru
          _
        // Predicated region
        $region37: #{tpu_custom_call.1} parent=11 // pred_check
          %p445 = pneg %p171
        $region38: #{tpu_custom_call.1} parent=11 // pred_check_branch
          %447 = sbr.rel (%p445) target = $region40
        $region39: #{tpu_custom_call.1} parent=11 // pred_region
          _
        $region40: #{tpu_custom_call.1} parent=11 // pred_fallthru
          _
        // Predicated region
        $region41: #{tpu_custom_call.1} parent=11 // pred_check
          %p448 = pneg %p192
        $region42: #{tpu_custom_call.1} parent=11 // pred_check_branch
          %450 = sbr.rel (%p448) target = $region44
        $region43: #{tpu_custom_call.1} parent=11 // pred_region
          _
        $region44: #{tpu_custom_call.1} parent=11 // pred_fallthru
          _
        // Predicated region
        $region45: #{tpu_custom_call.1} parent=11 // pred_check
          %p451 = pneg %p213
        $region46: #{tpu_custom_call.1} parent=11 // pred_check_branch
          %453 = sbr.rel (%p451) target = $region48
        $region47: #{tpu_custom_call.1} parent=11 // pred_region
          _
        $region48: #{tpu_custom_call.1} parent=11 // pred_fallthru
          _
        // Predicated region
        $region49: #{tpu_custom_call.1} parent=11 // pred_check
          %p454 = pneg %p234
        $region50: #{tpu_custom_call.1} parent=11 // pred_check_branch
          %456 = sbr.rel (%p454) target = $region52
        $region51: #{tpu_custom_call.1} parent=11 // pred_region
          _
        $region52: #{tpu_custom_call.1} parent=11 // pred_fallthru
          _
        // Predicated region
        $region53: #{tpu_custom_call.1} parent=11 // pred_check
          %p457 = pneg %p255
        $region54: #{tpu_custom_call.1} parent=11 // pred_check_branch
          %459 = sbr.rel (%p457) target = $region56
        $region55: #{tpu_custom_call.1} parent=11 // pred_region
          _
        $region56: #{tpu_custom_call.1} parent=11 // pred_fallthru
          _
        // Predicated region
        $region57: #{tpu_custom_call.1} parent=11 // pred_check
          %p460 = pneg %p276
        $region58: #{tpu_custom_call.1} parent=11 // pred_check_branch
          %462 = sbr.rel (%p460) target = $region60
        $region59: #{tpu_custom_call.1} parent=11 // pred_region
          _
        $region60: #{tpu_custom_call.1} parent=11 // pred_fallthru
          _
        // Predicated region
        $region61: #{tpu_custom_call.1} parent=11 // pred_check
          %p463 = pneg %p297
        $region62: #{tpu_custom_call.1} parent=11 // pred_check_branch
          %465 = sbr.rel (%p463) target = $region64
        $region63: #{tpu_custom_call.1} parent=11 // pred_region
          _
        $region64: #{tpu_custom_call.1} parent=11 // pred_fallthru
          _
        // Predicated region
        $region65: #{tpu_custom_call.1} parent=11 // pred_check
          %p466 = pneg %p370
        $region66: #{tpu_custom_call.1} parent=11 // pred_check_branch
          %468 = sbr.rel (%p466) target = $region68
        $region67: #{tpu_custom_call.1} parent=11 // pred_region
          _
        $region68: #{tpu_custom_call.1} parent=11 // pred_fallthru
          _
        // Predicated region
        $region69: #{tpu_custom_call.1} parent=11 // pred_check
          %p469 = pneg %p391
        $region70: #{tpu_custom_call.1} parent=11 // pred_check_branch
          %471 = sbr.rel (%p469) target = $region72
        $region71: #{tpu_custom_call.1} parent=11 // pred_region
          _
        $region72: #{tpu_custom_call.1} parent=11 // pred_fallthru
          _
      $region12: #{tpu_custom_call.1} parent=5 // pred_fallthru
        _
      %p472 = scmp.lt.s32.totalorder %s24, 2
      // Predicated region
      $region73: #{tpu_custom_call.1} parent=5 // pred_check
        %p473 = pneg %p472
      $region74: #{tpu_custom_call.1} parent=5 // pred_check_branch
        %475 = sbr.rel (%p473) target = $region76
      $region75: #{tpu_custom_call.1} parent=5 // pred_region
        // Predicated region
        $region77: #{tpu_custom_call.1} parent=75 // pred_check
          %p476 = pneg %p317
        $region78: #{tpu_custom_call.1} parent=75 // pred_check_branch
          %478 = sbr.rel (%p476) target = $region80
        $region79: #{tpu_custom_call.1} parent=75 // pred_region
          %p479 = scmp.lt.s32.totalorder %s24, 1
          %s480 = scalar_select %p479, %s24, 1
          %s481 = smul.addr %s480, 64
          %s482 = smul.addr %s481, 4
          %s483 = scalar_lea.vmem %s13, %s482
        $region80: #{tpu_custom_call.1} parent=75 // pred_fallthru
          _
        // Predicated region
        $region81: #{tpu_custom_call.1} parent=75 // pred_check
          %p484 = pneg %p343
        $region82: #{tpu_custom_call.1} parent=75 // pred_check_branch
          %486 = sbr.rel (%p484) target = $region84
        $region83: #{tpu_custom_call.1} parent=75 // pred_region
          %p487 = scmp.lt.s32.totalorder %s24, 1
          %s488 = scalar_select %p487, %s24, 1
          %s489 = smul.addr %s488, 256
          %s490 = smul.addr %s489, 4
          %s491 = scalar_lea.vmem %s14, %s490
        $region84: #{tpu_custom_call.1} parent=75 // pred_fallthru
          _
      $region76: #{tpu_custom_call.1} parent=5 // pred_fallthru
        _
      %p492 = scmp.le.s32.totalorder 1, %s24
      %p493 = scmp.lt.s32.totalorder %s24, 3
      %p494 = pnand %p492, %p493
      %p495 = pneg %p494
      // Predicated region
      $region85: #{tpu_custom_call.1} parent=5 // pred_check
        _
      $region86: #{tpu_custom_call.1} parent=5 // pred_check_branch
        %497 = sbr.rel (%p494) target = $region88
      $region87: #{tpu_custom_call.1} parent=5 // pred_region
        %s498 = ssub.s32 %s24, 1
        %p499 = pneg %p45
        %p500 = pneg %p42
        %p501 = pneg %p66
        %p502 = pneg %p63
        %p503 = pneg %p87
        %p504 = pneg %p84
        %p505 = pneg %p108
        %p506 = pneg %p105
        %p507 = pneg %p129
        %p508 = pneg %p126
        %p509 = pneg %p150
        %p510 = pneg %p147
        %p511 = pneg %p171
        %p512 = pneg %p168
        %p513 = pneg %p192
        %p514 = pneg %p189
        %p515 = pneg %p213
        %p516 = pneg %p210
        %p517 = pneg %p234
        %p518 = pneg %p231
        %p519 = pneg %p255
        %p520 = pneg %p252
        %p521 = pneg %p276
        %p522 = pneg %p273
        %p523 = pneg %p297
        %p524 = pneg %p294
        %p525 = scmp.lt.s32.totalorder %s29, 1
        %s526 = scalar_select %p525, %s29, 1
        %s527 = smul.addr %s526, 64
        %s528 = smul.addr %s527, 4
        %s529 = scalar_lea.vmem %s13, %s528
        %p530 = pneg %p323
        %p531 = pneg %p320
        %p532 = scmp.lt.s32.totalorder %s29, 1
        %s533 = scalar_select %p532, %s29, 1
        %s534 = smul.addr %s533, 256
        %s535 = smul.addr %s534, 4
        %s536 = scalar_lea.vmem %s14, %s535
        %p537 = pneg %p349
        %p538 = pneg %p346
        %p539 = pneg %p370
        %p540 = pneg %p367
        %p541 = pneg %p391
        %p542 = pneg %p388
        %p543 = pneg %p412
        %p544 = pneg %p409
        %p545 = scmp.lt.s32.totalorder %s29, 1
        %s546 = scalar_select %p545, %s29, 1
        %s547 = smul.addr %s546, 64
        %s548 = smul.addr %s547, 4
        %s549 = scalar_lea.vmem %s13, %s548
        %p550 = scmp.lt.s32.totalorder %s29, 1
        %s551 = scalar_select %p550, %s29, 1
        %s552 = smul.addr %s551, 256
        %s553 = smul.addr %s552, 4
        %s554 = scalar_lea.vmem %s14, %s553
        %p556 = scmp.eq.s32.totalorder %s29, 0
        // Predicated region
        $region89: #{tpu_custom_call.1} parent=87 // pred_check
          %p557 = pneg %p556
        $region90: #{tpu_custom_call.1} parent=87 // pred_check_branch
          %559 = sbr.rel (%p557) target = $region92
        $region91: #{tpu_custom_call.1} parent=87 // pred_region
          %v560 = vld [vmem:[%s0] sm:$0xff]
          %v561 = vld [vmem:[%s1] sm:$0xff]
          %v562 = vld [vmem:[%s1 + $0x8] sm:$0xff]
          %v563 = vld [vmem:[%s2] sm:$0x1]
          %v565 = vlaneseq
          %v566 = vshrl.u32 %v565, 7
          %v567 = vsub.s32 0, %v566
          %v568 = vrot.slane %v563, %v567
          %vm570 = vcmask 130048
          %v572 = vsel %vm570, %v560, 0
          %574 = vmatprep.subr.mxu0 0.0
          %575 = vmatpush1.msra.mxu0 %v561
          %576 = vmatprep.subr.mxu0 0.0
          %577 = vmatpush1.msra.mxu0 %v562
          %578 = vmatprep.subr.mxu0 0.0
          %579 = vmatpush1.msra.mxu0 0.0
          %580 = vmatprep.subr.mxu0 0.0
          %581 = vmatpush1.msra.mxu0 0.0
          %582 = vmatprep.subr.mxu0 0.0
          %583 = vmatpush1.msra.mxu0 0.0
          %584 = vmatprep.subr.mxu0 0.0
          %585 = vmatpush1.msra.mxu0 0.0
          %586 = vmatprep.subr.mxu0 0.0
          %587 = vmatpush1.msra.mxu0 0.0
          %588 = vmatprep.subr.mxu0 0.0
          %589 = vmatpush1.msra.mxu0 0.0
          %590 = vmatprep.subr.mxu0 0.0
          %591 = vmatpush1.msra.mxu0 0.0
          %592 = vmatprep.subr.mxu0 0.0
          %593 = vmatpush1.msra.mxu0 0.0
          %594 = vmatprep.subr.mxu0 0.0
          %595 = vmatpush1.msra.mxu0 0.0
          %596 = vmatprep.subr.mxu0 0.0
          %597 = vmatpush1.msra.mxu0 0.0
          %598 = vmatprep.subr.mxu0 0.0
          %599 = vmatpush1.msra.mxu0 0.0
          %600 = vmatprep.subr.mxu0 0.0
          %601 = vmatpush1.msra.mxu0 0.0
          %602 = vmatprep.subr.mxu0 0.0
          %603 = vmatpush1.msra.mxu0 0.0
          %604 = vmatprep.subr.mxu0 0.0
          %605 = vmatpush1.msra.mxu0 0.0
          %606 = vmatprep.subr.mxu0 0.0
          %607 = vmatpush1.msra.mxu0 0.0
          %608 = vmatprep.subr.mxu0 0.0
          %609 = vmatpush1.msra.mxu0 0.0
          %610 = vmatprep.subr.mxu0 0.0
          %611 = vmatpush1.msra.mxu0 0.0
          %612 = vmatprep.subr.mxu0 0.0
          %613 = vmatpush1.msra.mxu0 0.0
          %614 = vmatprep.subr.mxu0 0.0
          %615 = vmatpush1.msra.mxu0 0.0
          %616 = vmatprep.subr.mxu0 0.0
          %617 = vmatpush1.msra.mxu0 0.0
          %618 = vmatprep.subr.mxu0 0.0
          %619 = vmatpush1.msra.mxu0 0.0
          %620 = vmatprep.subr.mxu0 0.0
          %621 = vmatpush1.msra.mxu0 0.0
          %622 = vmatprep.subr.mxu0 0.0
          %623 = vmatpush1.msra.mxu0 0.0
          %624 = vmatprep.subr.mxu0 0.0
          %625 = vmatpush1.msra.mxu0 0.0
          %626 = vmatprep.subr.mxu0 0.0
          %627 = vmatpush1.msra.mxu0 0.0
          %628 = vmatprep.subr.mxu0 0.0
          %629 = vmatpush1.msra.mxu0 0.0
          %630 = vmatprep.subr.mxu0 0.0
          %631 = vmatpush1.msra.mxu0 0.0
          %632 = vmatprep.subr.mxu0 0.0
          %633 = vmatpush1.msra.mxu0 0.0
          %634 = vmatprep.subr.mxu0 0.0
          %635 = vmatpush1.msra.mxu0 0.0
          %636 = vmatprep.subr.mxu0 0.0
          %637 = vmatpush1.msra.mxu0 0.0
          %638 = vmatprep.mubr.f32.mxu0 0.0
          %639 = vmatmul.mubr.f32.gmra.mrb[0].mxu0 %v572
          %v640 = vpop.f32.mrb[0].mxu0
          %v641 = vadd.f32 %v568, %v640
          %v642 = vpop.f32.mrb[0].mxu0
          %643 = vdwg.mxu0
          %vm644 = vcmask 261120
          %645 = vst.msk [vmem:[#allocation2] sm:$0xff] %vm644, %v641
        $region92: #{tpu_custom_call.1} parent=87 // pred_fallthru
          _
        %v646 = vld [vmem:[#allocation2] sm:$0xff]
        %s647 = smul.u32 %s29, 32
        %s648 = scalar_lea.vmem %s3, %s647
        %v649 = vld [vmem:[%s648] sm:$0xff]
        %v650 = vld [vmem:[%s648 + $0x8] sm:$0xff]
        %v651 = vld [vmem:[%s648 + $0x10] sm:$0xff]
        %v652 = vld [vmem:[%s648 + $0x18] sm:$0xff]
        %s653 = scalar_lea.vmem %s4, %s29
        %v654 = vld [vmem:[%s653] sm:$0x1]
        %v656 = vlaneseq
        %v657 = vshrl.u32 %v656, 7
        %v658 = vsub.s32 0, %v657
        %v659 = vrot.slane %v654, %v658
        %vm661 = vcmask 261120
        %v663 = vsel %vm661, %v646, 0
        %665 = vmatprep.subr.mxu0 0.0
        %666 = vmatpush1.msra.mxu0 %v649
        %667 = vmatprep.subr.mxu0 0.0
        %668 = vmatpush1.msra.mxu0 %v650
        %669 = vmatprep.subr.mxu0 0.0
        %670 = vmatpush1.msra.mxu0 %v651
        %671 = vmatprep.subr.mxu0 0.0
        %672 = vmatpush1.msra.mxu0 %v652
        %673 = vmatprep.subr.mxu0 0.0
        %674 = vmatpush1.msra.mxu0 0.0
        %675 = vmatprep.subr.mxu0 0.0
        %676 = vmatpush1.msra.mxu0 0.0
        %677 = vmatprep.subr.mxu0 0.0
        %678 = vmatpush1.msra.mxu0 0.0
        %679 = vmatprep.subr.mxu0 0.0
        %680 = vmatpush1.msra.mxu0 0.0
        %681 = vmatprep.subr.mxu0 0.0
        %682 = vmatpush1.msra.mxu0 0.0
        %683 = vmatprep.subr.mxu0 0.0
        %684 = vmatpush1.msra.mxu0 0.0
        %685 = vmatprep.subr.mxu0 0.0
        %686 = vmatpush1.msra.mxu0 0.0
        %687 = vmatprep.subr.mxu0 0.0
        %688 = vmatpush1.msra.mxu0 0.0
        %689 = vmatprep.subr.mxu0 0.0
        %690 = vmatpush1.msra.mxu0 0.0
        %691 = vmatprep.subr.mxu0 0.0
        %692 = vmatpush1.msra.mxu0 0.0
        %693 = vmatprep.subr.mxu0 0.0
        %694 = vmatpush1.msra.mxu0 0.0
        %695 = vmatprep.subr.mxu0 0.0
        %696 = vmatpush1.msra.mxu0 0.0
        %697 = vmatprep.subr.mxu0 0.0
        %698 = vmatpush1.msra.mxu0 0.0
        %699 = vmatprep.subr.mxu0 0.0
        %700 = vmatpush1.msra.mxu0 0.0
        %701 = vmatprep.subr.mxu0 0.0
        %702 = vmatpush1.msra.mxu0 0.0
        %703 = vmatprep.subr.mxu0 0.0
        %704 = vmatpush1.msra.mxu0 0.0
        %705 = vmatprep.subr.mxu0 0.0
        %706 = vmatpush1.msra.mxu0 0.0
        %707 = vmatprep.subr.mxu0 0.0
        %708 = vmatpush1.msra.mxu0 0.0
        %709 = vmatprep.subr.mxu0 0.0
        %710 = vmatpush1.msra.mxu0 0.0
        %711 = vmatprep.subr.mxu0 0.0
        %712 = vmatpush1.msra.mxu0 0.0
        %713 = vmatprep.subr.mxu0 0.0
        %714 = vmatpush1.msra.mxu0 0.0
        %715 = vmatprep.subr.mxu0 0.0
        %716 = vmatpush1.msra.mxu0 0.0
        %717 = vmatprep.subr.mxu0 0.0
        %718 = vmatpush1.msra.mxu0 0.0
        %719 = vmatprep.subr.mxu0 0.0
        %720 = vmatpush1.msra.mxu0 0.0
        %721 = vmatprep.subr.mxu0 0.0
        %722 = vmatpush1.msra.mxu0 0.0
        %723 = vmatprep.subr.mxu0 0.0
        %724 = vmatpush1.msra.mxu0 0.0
        %725 = vmatprep.subr.mxu0 0.0
        %726 = vmatpush1.msra.mxu0 0.0
        %727 = vmatprep.subr.mxu0 0.0
        %728 = vmatpush1.msra.mxu0 0.0
        %729 = vmatprep.mubr.f32.mxu0 0.0
        %730 = vmatmul.mubr.f32.gmra.mrb[0].mxu0 %v663
        %v731 = vpop.f32.mrb[0].mxu0
        %v732 = vadd.f32 %v659, %v731
        %v733 = vpop.f32.mrb[0].mxu0
        %734 = vdwg.mxu0
        %v735 = vmul.f32 %v732, 0.35355338
        %737 = vrot.lane.b32.xlu0 %v732, 96
        %v738 = vpop.permute.xlu0 %737
        %vm739 = vcmask 64512
        %v741 = vsel %vm739, %v735, 0
        %v743 = vsel %vm739, %v738, 0
        %745 = vmatprep.subr.mxu0 0.0
        %746 = vmatpush1.xpose.msra.mxu0 %v743
        %747 = vmatprep.subr.mxu0 0.0
        %748 = vmatpush1.xpose.msra.mxu0 0.0
        %749 = vmatprep.subr.mxu0 0.0
        %750 = vmatpush1.xpose.msra.mxu0 0.0
        %751 = vmatprep.subr.mxu0 0.0
        %752 = vmatpush1.xpose.msra.mxu0 0.0
        %753 = vmatprep.subr.mxu0 0.0
        %754 = vmatpush1.xpose.msra.mxu0 0.0
        %755 = vmatprep.subr.mxu0 0.0
        %756 = vmatpush1.xpose.msra.mxu0 0.0
        %757 = vmatprep.subr.mxu0 0.0
        %758 = vmatpush1.xpose.msra.mxu0 0.0
        %759 = vmatprep.subr.mxu0 0.0
        %760 = vmatpush1.xpose.msra.mxu0 0.0
        %761 = vmatprep.subr.mxu0 0.0
        %762 = vmatpush1.xpose.msra.mxu0 0.0
        %763 = vmatprep.subr.mxu0 0.0
        %764 = vmatpush1.xpose.msra.mxu0 0.0
        %765 = vmatprep.subr.mxu0 0.0
        %766 = vmatpush1.xpose.msra.mxu0 0.0
        %767 = vmatprep.subr.mxu0 0.0
        %768 = vmatpush1.xpose.msra.mxu0 0.0
        %769 = vmatprep.subr.mxu0 0.0
        %770 = vmatpush1.xpose.msra.mxu0 0.0
        %771 = vmatprep.subr.mxu0 0.0
        %772 = vmatpush1.xpose.msra.mxu0 0.0
        %773 = vmatprep.subr.mxu0 0.0
        %774 = vmatpush1.xpose.msra.mxu0 0.0
        %775 = vmatprep.subr.mxu0 0.0
        %776 = vmatpush1.xpose.msra.mxu0 0.0
        %777 = vmatprep.subr.mxu0 0.0
        %778 = vmatpush1.xpose.msra.mxu0 0.0
        %779 = vmatprep.subr.mxu0 0.0
        %780 = vmatpush1.xpose.msra.mxu0 0.0
        %781 = vmatprep.subr.mxu0 0.0
        %782 = vmatpush1.xpose.msra.mxu0 0.0
        %783 = vmatprep.subr.mxu0 0.0
        %784 = vmatpush1.xpose.msra.mxu0 0.0
        %785 = vmatprep.subr.mxu0 0.0
        %786 = vmatpush1.xpose.msra.mxu0 0.0
        %787 = vmatprep.subr.mxu0 0.0
        %788 = vmatpush1.xpose.msra.mxu0 0.0
        %789 = vmatprep.subr.mxu0 0.0
        %790 = vmatpush1.xpose.msra.mxu0 0.0
        %791 = vmatprep.subr.mxu0 0.0
        %792 = vmatpush1.xpose.msra.mxu0 0.0
        %793 = vmatprep.subr.mxu0 0.0
        %794 = vmatpush1.xpose.msra.mxu0 0.0
        %795 = vmatprep.subr.mxu0 0.0
        %796 = vmatpush1.xpose.msra.mxu0 0.0
        %797 = vmatprep.subr.mxu0 0.0
        %798 = vmatpush1.xpose.msra.mxu0 0.0
        %799 = vmatprep.subr.mxu0 0.0
        %800 = vmatpush1.xpose.msra.mxu0 0.0
        %801 = vmatprep.subr.mxu0 0.0
        %802 = vmatpush1.xpose.msra.mxu0 0.0
        %803 = vmatprep.subr.mxu0 0.0
        %804 = vmatpush1.xpose.msra.mxu0 0.0
        %805 = vmatprep.subr.mxu0 0.0
        %806 = vmatpush1.xpose.msra.mxu0 0.0
        %807 = vmatprep.subr.mxu0 0.0
        %808 = vmatpush1.xpose.msra.mxu0 0.0
        %809 = vmatprep.mubr.f32.mxu0 0.0
        %810 = vmatmul.mubr.f32.gmra.mrb[0].mxu0 %v741
        %v811 = vpop.f32.mrb[0].mxu0
        %v812 = vadd.f32 0.0, %v811
        %v813 = vpop.f32.mrb[0].mxu0
        %814 = vdwg.mxu0
        %v815 = vsel %vm739, %v812, -inf
        %816 = vmax.xlane.f32.xlu0 %v815
        %v817 = vpop.xlane.xlu0 %816
        %v818 = vsub.f32 %v812, %v817
        %v819 = vmul.f32 %v818, 1.442695
        %v820 = vpow.pop %v819
        %v821 = vsel %vm739, %v820, 0.0
        %822 = vadd.xlane.f32.xlu0 %v821
        %v823 = vpop.xlane.xlu0 %822
        %v824 = vrcp.pop %v823
        %v825 = vmul.f32 %v820, %v824
        %826 = vrot.lane.b32.xlu0 %v732, 64
        %v827 = vpop.permute.xlu0 %826
        %v830 = vsel %vm739, %v825, 0
        %832 = vmatprep.subr.mxu0 0.0
        %833 = vmatpush1.msra.mxu0 %v827
        %834 = vmatprep.subr.mxu0 0.0
        %835 = vmatpush1.msra.mxu0 0.0
        %836 = vmatprep.subr.mxu0 0.0
        %837 = vmatpush1.msra.mxu0 0.0
        %838 = vmatprep.subr.mxu0 0.0
        %839 = vmatpush1.msra.mxu0 0.0
        %840 = vmatprep.subr.mxu0 0.0
        %841 = vmatpush1.msra.mxu0 0.0
        %842 = vmatprep.subr.mxu0 0.0
        %843 = vmatpush1.msra.mxu0 0.0
        %844 = vmatprep.subr.mxu0 0.0
        %845 = vmatpush1.msra.mxu0 0.0
        %846 = vmatprep.subr.mxu0 0.0
        %847 = vmatpush1.msra.mxu0 0.0
        %848 = vmatprep.subr.mxu0 0.0
        %849 = vmatpush1.msra.mxu0 0.0
        %850 = vmatprep.subr.mxu0 0.0
        %851 = vmatpush1.msra.mxu0 0.0
        %852 = vmatprep.subr.mxu0 0.0
        %853 = vmatpush1.msra.mxu0 0.0
        %854 = vmatprep.subr.mxu0 0.0
        %855 = vmatpush1.msra.mxu0 0.0
        %856 = vmatprep.subr.mxu0 0.0
        %857 = vmatpush1.msra.mxu0 0.0
        %858 = vmatprep.subr.mxu0 0.0
        %859 = vmatpush1.msra.mxu0 0.0
        %860 = vmatprep.subr.mxu0 0.0
        %861 = vmatpush1.msra.mxu0 0.0
        %862 = vmatprep.subr.mxu0 0.0
        %863 = vmatpush1.msra.mxu0 0.0
        %864 = vmatprep.subr.mxu0 0.0
        %865 = vmatpush1.msra.mxu0 0.0
        %866 = vmatprep.subr.mxu0 0.0
        %867 = vmatpush1.msra.mxu0 0.0
        %868 = vmatprep.subr.mxu0 0.0
        %869 = vmatpush1.msra.mxu0 0.0
        %870 = vmatprep.subr.mxu0 0.0
        %871 = vmatpush1.msra.mxu0 0.0
        %872 = vmatprep.subr.mxu0 0.0
        %873 = vmatpush1.msra.mxu0 0.0
        %874 = vmatprep.subr.mxu0 0.0
        %875 = vmatpush1.msra.mxu0 0.0
        %876 = vmatprep.subr.mxu0 0.0
        %877 = vmatpush1.msra.mxu0 0.0
        %878 = vmatprep.subr.mxu0 0.0
        %879 = vmatpush1.msra.mxu0 0.0
        %880 = vmatprep.subr.mxu0 0.0
        %881 = vmatpush1.msra.mxu0 0.0
        %882 = vmatprep.subr.mxu0 0.0
        %883 = vmatpush1.msra.mxu0 0.0
        %884 = vmatprep.subr.mxu0 0.0
        %885 = vmatpush1.msra.mxu0 0.0
        %886 = vmatprep.subr.mxu0 0.0
        %887 = vmatpush1.msra.mxu0 0.0
        %888 = vmatprep.subr.mxu0 0.0
        %889 = vmatpush1.msra.mxu0 0.0
        %890 = vmatprep.subr.mxu0 0.0
        %891 = vmatpush1.msra.mxu0 0.0
        %892 = vmatprep.subr.mxu0 0.0
        %893 = vmatpush1.msra.mxu0 0.0
        %894 = vmatprep.subr.mxu0 0.0
        %895 = vmatpush1.msra.mxu0 0.0
        %896 = vmatprep.mubr.f32.mxu0 0.0
        %897 = vmatmul.mubr.f32.gmra.mrb[0].mxu0 %v830
        %v898 = vpop.f32.mrb[0].mxu0
        %v899 = vadd.f32 0.0, %v898
        %v900 = vpop.f32.mrb[0].mxu0
        %901 = vdwg.mxu0
        %902 = vrot.lane.b32.xlu0 %v735, 120
        %v903 = vpop.permute.xlu0 %902
        %904 = vrot.lane.b32.xlu0 %v732, 88
        %v905 = vpop.permute.xlu0 %904
        %v906 = vsel %vm739, %v903, 0
        %v908 = vsel %vm739, %v905, 0
        %910 = vmatprep.subr.mxu0 0.0
        %911 = vmatpush1.xpose.msra.mxu0 %v908
        %912 = vmatprep.subr.mxu0 0.0
        %913 = vmatpush1.xpose.msra.mxu0 0.0
        %914 = vmatprep.subr.mxu0 0.0
        %915 = vmatpush1.xpose.msra.mxu0 0.0
        %916 = vmatprep.subr.mxu0 0.0
        %917 = vmatpush1.xpose.msra.mxu0 0.0
        %918 = vmatprep.subr.mxu0 0.0
        %919 = vmatpush1.xpose.msra.mxu0 0.0
        %920 = vmatprep.subr.mxu0 0.0
        %921 = vmatpush1.xpose.msra.mxu0 0.0
        %922 = vmatprep.subr.mxu0 0.0
        %923 = vmatpush1.xpose.msra.mxu0 0.0
        %924 = vmatprep.subr.mxu0 0.0
        %925 = vmatpush1.xpose.msra.mxu0 0.0
        %926 = vmatprep.subr.mxu0 0.0
        %927 = vmatpush1.xpose.msra.mxu0 0.0
        %928 = vmatprep.subr.mxu0 0.0
        %929 = vmatpush1.xpose.msra.mxu0 0.0
        %930 = vmatprep.subr.mxu0 0.0
        %931 = vmatpush1.xpose.msra.mxu0 0.0
        %932 = vmatprep.subr.mxu0 0.0
        %933 = vmatpush1.xpose.msra.mxu0 0.0
        %934 = vmatprep.subr.mxu0 0.0
        %935 = vmatpush1.xpose.msra.mxu0 0.0
        %936 = vmatprep.subr.mxu0 0.0
        %937 = vmatpush1.xpose.msra.mxu0 0.0
        %938 = vmatprep.subr.mxu0 0.0
        %939 = vmatpush1.xpose.msra.mxu0 0.0
        %940 = vmatprep.subr.mxu0 0.0
        %941 = vmatpush1.xpose.msra.mxu0 0.0
        %942 = vmatprep.subr.mxu0 0.0
        %943 = vmatpush1.xpose.msra.mxu0 0.0
        %944 = vmatprep.subr.mxu0 0.0
        %945 = vmatpush1.xpose.msra.mxu0 0.0
        %946 = vmatprep.subr.mxu0 0.0
        %947 = vmatpush1.xpose.msra.mxu0 0.0
        %948 = vmatprep.subr.mxu0 0.0
        %949 = vmatpush1.xpose.msra.mxu0 0.0
        %950 = vmatprep.subr.mxu0 0.0
        %951 = vmatpush1.xpose.msra.mxu0 0.0
        %952 = vmatprep.subr.mxu0 0.0
        %953 = vmatpush1.xpose.msra.mxu0 0.0
        %954 = vmatprep.subr.mxu0 0.0
        %955 = vmatpush1.xpose.msra.mxu0 0.0
        %956 = vmatprep.subr.mxu0 0.0
        %957 = vmatpush1.xpose.msra.mxu0 0.0
        %958 = vmatprep.subr.mxu0 0.0
        %959 = vmatpush1.xpose.msra.mxu0 0.0
        %960 = vmatprep.subr.mxu0 0.0
        %961 = vmatpush1.xpose.msra.mxu0 0.0
        %962 = vmatprep.subr.mxu0 0.0
        %963 = vmatpush1.xpose.msra.mxu0 0.0
        %964 = vmatprep.subr.mxu0 0.0
        %965 = vmatpush1.xpose.msra.mxu0 0.0
        %966 = vmatprep.subr.mxu0 0.0
        %967 = vmatpush1.xpose.msra.mxu0 0.0
        %968 = vmatprep.subr.mxu0 0.0
        %969 = vmatpush1.xpose.msra.mxu0 0.0
        %970 = vmatprep.subr.mxu0 0.0
        %971 = vmatpush1.xpose.msra.mxu0 0.0
        %972 = vmatprep.subr.mxu0 0.0
        %973 = vmatpush1.xpose.msra.mxu0 0.0
        %974 = vmatprep.mubr.f32.mxu0 0.0
        %975 = vmatmul.mubr.f32.gmra.mrb[0].mxu0 %v906
        %v976 = vpop.f32.mrb[0].mxu0
        %v977 = vadd.f32 0.0, %v976
        %v978 = vpop.f32.mrb[0].mxu0
        %979 = vdwg.mxu0
        %v980 = vsel %vm739, %v977, -inf
        %981 = vmax.xlane.f32.xlu0 %v980
        %v982 = vpop.xlane.xlu0 %981
        %v983 = vsub.f32 %v977, %v982
        %v984 = vmul.f32 %v983, 1.442695
        %v985 = vpow.pop %v984
        %v986 = vsel %vm739, %v985, 0.0
        %987 = vadd.xlane.f32.xlu0 %v986
        %v988 = vpop.xlane.xlu0 %987
        %v989 = vrcp.pop %v988
        %v990 = vmul.f32 %v985, %v989
        %991 = vrot.lane.b32.xlu0 %v732, 56
        %v992 = vpop.permute.xlu0 %991
        %v995 = vsel %vm739, %v990, 0
        %997 = vmatprep.subr.mxu0 0.0
        %998 = vmatpush1.msra.mxu0 %v992
        %999 = vmatprep.subr.mxu0 0.0
        %1000 = vmatpush1.msra.mxu0 0.0
        %1001 = vmatprep.subr.mxu0 0.0
        %1002 = vmatpush1.msra.mxu0 0.0
        %1003 = vmatprep.subr.mxu0 0.0
        %1004 = vmatpush1.msra.mxu0 0.0
        %1005 = vmatprep.subr.mxu0 0.0
        %1006 = vmatpush1.msra.mxu0 0.0
        %1007 = vmatprep.subr.mxu0 0.0
        %1008 = vmatpush1.msra.mxu0 0.0
        %1009 = vmatprep.subr.mxu0 0.0
        %1010 = vmatpush1.msra.mxu0 0.0
        %1011 = vmatprep.subr.mxu0 0.0
        %1012 = vmatpush1.msra.mxu0 0.0
        %1013 = vmatprep.subr.mxu0 0.0
        %1014 = vmatpush1.msra.mxu0 0.0
        %1015 = vmatprep.subr.mxu0 0.0
        %1016 = vmatpush1.msra.mxu0 0.0
        %1017 = vmatprep.subr.mxu0 0.0
        %1018 = vmatpush1.msra.mxu0 0.0
        %1019 = vmatprep.subr.mxu0 0.0
        %1020 = vmatpush1.msra.mxu0 0.0
        %1021 = vmatprep.subr.mxu0 0.0
        %1022 = vmatpush1.msra.mxu0 0.0
        %1023 = vmatprep.subr.mxu0 0.0
        %1024 = vmatpush1.msra.mxu0 0.0
        %1025 = vmatprep.subr.mxu0 0.0
        %1026 = vmatpush1.msra.mxu0 0.0
        %1027 = vmatprep.subr.mxu0 0.0
        %1028 = vmatpush1.msra.mxu0 0.0
        %1029 = vmatprep.subr.mxu0 0.0
        %1030 = vmatpush1.msra.mxu0 0.0
        %1031 = vmatprep.subr.mxu0 0.0
        %1032 = vmatpush1.msra.mxu0 0.0
        %1033 = vmatprep.subr.mxu0 0.0
        %1034 = vmatpush1.msra.mxu0 0.0
        %1035 = vmatprep.subr.mxu0 0.0
        %1036 = vmatpush1.msra.mxu0 0.0
        %1037 = vmatprep.subr.mxu0 0.0
        %1038 = vmatpush1.msra.mxu0 0.0
        %1039 = vmatprep.subr.mxu0 0.0
        %1040 = vmatpush1.msra.mxu0 0.0
        %1041 = vmatprep.subr.mxu0 0.0
        %1042 = vmatpush1.msra.mxu0 0.0
        %1043 = vmatprep.subr.mxu0 0.0
        %1044 = vmatpush1.msra.mxu0 0.0
        %1045 = vmatprep.subr.mxu0 0.0
        %1046 = vmatpush1.msra.mxu0 0.0
        %1047 = vmatprep.subr.mxu0 0.0
        %1048 = vmatpush1.msra.mxu0 0.0
        %1049 = vmatprep.subr.mxu0 0.0
        %1050 = vmatpush1.msra.mxu0 0.0
        %1051 = vmatprep.subr.mxu0 0.0
        %1052 = vmatpush1.msra.mxu0 0.0
        %1053 = vmatprep.subr.mxu0 0.0
        %1054 = vmatpush1.msra.mxu0 0.0
        %1055 = vmatprep.subr.mxu0 0.0
        %1056 = vmatpush1.msra.mxu0 0.0
        %1057 = vmatprep.subr.mxu0 0.0
        %1058 = vmatpush1.msra.mxu0 0.0
        %1059 = vmatprep.subr.mxu0 0.0
        %1060 = vmatpush1.msra.mxu0 0.0
        %1061 = vmatprep.mubr.f32.mxu0 0.0
        %1062 = vmatmul.mubr.f32.gmra.mrb[0].mxu0 %v995
        %v1063 = vpop.f32.mrb[0].mxu0
        %v1064 = vadd.f32 0.0, %v1063
        %v1065 = vpop.f32.mrb[0].mxu0
        %1066 = vdwg.mxu0
        %1067 = vrot.lane.b32.xlu0 %v735, 112
        %v1068 = vpop.permute.xlu0 %1067
        %1069 = vrot.lane.b32.xlu0 %v732, 80
        %v1070 = vpop.permute.xlu0 %1069
        %v1071 = vsel %vm739, %v1068, 0
        %v1073 = vsel %vm739, %v1070, 0
        %1075 = vmatprep.subr.mxu0 0.0
        %1076 = vmatpush1.xpose.msra.mxu0 %v1073
        %1077 = vmatprep.subr.mxu0 0.0
        %1078 = vmatpush1.xpose.msra.mxu0 0.0
        %1079 = vmatprep.subr.mxu0 0.0
        %1080 = vmatpush1.xpose.msra.mxu0 0.0
        %1081 = vmatprep.subr.mxu0 0.0
        %1082 = vmatpush1.xpose.msra.mxu0 0.0
        %1083 = vmatprep.subr.mxu0 0.0
        %1084 = vmatpush1.xpose.msra.mxu0 0.0
        %1085 = vmatprep.subr.mxu0 0.0
        %1086 = vmatpush1.xpose.msra.mxu0 0.0
        %1087 = vmatprep.subr.mxu0 0.0
        %1088 = vmatpush1.xpose.msra.mxu0 0.0
        %1089 = vmatprep.subr.mxu0 0.0
        %1090 = vmatpush1.xpose.msra.mxu0 0.0
        %1091 = vmatprep.subr.mxu0 0.0
        %1092 = vmatpush1.xpose.msra.mxu0 0.0
        %1093 = vmatprep.subr.mxu0 0.0
        %1094 = vmatpush1.xpose.msra.mxu0 0.0
        %1095 = vmatprep.subr.mxu0 0.0
        %1096 = vmatpush1.xpose.msra.mxu0 0.0
        %1097 = vmatprep.subr.mxu0 0.0
        %1098 = vmatpush1.xpose.msra.mxu0 0.0
        %1099 = vmatprep.subr.mxu0 0.0
        %1100 = vmatpush1.xpose.msra.mxu0 0.0
        %1101 = vmatprep.subr.mxu0 0.0
        %1102 = vmatpush1.xpose.msra.mxu0 0.0
        %1103 = vmatprep.subr.mxu0 0.0
        %1104 = vmatpush1.xpose.msra.mxu0 0.0
        %1105 = vmatprep.subr.mxu0 0.0
        %1106 = vmatpush1.xpose.msra.mxu0 0.0
        %1107 = vmatprep.subr.mxu0 0.0
        %1108 = vmatpush1.xpose.msra.mxu0 0.0
        %1109 = vmatprep.subr.mxu0 0.0
        %1110 = vmatpush1.xpose.msra.mxu0 0.0
        %1111 = vmatprep.subr.mxu0 0.0
        %1112 = vmatpush1.xpose.msra.mxu0 0.0
        %1113 = vmatprep.subr.mxu0 0.0
        %1114 = vmatpush1.xpose.msra.mxu0 0.0
        %1115 = vmatprep.subr.mxu0 0.0
        %1116 = vmatpush1.xpose.msra.mxu0 0.0
        %1117 = vmatprep.subr.mxu0 0.0
        %1118 = vmatpush1.xpose.msra.mxu0 0.0
        %1119 = vmatprep.subr.mxu0 0.0
        %1120 = vmatpush1.xpose.msra.mxu0 0.0
        %1121 = vmatprep.subr.mxu0 0.0
        %1122 = vmatpush1.xpose.msra.mxu0 0.0
        %1123 = vmatprep.subr.mxu0 0.0
        %1124 = vmatpush1.xpose.msra.mxu0 0.0
        %1125 = vmatprep.subr.mxu0 0.0
        %1126 = vmatpush1.xpose.msra.mxu0 0.0
        %1127 = vmatprep.subr.mxu0 0.0
        %1128 = vmatpush1.xpose.msra.mxu0 0.0
        %1129 = vmatprep.subr.mxu0 0.0
        %1130 = vmatpush1.xpose.msra.mxu0 0.0
        %1131 = vmatprep.subr.mxu0 0.0
        %1132 = vmatpush1.xpose.msra.mxu0 0.0
        %1133 = vmatprep.subr.mxu0 0.0
        %1134 = vmatpush1.xpose.msra.mxu0 0.0
        %1135 = vmatprep.subr.mxu0 0.0
        %1136 = vmatpush1.xpose.msra.mxu0 0.0
        %1137 = vmatprep.subr.mxu0 0.0
        %1138 = vmatpush1.xpose.msra.mxu0 0.0
        %1139 = vmatprep.mubr.f32.mxu0 0.0
        %1140 = vmatmul.mubr.f32.gmra.mrb[0].mxu0 %v1071
        %v1141 = vpop.f32.mrb[0].mxu0
        %v1142 = vadd.f32 0.0, %v1141
        %v1143 = vpop.f32.mrb[0].mxu0
        %1144 = vdwg.mxu0
        %v1145 = vsel %vm739, %v1142, -inf
        %1146 = vmax.xlane.f32.xlu0 %v1145
        %v1147 = vpop.xlane.xlu0 %1146
        %v1148 = vsub.f32 %v1142, %v1147
        %v1149 = vmul.f32 %v1148, 1.442695
        %v1150 = vpow.pop %v1149
        %v1151 = vsel %vm739, %v1150, 0.0
        %1152 = vadd.xlane.f32.xlu0 %v1151
        %v1153 = vpop.xlane.xlu0 %1152
        %v1154 = vrcp.pop %v1153
        %v1155 = vmul.f32 %v1150, %v1154
        %1156 = vrot.lane.b32.xlu0 %v732, 48
        %v1157 = vpop.permute.xlu0 %1156
        %v1160 = vsel %vm739, %v1155, 0
        %1162 = vmatprep.subr.mxu0 0.0
        %1163 = vmatpush1.msra.mxu0 %v1157
        %1164 = vmatprep.subr.mxu0 0.0
        %1165 = vmatpush1.msra.mxu0 0.0
        %1166 = vmatprep.subr.mxu0 0.0
        %1167 = vmatpush1.msra.mxu0 0.0
        %1168 = vmatprep.subr.mxu0 0.0
        %1169 = vmatpush1.msra.mxu0 0.0
        %1170 = vmatprep.subr.mxu0 0.0
        %1171 = vmatpush1.msra.mxu0 0.0
        %1172 = vmatprep.subr.mxu0 0.0
        %1173 = vmatpush1.msra.mxu0 0.0
        %1174 = vmatprep.subr.mxu0 0.0
        %1175 = vmatpush1.msra.mxu0 0.0
        %1176 = vmatprep.subr.mxu0 0.0
        %1177 = vmatpush1.msra.mxu0 0.0
        %1178 = vmatprep.subr.mxu0 0.0
        %1179 = vmatpush1.msra.mxu0 0.0
        %1180 = vmatprep.subr.mxu0 0.0
        %1181 = vmatpush1.msra.mxu0 0.0
        %1182 = vmatprep.subr.mxu0 0.0
        %1183 = vmatpush1.msra.mxu0 0.0
        %1184 = vmatprep.subr.mxu0 0.0
        %1185 = vmatpush1.msra.mxu0 0.0
        %1186 = vmatprep.subr.mxu0 0.0
        %1187 = vmatpush1.msra.mxu0 0.0
        %1188 = vmatprep.subr.mxu0 0.0
        %1189 = vmatpush1.msra.mxu0 0.0
        %1190 = vmatprep.subr.mxu0 0.0
        %1191 = vmatpush1.msra.mxu0 0.0
        %1192 = vmatprep.subr.mxu0 0.0
        %1193 = vmatpush1.msra.mxu0 0.0
        %1194 = vmatprep.subr.mxu0 0.0
        %1195 = vmatpush1.msra.mxu0 0.0
        %1196 = vmatprep.subr.mxu0 0.0
        %1197 = vmatpush1.msra.mxu0 0.0
        %1198 = vmatprep.subr.mxu0 0.0
        %1199 = vmatpush1.msra.mxu0 0.0
        %1200 = vmatprep.subr.mxu0 0.0
        %1201 = vmatpush1.msra.mxu0 0.0
        %1202 = vmatprep.subr.mxu0 0.0
        %1203 = vmatpush1.msra.mxu0 0.0
        %1204 = vmatprep.subr.mxu0 0.0
        %1205 = vmatpush1.msra.mxu0 0.0
        %1206 = vmatprep.subr.mxu0 0.0
        %1207 = vmatpush1.msra.mxu0 0.0
        %1208 = vmatprep.subr.mxu0 0.0
        %1209 = vmatpush1.msra.mxu0 0.0
        %1210 = vmatprep.subr.mxu0 0.0
        %1211 = vmatpush1.msra.mxu0 0.0
        %1212 = vmatprep.subr.mxu0 0.0
        %1213 = vmatpush1.msra.mxu0 0.0
        %1214 = vmatprep.subr.mxu0 0.0
        %1215 = vmatpush1.msra.mxu0 0.0
        %1216 = vmatprep.subr.mxu0 0.0
        %1217 = vmatpush1.msra.mxu0 0.0
        %1218 = vmatprep.subr.mxu0 0.0
        %1219 = vmatpush1.msra.mxu0 0.0
        %1220 = vmatprep.subr.mxu0 0.0
        %1221 = vmatpush1.msra.mxu0 0.0
        %1222 = vmatprep.subr.mxu0 0.0
        %1223 = vmatpush1.msra.mxu0 0.0
        %1224 = vmatprep.subr.mxu0 0.0
        %1225 = vmatpush1.msra.mxu0 0.0
        %1226 = vmatprep.mubr.f32.mxu0 0.0
        %1227 = vmatmul.mubr.f32.gmra.mrb[0].mxu0 %v1160
        %v1228 = vpop.f32.mrb[0].mxu0
        %v1229 = vadd.f32 0.0, %v1228
        %v1230 = vpop.f32.mrb[0].mxu0
        %1231 = vdwg.mxu0
        %1232 = vrot.lane.b32.xlu0 %v735, 104
        %v1233 = vpop.permute.xlu0 %1232
        %1234 = vrot.lane.b32.xlu0 %v732, 72
        %v1235 = vpop.permute.xlu0 %1234
        %v1236 = vsel %vm739, %v1233, 0
        %v1238 = vsel %vm739, %v1235, 0
        %1240 = vmatprep.subr.mxu0 0.0
        %1241 = vmatpush1.xpose.msra.mxu0 %v1238
        %1242 = vmatprep.subr.mxu0 0.0
        %1243 = vmatpush1.xpose.msra.mxu0 0.0
        %1244 = vmatprep.subr.mxu0 0.0
        %1245 = vmatpush1.xpose.msra.mxu0 0.0
        %1246 = vmatprep.subr.mxu0 0.0
        %1247 = vmatpush1.xpose.msra.mxu0 0.0
        %1248 = vmatprep.subr.mxu0 0.0
        %1249 = vmatpush1.xpose.msra.mxu0 0.0
        %1250 = vmatprep.subr.mxu0 0.0
        %1251 = vmatpush1.xpose.msra.mxu0 0.0
        %1252 = vmatprep.subr.mxu0 0.0
        %1253 = vmatpush1.xpose.msra.mxu0 0.0
        %1254 = vmatprep.subr.mxu0 0.0
        %1255 = vmatpush1.xpose.msra.mxu0 0.0
        %1256 = vmatprep.subr.mxu0 0.0
        %1257 = vmatpush1.xpose.msra.mxu0 0.0
        %1258 = vmatprep.subr.mxu0 0.0
        %1259 = vmatpush1.xpose.msra.mxu0 0.0
        %1260 = vmatprep.subr.mxu0 0.0
        %1261 = vmatpush1.xpose.msra.mxu0 0.0
        %1262 = vmatprep.subr.mxu0 0.0
        %1263 = vmatpush1.xpose.msra.mxu0 0.0
        %1264 = vmatprep.subr.mxu0 0.0
        %1265 = vmatpush1.xpose.msra.mxu0 0.0
        %1266 = vmatprep.subr.mxu0 0.0
        %1267 = vmatpush1.xpose.msra.mxu0 0.0
        %1268 = vmatprep.subr.mxu0 0.0
        %1269 = vmatpush1.xpose.msra.mxu0 0.0
        %1270 = vmatprep.subr.mxu0 0.0
        %1271 = vmatpush1.xpose.msra.mxu0 0.0
        %1272 = vmatprep.subr.mxu0 0.0
        %1273 = vmatpush1.xpose.msra.mxu0 0.0
        %1274 = vmatprep.subr.mxu0 0.0
        %1275 = vmatpush1.xpose.msra.mxu0 0.0
        %1276 = vmatprep.subr.mxu0 0.0
        %1277 = vmatpush1.xpose.msra.mxu0 0.0
        %1278 = vmatprep.subr.mxu0 0.0
        %1279 = vmatpush1.xpose.msra.mxu0 0.0
        %1280 = vmatprep.subr.mxu0 0.0
        %1281 = vmatpush1.xpose.msra.mxu0 0.0
        %1282 = vmatprep.subr.mxu0 0.0
        %1283 = vmatpush1.xpose.msra.mxu0 0.0
        %1284 = vmatprep.subr.mxu0 0.0
        %1285 = vmatpush1.xpose.msra.mxu0 0.0
        %1286 = vmatprep.subr.mxu0 0.0
        %1287 = vmatpush1.xpose.msra.mxu0 0.0
        %1288 = vmatprep.subr.mxu0 0.0
        %1289 = vmatpush1.xpose.msra.mxu0 0.0
        %1290 = vmatprep.subr.mxu0 0.0
        %1291 = vmatpush1.xpose.msra.mxu0 0.0
        %1292 = vmatprep.subr.mxu0 0.0
        %1293 = vmatpush1.xpose.msra.mxu0 0.0
        %1294 = vmatprep.subr.mxu0 0.0
        %1295 = vmatpush1.xpose.msra.mxu0 0.0
        %1296 = vmatprep.subr.mxu0 0.0
        %1297 = vmatpush1.xpose.msra.mxu0 0.0
        %1298 = vmatprep.subr.mxu0 0.0
        %1299 = vmatpush1.xpose.msra.mxu0 0.0
        %1300 = vmatprep.subr.mxu0 0.0
        %1301 = vmatpush1.xpose.msra.mxu0 0.0
        %1302 = vmatprep.subr.mxu0 0.0
        %1303 = vmatpush1.xpose.msra.mxu0 0.0
        %1304 = vmatprep.mubr.f32.mxu0 0.0
        %1305 = vmatmul.mubr.f32.gmra.mrb[0].mxu0 %v1236
        %v1306 = vpop.f32.mrb[0].mxu0
        %v1307 = vadd.f32 0.0, %v1306
        %v1308 = vpop.f32.mrb[0].mxu0
        %1309 = vdwg.mxu0
        %v1310 = vsel %vm739, %v1307, -inf
        %1311 = vmax.xlane.f32.xlu0 %v1310
        %v1312 = vpop.xlane.xlu0 %1311
        %v1313 = vsub.f32 %v1307, %v1312
        %v1314 = vmul.f32 %v1313, 1.442695
        %v1315 = vpow.pop %v1314
        %v1316 = vsel %vm739, %v1315, 0.0
        %1317 = vadd.xlane.f32.xlu0 %v1316
        %v1318 = vpop.xlane.xlu0 %1317
        %v1319 = vrcp.pop %v1318
        %v1320 = vmul.f32 %v1315, %v1319
        %1321 = vrot.lane.b32.xlu0 %v732, 40
        %v1322 = vpop.permute.xlu0 %1321
        %v1325 = vsel %vm739, %v1320, 0
        %1327 = vmatprep.subr.mxu0 0.0
        %1328 = vmatpush1.msra.mxu0 %v1322
        %1329 = vmatprep.subr.mxu0 0.0
        %1330 = vmatpush1.msra.mxu0 0.0
        %1331 = vmatprep.subr.mxu0 0.0
        %1332 = vmatpush1.msra.mxu0 0.0
        %1333 = vmatprep.subr.mxu0 0.0
        %1334 = vmatpush1.msra.mxu0 0.0
        %1335 = vmatprep.subr.mxu0 0.0
        %1336 = vmatpush1.msra.mxu0 0.0
        %1337 = vmatprep.subr.mxu0 0.0
        %1338 = vmatpush1.msra.mxu0 0.0
        %1339 = vmatprep.subr.mxu0 0.0
        %1340 = vmatpush1.msra.mxu0 0.0
        %1341 = vmatprep.subr.mxu0 0.0
        %1342 = vmatpush1.msra.mxu0 0.0
        %1343 = vmatprep.subr.mxu0 0.0
        %1344 = vmatpush1.msra.mxu0 0.0
        %1345 = vmatprep.subr.mxu0 0.0
        %1346 = vmatpush1.msra.mxu0 0.0
        %1347 = vmatprep.subr.mxu0 0.0
        %1348 = vmatpush1.msra.mxu0 0.0
        %1349 = vmatprep.subr.mxu0 0.0
        %1350 = vmatpush1.msra.mxu0 0.0
        %1351 = vmatprep.subr.mxu0 0.0
        %1352 = vmatpush1.msra.mxu0 0.0
        %1353 = vmatprep.subr.mxu0 0.0
        %1354 = vmatpush1.msra.mxu0 0.0
        %1355 = vmatprep.subr.mxu0 0.0
        %1356 = vmatpush1.msra.mxu0 0.0
        %1357 = vmatprep.subr.mxu0 0.0
        %1358 = vmatpush1.msra.mxu0 0.0
        %1359 = vmatprep.subr.mxu0 0.0
        %1360 = vmatpush1.msra.mxu0 0.0
        %1361 = vmatprep.subr.mxu0 0.0
        %1362 = vmatpush1.msra.mxu0 0.0
        %1363 = vmatprep.subr.mxu0 0.0
        %1364 = vmatpush1.msra.mxu0 0.0
        %1365 = vmatprep.subr.mxu0 0.0
        %1366 = vmatpush1.msra.mxu0 0.0
        %1367 = vmatprep.subr.mxu0 0.0
        %1368 = vmatpush1.msra.mxu0 0.0
        %1369 = vmatprep.subr.mxu0 0.0
        %1370 = vmatpush1.msra.mxu0 0.0
        %1371 = vmatprep.subr.mxu0 0.0
        %1372 = vmatpush1.msra.mxu0 0.0
        %1373 = vmatprep.subr.mxu0 0.0
        %1374 = vmatpush1.msra.mxu0 0.0
        %1375 = vmatprep.subr.mxu0 0.0
        %1376 = vmatpush1.msra.mxu0 0.0
        %1377 = vmatprep.subr.mxu0 0.0
        %1378 = vmatpush1.msra.mxu0 0.0
        %1379 = vmatprep.subr.mxu0 0.0
        %1380 = vmatpush1.msra.mxu0 0.0
        %1381 = vmatprep.subr.mxu0 0.0
        %1382 = vmatpush1.msra.mxu0 0.0
        %1383 = vmatprep.subr.mxu0 0.0
        %1384 = vmatpush1.msra.mxu0 0.0
        %1385 = vmatprep.subr.mxu0 0.0
        %1386 = vmatpush1.msra.mxu0 0.0
        %1387 = vmatprep.subr.mxu0 0.0
        %1388 = vmatpush1.msra.mxu0 0.0
        %1389 = vmatprep.subr.mxu0 0.0
        %1390 = vmatpush1.msra.mxu0 0.0
        %1391 = vmatprep.mubr.f32.mxu0 0.0
        %1392 = vmatmul.mubr.f32.gmra.mrb[0].mxu0 %v1325
        %v1393 = vpop.f32.mrb[0].mxu0
        %v1394 = vadd.f32 0.0, %v1393
        %v1395 = vpop.f32.mrb[0].mxu0
        %1396 = vdwg.mxu0
        %1398 = vrot.lane.b32.xlu0 %v1064, 8
        %v1399 = vpop.permute.xlu0 %1398
        %1402 = vrot.lane.b32.xlu0 %v1229, 16
        %v1403 = vpop.permute.xlu0 %1402
        %1406 = vrot.lane.b32.xlu0 %v1394, 24
        %v1407 = vpop.permute.xlu0 %1406
        %v1409 = vsel %vm739, %v899, %v1399
        %vm1410 = vcmask 130048
        %v1411 = vsel %vm1410, %v1409, %v1403
        %vm1412 = vcmask 195584
        %v1413 = vsel %vm1412, %v1411, %v1407
        %s1414 = scalar_lea.vmem %s5, %s647
        %v1415 = vld [vmem:[%s1414] sm:$0xff]
        %v1416 = vld [vmem:[%s1414 + $0x8] sm:$0xff]
        %v1417 = vld [vmem:[%s1414 + $0x10] sm:$0xff]
        %v1418 = vld [vmem:[%s1414 + $0x18] sm:$0xff]
        %s1419 = scalar_lea.vmem %s6, %s29
        %v1420 = vld [vmem:[%s1419] sm:$0x1]
        %v1422 = vlaneseq
        %v1423 = vshrl.u32 %v1422, 7
        %v1424 = vsub.s32 0, %v1423
        %v1425 = vrot.slane %v1420, %v1424
        %v1428 = vsel %vm661, %v1413, 0
        %1430 = vmatprep.subr.mxu0 0.0
        %1431 = vmatpush1.msra.mxu0 %v1415
        %1432 = vmatprep.subr.mxu0 0.0
        %1433 = vmatpush1.msra.mxu0 %v1416
        %1434 = vmatprep.subr.mxu0 0.0
        %1435 = vmatpush1.msra.mxu0 %v1417
        %1436 = vmatprep.subr.mxu0 0.0
        %1437 = vmatpush1.msra.mxu0 %v1418
        %1438 = vmatprep.subr.mxu0 0.0
        %1439 = vmatpush1.msra.mxu0 0.0
        %1440 = vmatprep.subr.mxu0 0.0
        %1441 = vmatpush1.msra.mxu0 0.0
        %1442 = vmatprep.subr.mxu0 0.0
        %1443 = vmatpush1.msra.mxu0 0.0
        %1444 = vmatprep.subr.mxu0 0.0
        %1445 = vmatpush1.msra.mxu0 0.0
        %1446 = vmatprep.subr.mxu0 0.0
        %1447 = vmatpush1.msra.mxu0 0.0
        %1448 = vmatprep.subr.mxu0 0.0
        %1449 = vmatpush1.msra.mxu0 0.0
        %1450 = vmatprep.subr.mxu0 0.0
        %1451 = vmatpush1.msra.mxu0 0.0
        %1452 = vmatprep.subr.mxu0 0.0
        %1453 = vmatpush1.msra.mxu0 0.0
        %1454 = vmatprep.subr.mxu0 0.0
        %1455 = vmatpush1.msra.mxu0 0.0
        %1456 = vmatprep.subr.mxu0 0.0
        %1457 = vmatpush1.msra.mxu0 0.0
        %1458 = vmatprep.subr.mxu0 0.0
        %1459 = vmatpush1.msra.mxu0 0.0
        %1460 = vmatprep.subr.mxu0 0.0
        %1461 = vmatpush1.msra.mxu0 0.0
        %1462 = vmatprep.subr.mxu0 0.0
        %1463 = vmatpush1.msra.mxu0 0.0
        %1464 = vmatprep.subr.mxu0 0.0
        %1465 = vmatpush1.msra.mxu0 0.0
        %1466 = vmatprep.subr.mxu0 0.0
        %1467 = vmatpush1.msra.mxu0 0.0
        %1468 = vmatprep.subr.mxu0 0.0
        %1469 = vmatpush1.msra.mxu0 0.0
        %1470 = vmatprep.subr.mxu0 0.0
        %1471 = vmatpush1.msra.mxu0 0.0
        %1472 = vmatprep.subr.mxu0 0.0
        %1473 = vmatpush1.msra.mxu0 0.0
        %1474 = vmatprep.subr.mxu0 0.0
        %1475 = vmatpush1.msra.mxu0 0.0
        %1476 = vmatprep.subr.mxu0 0.0
        %1477 = vmatpush1.msra.mxu0 0.0
        %1478 = vmatprep.subr.mxu0 0.0
        %1479 = vmatpush1.msra.mxu0 0.0
        %1480 = vmatprep.subr.mxu0 0.0
        %1481 = vmatpush1.msra.mxu0 0.0
        %1482 = vmatprep.subr.mxu0 0.0
        %1483 = vmatpush1.msra.mxu0 0.0
        %1484 = vmatprep.subr.mxu0 0.0
        %1485 = vmatpush1.msra.mxu0 0.0
        %1486 = vmatprep.subr.mxu0 0.0
        %1487 = vmatpush1.msra.mxu0 0.0
        %1488 = vmatprep.subr.mxu0 0.0
        %1489 = vmatpush1.msra.mxu0 0.0
        %1490 = vmatprep.subr.mxu0 0.0
        %1491 = vmatpush1.msra.mxu0 0.0
        %1492 = vmatprep.subr.mxu0 0.0
        %1493 = vmatpush1.msra.mxu0 0.0
        %1494 = vmatprep.mubr.f32.mxu0 0.0
        %1495 = vmatmul.mubr.f32.gmra.mrb[0].mxu0 %v1428
        %v1496 = vpop.f32.mrb[0].mxu0
        %v1497 = vadd.f32 %v1425, %v1496
        %v1498 = vpop.f32.mrb[0].mxu0
        %1499 = vdwg.mxu0
        %v1500 = vadd.f32 %v646, %v1497
        %s1501 = scalar_lea.vmem %s7, %s29
        %v1502 = vld [vmem:[%s1501] sm:$0x1]
        %s1503 = scalar_lea.vmem %s8, %s29
        %v1504 = vld [vmem:[%s1503] sm:$0x1]
        %v1505 = vsel %vm661, %v1500, 0.0
        %1506 = vadd.xlane.f32.xlu0 %v1505
        %v1507 = vpop.xlane.xlu0 %1506
        %v1508 = vrcp.pop 32.0
        %v1509 = vmul.f32 %v1507, %v1508
        %v1510 = vsub.f32 %v1500, %v1509
        %v1511 = vmul.f32 %v1510, %v1510
        %v1512 = vsel %vm661, %v1511, 0.0
        %1513 = vadd.xlane.f32.xlu0 %v1512
        %v1514 = vpop.xlane.xlu0 %1513
        %v1515 = vmul.f32 %v1514, %v1508
        %v1516 = vadd.f32 %v1515, 1e-05
        %v1517 = vrsqrt.pop %v1516
        %v1518 = vmul.f32 %v1510, %v1517
        %v1520 = vlaneseq
        %v1521 = vshrl.u32 %v1520, 7
        %v1522 = vsub.s32 0, %v1521
        %v1523 = vrot.slane %v1502, %v1522
        %v1525 = vmul.f32 %v1518, %v1523
        %v1527 = vlaneseq
        %v1528 = vshrl.u32 %v1527, 7
        %v1529 = vsub.s32 0, %v1528
        %v1530 = vrot.slane %v1504, %v1529
        %v1532 = vadd.f32 %v1525, %v1530
        %v1533 = vpack.c.bf16 %v1532, %v1532
        %v1534 = vld [vmem:[%s549] sm:$0xff]
        %v1535 = vld [vmem:[%s549 + $0x8] sm:$0xff]
        %v1536 = vld [vmem:[%s549 + $0x10] sm:$0xff]
        %v1537 = vld [vmem:[%s549 + $0x18] sm:$0xff]
        %v1538 = vld [vmem:[%s549 + $0x20] sm:$0xff]
        %v1539 = vld [vmem:[%s549 + $0x28] sm:$0xff]
        %v1540 = vld [vmem:[%s549 + $0x30] sm:$0xff]
        %v1541 = vld [vmem:[%s549 + $0x38] sm:$0xff]
        %v1542 = vld [vmem:[%s549 + $0x40] sm:$0xff]
        %v1543 = vld [vmem:[%s549 + $0x48] sm:$0xff]
        %v1544 = vld [vmem:[%s549 + $0x50] sm:$0xff]
        %v1545 = vld [vmem:[%s549 + $0x58] sm:$0xff]
        %v1546 = vld [vmem:[%s549 + $0x60] sm:$0xff]
        %v1547 = vld [vmem:[%s549 + $0x68] sm:$0xff]
        %v1548 = vld [vmem:[%s549 + $0x70] sm:$0xff]
        %v1549 = vld [vmem:[%s549 + $0x78] sm:$0xff]
        %v1550 = vld [vmem:[%s549 + $0x80] sm:$0xff]
        %v1551 = vld [vmem:[%s549 + $0x88] sm:$0xff]
        %v1552 = vld [vmem:[%s549 + $0x90] sm:$0xff]
        %v1553 = vld [vmem:[%s549 + $0x98] sm:$0xff]
        %v1554 = vld [vmem:[%s549 + $0xa0] sm:$0xff]
        %v1555 = vld [vmem:[%s549 + $0xa8] sm:$0xff]
        %v1556 = vld [vmem:[%s549 + $0xb0] sm:$0xff]
        %v1557 = vld [vmem:[%s549 + $0xb8] sm:$0xff]
        %v1558 = vld [vmem:[%s549 + $0xc0] sm:$0xff]
        %v1559 = vld [vmem:[%s549 + $0xc8] sm:$0xff]
        %v1560 = vld [vmem:[%s549 + $0xd0] sm:$0xff]
        %v1561 = vld [vmem:[%s549 + $0xd8] sm:$0xff]
        %v1562 = vld [vmem:[%s549 + $0xe0] sm:$0xff]
        %v1563 = vld [vmem:[%s549 + $0xe8] sm:$0xff]
        %v1564 = vld [vmem:[%s549 + $0xf0] sm:$0xff]
        %v1565 = vld [vmem:[%s549 + $0xf8] sm:$0xff]
        %s1566 = smul.u32 %s29, 16
        %s1567 = scalar_lea.vmem %s11, %s1566
        %v1568 = vld [vmem:[%s1567] sm:$0xff]
        %v1569 = vld [vmem:[%s1567 + $0x8] sm:$0xff]
        %v1572 = vlaneseq
        %v1573 = vshrl.u32 %v1572, 7
        %v1574 = vsub.s32 0, %v1573
        %v1575 = vrot.slane %v1568, %v1574
        %v1576 = vlaneseq
        %v1577 = vshrl.u32 %v1576, 7
        %v1578 = vsub.s32 1, %v1577
        %v1579 = vrot.slane %v1568, %v1578
        %v1580 = vlaneseq
        %v1581 = vshrl.u32 %v1580, 7
        %v1582 = vsub.s32 2, %v1581
        %v1583 = vrot.slane %v1568, %v1582
        %v1584 = vlaneseq
        %v1585 = vshrl.u32 %v1584, 7
        %v1586 = vsub.s32 3, %v1585
        %v1587 = vrot.slane %v1568, %v1586
        %v1588 = vlaneseq
        %v1589 = vshrl.u32 %v1588, 7
        %v1590 = vsub.s32 4, %v1589
        %v1591 = vrot.slane %v1568, %v1590
        %v1592 = vlaneseq
        %v1593 = vshrl.u32 %v1592, 7
        %v1594 = vsub.s32 5, %v1593
        %v1595 = vrot.slane %v1568, %v1594
        %v1596 = vlaneseq
        %v1597 = vshrl.u32 %v1596, 7
        %v1598 = vsub.s32 6, %v1597
        %v1599 = vrot.slane %v1568, %v1598
        %v1600 = vlaneseq
        %v1601 = vshrl.u32 %v1600, 7
        %v1602 = vsub.s32 7, %v1601
        %v1603 = vrot.slane %v1568, %v1602
        %v1604 = vlaneseq
        %v1605 = vshrl.u32 %v1604, 7
        %v1606 = vsub.s32 0, %v1605
        %v1607 = vrot.slane %v1569, %v1606
        %v1608 = vlaneseq
        %v1609 = vshrl.u32 %v1608, 7
        %v1610 = vsub.s32 1, %v1609
        %v1611 = vrot.slane %v1569, %v1610
        %v1612 = vlaneseq
        %v1613 = vshrl.u32 %v1612, 7
        %v1614 = vsub.s32 2, %v1613
        %v1615 = vrot.slane %v1569, %v1614
        %v1616 = vlaneseq
        %v1617 = vshrl.u32 %v1616, 7
        %v1618 = vsub.s32 3, %v1617
        %v1619 = vrot.slane %v1569, %v1618
        %v1620 = vlaneseq
        %v1621 = vshrl.u32 %v1620, 7
        %v1622 = vsub.s32 4, %v1621
        %v1623 = vrot.slane %v1569, %v1622
        %v1624 = vlaneseq
        %v1625 = vshrl.u32 %v1624, 7
        %v1626 = vsub.s32 5, %v1625
        %v1627 = vrot.slane %v1569, %v1626
        %v1628 = vlaneseq
        %v1629 = vshrl.u32 %v1628, 7
        %v1630 = vsub.s32 6, %v1629
        %v1631 = vrot.slane %v1569, %v1630
        %v1632 = vlaneseq
        %v1633 = vshrl.u32 %v1632, 7
        %v1634 = vsub.s32 7, %v1633
        %v1635 = vrot.slane %v1569, %v1634
        %v1684 = vunpack.c.l.b16 %v1534
        %v1685 = vunpack.c.h.b16 %v1534
        %v1686 = vunpack.c.l.b16 %v1535
        %v1687 = vunpack.c.h.b16 %v1535
        %v1688 = vunpack.c.l.b16 %v1536
        %v1689 = vunpack.c.h.b16 %v1536
        %v1690 = vunpack.c.l.b16 %v1537
        %v1691 = vunpack.c.h.b16 %v1537
        %v1692 = vunpack.c.l.b16 %v1538
        %v1693 = vunpack.c.h.b16 %v1538
        %v1694 = vunpack.c.l.b16 %v1539
        %v1695 = vunpack.c.h.b16 %v1539
        %v1696 = vunpack.c.l.b16 %v1540
        %v1697 = vunpack.c.h.b16 %v1540
        %v1698 = vunpack.c.l.b16 %v1541
        %v1699 = vunpack.c.h.b16 %v1541
        %v1700 = vunpack.c.l.b16 %v1542
        %v1701 = vunpack.c.h.b16 %v1542
        %v1702 = vunpack.c.l.b16 %v1543
        %v1703 = vunpack.c.h.b16 %v1543
        %v1704 = vunpack.c.l.b16 %v1544
        %v1705 = vunpack.c.h.b16 %v1544
        %v1706 = vunpack.c.l.b16 %v1545
        %v1707 = vunpack.c.h.b16 %v1545
        %v1708 = vunpack.c.l.b16 %v1546
        %v1709 = vunpack.c.h.b16 %v1546
        %v1710 = vunpack.c.l.b16 %v1547
        %v1711 = vunpack.c.h.b16 %v1547
        %v1712 = vunpack.c.l.b16 %v1548
        %v1713 = vunpack.c.h.b16 %v1548
        %v1714 = vunpack.c.l.b16 %v1549
        %v1715 = vunpack.c.h.b16 %v1549
        %v1716 = vunpack.c.l.b16 %v1550
        %v1717 = vunpack.c.h.b16 %v1550
        %v1718 = vunpack.c.l.b16 %v1551
        %v1719 = vunpack.c.h.b16 %v1551
        %v1720 = vunpack.c.l.b16 %v1552
        %v1721 = vunpack.c.h.b16 %v1552
        %v1722 = vunpack.c.l.b16 %v1553
        %v1723 = vunpack.c.h.b16 %v1553
        %v1724 = vunpack.c.l.b16 %v1554
        %v1725 = vunpack.c.h.b16 %v1554
        %v1726 = vunpack.c.l.b16 %v1555
        %v1727 = vunpack.c.h.b16 %v1555
        %v1728 = vunpack.c.l.b16 %v1556
        %v1729 = vunpack.c.h.b16 %v1556
        %v1730 = vunpack.c.l.b16 %v1557
        %v1731 = vunpack.c.h.b16 %v1557
        %v1732 = vunpack.c.l.b16 %v1558
        %v1733 = vunpack.c.h.b16 %v1558
        %v1734 = vunpack.c.l.b16 %v1559
        %v1735 = vunpack.c.h.b16 %v1559
        %v1736 = vunpack.c.l.b16 %v1560
        %v1737 = vunpack.c.h.b16 %v1560
        %v1738 = vunpack.c.l.b16 %v1561
        %v1739 = vunpack.c.h.b16 %v1561
        %v1740 = vunpack.c.l.b16 %v1562
        %v1741 = vunpack.c.h.b16 %v1562
        %v1742 = vunpack.c.l.b16 %v1563
        %v1743 = vunpack.c.h.b16 %v1563
        %v1744 = vunpack.c.l.b16 %v1564
        %v1745 = vunpack.c.h.b16 %v1564
        %v1746 = vunpack.c.l.b16 %v1565
        %v1747 = vunpack.c.h.b16 %v1565
        %v1748 = vpack.c.b16 %v1700, %v1684
        %v1749 = vpack.c.b16 %v1701, %v1685
        %v1750 = vpack.c.b16 %v1702, %v1686
        %v1751 = vpack.c.b16 %v1703, %v1687
        %v1752 = vpack.c.b16 %v1704, %v1688
        %v1753 = vpack.c.b16 %v1705, %v1689
        %v1754 = vpack.c.b16 %v1706, %v1690
        %v1755 = vpack.c.b16 %v1707, %v1691
        %v1756 = vpack.c.b16 %v1708, %v1692
        %v1757 = vpack.c.b16 %v1709, %v1693
        %v1758 = vpack.c.b16 %v1710, %v1694
        %v1759 = vpack.c.b16 %v1711, %v1695
        %v1760 = vpack.c.b16 %v1712, %v1696
        %v1761 = vpack.c.b16 %v1713, %v1697
        %v1762 = vpack.c.b16 %v1714, %v1698
        %v1763 = vpack.c.b16 %v1715, %v1699
        %v1764 = vpack.c.b16 %v1732, %v1716
        %v1765 = vpack.c.b16 %v1733, %v1717
        %v1766 = vpack.c.b16 %v1734, %v1718
        %v1767 = vpack.c.b16 %v1735, %v1719
        %v1768 = vpack.c.b16 %v1736, %v1720
        %v1769 = vpack.c.b16 %v1737, %v1721
        %v1770 = vpack.c.b16 %v1738, %v1722
        %v1771 = vpack.c.b16 %v1739, %v1723
        %v1772 = vpack.c.b16 %v1740, %v1724
        %v1773 = vpack.c.b16 %v1741, %v1725
        %v1774 = vpack.c.b16 %v1742, %v1726
        %v1775 = vpack.c.b16 %v1743, %v1727
        %v1776 = vpack.c.b16 %v1744, %v1728
        %v1777 = vpack.c.b16 %v1745, %v1729
        %v1778 = vpack.c.b16 %v1746, %v1730
        %v1779 = vpack.c.b16 %v1747, %v1731
        %v1813 = vsel %vm661, %v1533, 0
        %1815 = vmatprep.subr.bf16.mxu0 %v1749
        %1816 = vmatpush1.bf16.msra.mxu0 %v1748
        %1817 = vmatprep.subr.bf16.mxu0 %v1765
        %1818 = vmatpush1.bf16.msra.mxu0 %v1764
        %1819 = vmatprep.subr.bf16.mxu0 0
        %1820 = vmatpush1.bf16.msra.mxu0 0
        %1821 = vmatprep.subr.bf16.mxu0 0
        %1822 = vmatpush1.bf16.msra.mxu0 0
        %1823 = vmatprep.subr.bf16.mxu0 0
        %1824 = vmatpush1.bf16.msra.mxu0 0
        %1825 = vmatprep.subr.bf16.mxu0 0
        %1826 = vmatpush1.bf16.msra.mxu0 0
        %1827 = vmatprep.subr.bf16.mxu0 0
        %1828 = vmatpush1.bf16.msra.mxu0 0
        %1829 = vmatprep.subr.bf16.mxu0 0
        %1830 = vmatpush1.bf16.msra.mxu0 0
        %1831 = vmatprep.subr.bf16.mxu0 0
        %1832 = vmatpush1.bf16.msra.mxu0 0
        %1833 = vmatprep.subr.bf16.mxu0 0
        %1834 = vmatpush1.bf16.msra.mxu0 0
        %1835 = vmatprep.subr.bf16.mxu0 0
        %1836 = vmatpush1.bf16.msra.mxu0 0
        %1837 = vmatprep.subr.bf16.mxu0 0
        %1838 = vmatpush1.bf16.msra.mxu0 0
        %1839 = vmatprep.subr.bf16.mxu0 0
        %1840 = vmatpush1.bf16.msra.mxu0 0
        %1841 = vmatprep.subr.bf16.mxu0 0
        %1842 = vmatpush1.bf16.msra.mxu0 0
        %1843 = vmatprep.subr.bf16.mxu0 0
        %1844 = vmatpush1.bf16.msra.mxu0 0
        %1845 = vmatprep.subr.bf16.mxu0 0
        %1846 = vmatpush1.bf16.msra.mxu0 0
        %1847 = vmatprep.mubr.bf16.mxu0 0
        %1848 = vmatmul.mubr.bf16.gmra.mrb[0].mxu0 %v1813
        %v1849 = vpop.f32.mrb[0].mxu0
        %v1850 = vadd.f32 %v1575, %v1849
        %v1851 = vpop.f32.mrb[0].mxu0
        %v1852 = vadd.f32 %v1579, %v1851
        %v1853 = vpop.f32.mrb[0].mxu0
        %v1854 = vpop.f32.mrb[0].mxu0
        %1855 = vdwg.mxu0
        %1856 = vmatprep.subr.bf16.mxu0 %v1751
        %1857 = vmatpush1.bf16.msra.mxu0 %v1750
        %1858 = vmatprep.subr.bf16.mxu0 %v1767
        %1859 = vmatpush1.bf16.msra.mxu0 %v1766
        %1860 = vmatprep.subr.bf16.mxu0 0
        %1861 = vmatpush1.bf16.msra.mxu0 0
        %1862 = vmatprep.subr.bf16.mxu0 0
        %1863 = vmatpush1.bf16.msra.mxu0 0
        %1864 = vmatprep.subr.bf16.mxu0 0
        %1865 = vmatpush1.bf16.msra.mxu0 0
        %1866 = vmatprep.subr.bf16.mxu0 0
        %1867 = vmatpush1.bf16.msra.mxu0 0
        %1868 = vmatprep.subr.bf16.mxu0 0
        %1869 = vmatpush1.bf16.msra.mxu0 0
        %1870 = vmatprep.subr.bf16.mxu0 0
        %1871 = vmatpush1.bf16.msra.mxu0 0
        %1872 = vmatprep.subr.bf16.mxu0 0
        %1873 = vmatpush1.bf16.msra.mxu0 0
        %1874 = vmatprep.subr.bf16.mxu0 0
        %1875 = vmatpush1.bf16.msra.mxu0 0
        %1876 = vmatprep.subr.bf16.mxu0 0
        %1877 = vmatpush1.bf16.msra.mxu0 0
        %1878 = vmatprep.subr.bf16.mxu0 0
        %1879 = vmatpush1.bf16.msra.mxu0 0
        %1880 = vmatprep.subr.bf16.mxu0 0
        %1881 = vmatpush1.bf16.msra.mxu0 0
        %1882 = vmatprep.subr.bf16.mxu0 0
        %1883 = vmatpush1.bf16.msra.mxu0 0
        %1884 = vmatprep.subr.bf16.mxu0 0
        %1885 = vmatpush1.bf16.msra.mxu0 0
        %1886 = vmatprep.subr.bf16.mxu0 0
        %1887 = vmatpush1.bf16.msra.mxu0 0
        %1888 = vmatprep.mubr.bf16.mxu0 0
        %1889 = vmatmul.mubr.bf16.gmra.mrb[0].mxu0 %v1813
        %v1890 = vpop.f32.mrb[0].mxu0
        %v1891 = vadd.f32 %v1583, %v1890
        %v1892 = vpop.f32.mrb[0].mxu0
        %v1893 = vadd.f32 %v1587, %v1892
        %v1894 = vpop.f32.mrb[0].mxu0
        %v1895 = vpop.f32.mrb[0].mxu0
        %1896 = vdwg.mxu0
        %1897 = vmatprep.subr.bf16.mxu0 %v1753
        %1898 = vmatpush1.bf16.msra.mxu0 %v1752
        %1899 = vmatprep.subr.bf16.mxu0 %v1769
        %1900 = vmatpush1.bf16.msra.mxu0 %v1768
        %1901 = vmatprep.subr.bf16.mxu0 0
        %1902 = vmatpush1.bf16.msra.mxu0 0
        %1903 = vmatprep.subr.bf16.mxu0 0
        %1904 = vmatpush1.bf16.msra.mxu0 0
        %1905 = vmatprep.subr.bf16.mxu0 0
        %1906 = vmatpush1.bf16.msra.mxu0 0
        %1907 = vmatprep.subr.bf16.mxu0 0
        %1908 = vmatpush1.bf16.msra.mxu0 0
        %1909 = vmatprep.subr.bf16.mxu0 0
        %1910 = vmatpush1.bf16.msra.mxu0 0
        %1911 = vmatprep.subr.bf16.mxu0 0
        %1912 = vmatpush1.bf16.msra.mxu0 0
        %1913 = vmatprep.subr.bf16.mxu0 0
        %1914 = vmatpush1.bf16.msra.mxu0 0
        %1915 = vmatprep.subr.bf16.mxu0 0
        %1916 = vmatpush1.bf16.msra.mxu0 0
        %1917 = vmatprep.subr.bf16.mxu0 0
        %1918 = vmatpush1.bf16.msra.mxu0 0
        %1919 = vmatprep.subr.bf16.mxu0 0
        %1920 = vmatpush1.bf16.msra.mxu0 0
        %1921 = vmatprep.subr.bf16.mxu0 0
        %1922 = vmatpush1.bf16.msra.mxu0 0
        %1923 = vmatprep.subr.bf16.mxu0 0
        %1924 = vmatpush1.bf16.msra.mxu0 0
        %1925 = vmatprep.subr.bf16.mxu0 0
        %1926 = vmatpush1.bf16.msra.mxu0 0
        %1927 = vmatprep.subr.bf16.mxu0 0
        %1928 = vmatpush1.bf16.msra.mxu0 0
        %1929 = vmatprep.mubr.bf16.mxu0 0
        %1930 = vmatmul.mubr.bf16.gmra.mrb[0].mxu0 %v1813
        %v1931 = vpop.f32.mrb[0].mxu0
        %v1932 = vadd.f32 %v1591, %v1931
        %v1933 = vpop.f32.mrb[0].mxu0
        %v1934 = vadd.f32 %v1595, %v1933
        %v1935 = vpop.f32.mrb[0].mxu0
        %v1936 = vpop.f32.mrb[0].mxu0
        %1937 = vdwg.mxu0
        %1938 = vmatprep.subr.bf16.mxu0 %v1755
        %1939 = vmatpush1.bf16.msra.mxu0 %v1754
        %1940 = vmatprep.subr.bf16.mxu0 %v1771
        %1941 = vmatpush1.bf16.msra.mxu0 %v1770
        %1942 = vmatprep.subr.bf16.mxu0 0
        %1943 = vmatpush1.bf16.msra.mxu0 0
        %1944 = vmatprep.subr.bf16.mxu0 0
        %1945 = vmatpush1.bf16.msra.mxu0 0
        %1946 = vmatprep.subr.bf16.mxu0 0
        %1947 = vmatpush1.bf16.msra.mxu0 0
        %1948 = vmatprep.subr.bf16.mxu0 0
        %1949 = vmatpush1.bf16.msra.mxu0 0
        %1950 = vmatprep.subr.bf16.mxu0 0
        %1951 = vmatpush1.bf16.msra.mxu0 0
        %1952 = vmatprep.subr.bf16.mxu0 0
        %1953 = vmatpush1.bf16.msra.mxu0 0
        %1954 = vmatprep.subr.bf16.mxu0 0
        %1955 = vmatpush1.bf16.msra.mxu0 0
        %1956 = vmatprep.subr.bf16.mxu0 0
        %1957 = vmatpush1.bf16.msra.mxu0 0
        %1958 = vmatprep.subr.bf16.mxu0 0
        %1959 = vmatpush1.bf16.msra.mxu0 0
        %1960 = vmatprep.subr.bf16.mxu0 0
        %1961 = vmatpush1.bf16.msra.mxu0 0
        %1962 = vmatprep.subr.bf16.mxu0 0
        %1963 = vmatpush1.bf16.msra.mxu0 0
        %1964 = vmatprep.subr.bf16.mxu0 0
        %1965 = vmatpush1.bf16.msra.mxu0 0
        %1966 = vmatprep.subr.bf16.mxu0 0
        %1967 = vmatpush1.bf16.msra.mxu0 0
        %1968 = vmatprep.subr.bf16.mxu0 0
        %1969 = vmatpush1.bf16.msra.mxu0 0
        %1970 = vmatprep.mubr.bf16.mxu0 0
        %1971 = vmatmul.mubr.bf16.gmra.mrb[0].mxu0 %v1813
        %v1972 = vpop.f32.mrb[0].mxu0
        %v1973 = vadd.f32 %v1599, %v1972
        %v1974 = vpop.f32.mrb[0].mxu0
        %v1975 = vadd.f32 %v1603, %v1974
        %v1976 = vpop.f32.mrb[0].mxu0
        %v1977 = vpop.f32.mrb[0].mxu0
        %1978 = vdwg.mxu0
        %1979 = vmatprep.subr.bf16.mxu0 %v1757
        %1980 = vmatpush1.bf16.msra.mxu0 %v1756
        %1981 = vmatprep.subr.bf16.mxu0 %v1773
        %1982 = vmatpush1.bf16.msra.mxu0 %v1772
        %1983 = vmatprep.subr.bf16.mxu0 0
        %1984 = vmatpush1.bf16.msra.mxu0 0
        %1985 = vmatprep.subr.bf16.mxu0 0
        %1986 = vmatpush1.bf16.msra.mxu0 0
        %1987 = vmatprep.subr.bf16.mxu0 0
        %1988 = vmatpush1.bf16.msra.mxu0 0
        %1989 = vmatprep.subr.bf16.mxu0 0
        %1990 = vmatpush1.bf16.msra.mxu0 0
        %1991 = vmatprep.subr.bf16.mxu0 0
        %1992 = vmatpush1.bf16.msra.mxu0 0
        %1993 = vmatprep.subr.bf16.mxu0 0
        %1994 = vmatpush1.bf16.msra.mxu0 0
        %1995 = vmatprep.subr.bf16.mxu0 0
        %1996 = vmatpush1.bf16.msra.mxu0 0
        %1997 = vmatprep.subr.bf16.mxu0 0
        %1998 = vmatpush1.bf16.msra.mxu0 0
        %1999 = vmatprep.subr.bf16.mxu0 0
        %2000 = vmatpush1.bf16.msra.mxu0 0
        %2001 = vmatprep.subr.bf16.mxu0 0
        %2002 = vmatpush1.bf16.msra.mxu0 0
        %2003 = vmatprep.subr.bf16.mxu0 0
        %2004 = vmatpush1.bf16.msra.mxu0 0
        %2005 = vmatprep.subr.bf16.mxu0 0
        %2006 = vmatpush1.bf16.msra.mxu0 0
        %2007 = vmatprep.subr.bf16.mxu0 0
        %2008 = vmatpush1.bf16.msra.mxu0 0
        %2009 = vmatprep.subr.bf16.mxu0 0
        %2010 = vmatpush1.bf16.msra.mxu0 0
        %2011 = vmatprep.mubr.bf16.mxu0 0
        %2012 = vmatmul.mubr.bf16.gmra.mrb[0].mxu0 %v1813
        %v2013 = vpop.f32.mrb[0].mxu0
        %v2014 = vadd.f32 %v1607, %v2013
        %v2015 = vpop.f32.mrb[0].mxu0
        %v2016 = vadd.f32 %v1611, %v2015
        %v2017 = vpop.f32.mrb[0].mxu0
        %v2018 = vpop.f32.mrb[0].mxu0
        %2019 = vdwg.mxu0
        %2020 = vmatprep.subr.bf16.mxu0 %v1759
        %2021 = vmatpush1.bf16.msra.mxu0 %v1758
        %2022 = vmatprep.subr.bf16.mxu0 %v1775
        %2023 = vmatpush1.bf16.msra.mxu0 %v1774
        %2024 = vmatprep.subr.bf16.mxu0 0
        %2025 = vmatpush1.bf16.msra.mxu0 0
        %2026 = vmatprep.subr.bf16.mxu0 0
        %2027 = vmatpush1.bf16.msra.mxu0 0
        %2028 = vmatprep.subr.bf16.mxu0 0
        %2029 = vmatpush1.bf16.msra.mxu0 0
        %2030 = vmatprep.subr.bf16.mxu0 0
        %2031 = vmatpush1.bf16.msra.mxu0 0
        %2032 = vmatprep.subr.bf16.mxu0 0
        %2033 = vmatpush1.bf16.msra.mxu0 0
        %2034 = vmatprep.subr.bf16.mxu0 0
        %2035 = vmatpush1.bf16.msra.mxu0 0
        %2036 = vmatprep.subr.bf16.mxu0 0
        %2037 = vmatpush1.bf16.msra.mxu0 0
        %2038 = vmatprep.subr.bf16.mxu0 0
        %2039 = vmatpush1.bf16.msra.mxu0 0
        %2040 = vmatprep.subr.bf16.mxu0 0
        %2041 = vmatpush1.bf16.msra.mxu0 0
        %2042 = vmatprep.subr.bf16.mxu0 0
        %2043 = vmatpush1.bf16.msra.mxu0 0
        %2044 = vmatprep.subr.bf16.mxu0 0
        %2045 = vmatpush1.bf16.msra.mxu0 0
        %2046 = vmatprep.subr.bf16.mxu0 0
        %2047 = vmatpush1.bf16.msra.mxu0 0
        %2048 = vmatprep.subr.bf16.mxu0 0
        %2049 = vmatpush1.bf16.msra.mxu0 0
        %2050 = vmatprep.subr.bf16.mxu0 0
        %2051 = vmatpush1.bf16.msra.mxu0 0
        %2052 = vmatprep.mubr.bf16.mxu0 0
        %2053 = vmatmul.mubr.bf16.gmra.mrb[0].mxu0 %v1813
        %v2054 = vpop.f32.mrb[0].mxu0
        %v2055 = vadd.f32 %v1615, %v2054
        %v2056 = vpop.f32.mrb[0].mxu0
        %v2057 = vadd.f32 %v1619, %v2056
        %v2058 = vpop.f32.mrb[0].mxu0
        %v2059 = vpop.f32.mrb[0].mxu0
        %2060 = vdwg.mxu0
        %2061 = vmatprep.subr.bf16.mxu0 %v1761
        %2062 = vmatpush1.bf16.msra.mxu0 %v1760
        %2063 = vmatprep.subr.bf16.mxu0 %v1777
        %2064 = vmatpush1.bf16.msra.mxu0 %v1776
        %2065 = vmatprep.subr.bf16.mxu0 0
        %2066 = vmatpush1.bf16.msra.mxu0 0
        %2067 = vmatprep.subr.bf16.mxu0 0
        %2068 = vmatpush1.bf16.msra.mxu0 0
        %2069 = vmatprep.subr.bf16.mxu0 0
        %2070 = vmatpush1.bf16.msra.mxu0 0
        %2071 = vmatprep.subr.bf16.mxu0 0
        %2072 = vmatpush1.bf16.msra.mxu0 0
        %2073 = vmatprep.subr.bf16.mxu0 0
        %2074 = vmatpush1.bf16.msra.mxu0 0
        %2075 = vmatprep.subr.bf16.mxu0 0
        %2076 = vmatpush1.bf16.msra.mxu0 0
        %2077 = vmatprep.subr.bf16.mxu0 0
        %2078 = vmatpush1.bf16.msra.mxu0 0
        %2079 = vmatprep.subr.bf16.mxu0 0
        %2080 = vmatpush1.bf16.msra.mxu0 0
        %2081 = vmatprep.subr.bf16.mxu0 0
        %2082 = vmatpush1.bf16.msra.mxu0 0
        %2083 = vmatprep.subr.bf16.mxu0 0
        %2084 = vmatpush1.bf16.msra.mxu0 0
        %2085 = vmatprep.subr.bf16.mxu0 0
        %2086 = vmatpush1.bf16.msra.mxu0 0
        %2087 = vmatprep.subr.bf16.mxu0 0
        %2088 = vmatpush1.bf16.msra.mxu0 0
        %2089 = vmatprep.subr.bf16.mxu0 0
        %2090 = vmatpush1.bf16.msra.mxu0 0
        %2091 = vmatprep.subr.bf16.mxu0 0
        %2092 = vmatpush1.bf16.msra.mxu0 0
        %2093 = vmatprep.mubr.bf16.mxu0 0
        %2094 = vmatmul.mubr.bf16.gmra.mrb[0].mxu0 %v1813
        %v2095 = vpop.f32.mrb[0].mxu0
        %v2096 = vadd.f32 %v1623, %v2095
        %v2097 = vpop.f32.mrb[0].mxu0
        %v2098 = vadd.f32 %v1627, %v2097
        %v2099 = vpop.f32.mrb[0].mxu0
        %v2100 = vpop.f32.mrb[0].mxu0
        %2101 = vdwg.mxu0
        %2102 = vmatprep.subr.bf16.mxu0 %v1763
        %2103 = vmatpush1.bf16.msra.mxu0 %v1762
        %2104 = vmatprep.subr.bf16.mxu0 %v1779
        %2105 = vmatpush1.bf16.msra.mxu0 %v1778
        %2106 = vmatprep.subr.bf16.mxu0 0
        %2107 = vmatpush1.bf16.msra.mxu0 0
        %2108 = vmatprep.subr.bf16.mxu0 0
        %2109 = vmatpush1.bf16.msra.mxu0 0
        %2110 = vmatprep.subr.bf16.mxu0 0
        %2111 = vmatpush1.bf16.msra.mxu0 0
        %2112 = vmatprep.subr.bf16.mxu0 0
        %2113 = vmatpush1.bf16.msra.mxu0 0
        %2114 = vmatprep.subr.bf16.mxu0 0
        %2115 = vmatpush1.bf16.msra.mxu0 0
        %2116 = vmatprep.subr.bf16.mxu0 0
        %2117 = vmatpush1.bf16.msra.mxu0 0
        %2118 = vmatprep.subr.bf16.mxu0 0
        %2119 = vmatpush1.bf16.msra.mxu0 0
        %2120 = vmatprep.subr.bf16.mxu0 0
        %2121 = vmatpush1.bf16.msra.mxu0 0
        %2122 = vmatprep.subr.bf16.mxu0 0
        %2123 = vmatpush1.bf16.msra.mxu0 0
        %2124 = vmatprep.subr.bf16.mxu0 0
        %2125 = vmatpush1.bf16.msra.mxu0 0
        %2126 = vmatprep.subr.bf16.mxu0 0
        %2127 = vmatpush1.bf16.msra.mxu0 0
        %2128 = vmatprep.subr.bf16.mxu0 0
        %2129 = vmatpush1.bf16.msra.mxu0 0
        %2130 = vmatprep.subr.bf16.mxu0 0
        %2131 = vmatpush1.bf16.msra.mxu0 0
        %2132 = vmatprep.subr.bf16.mxu0 0
        %2133 = vmatpush1.bf16.msra.mxu0 0
        %2134 = vmatprep.mubr.bf16.mxu0 0
        %2135 = vmatmul.mubr.bf16.gmra.mrb[0].mxu0 %v1813
        %v2136 = vpop.f32.mrb[0].mxu0
        %v2137 = vadd.f32 %v1631, %v2136
        %v2138 = vpop.f32.mrb[0].mxu0
        %v2139 = vadd.f32 %v1635, %v2138
        %v2140 = vpop.f32.mrb[0].mxu0
        %v2141 = vpop.f32.mrb[0].mxu0
        %2142 = vdwg.mxu0
        %v2143 = vmax.f32 %v1850, 0.0
        %v2144 = vmax.f32 %v1852, 0.0
        %v2145 = vmax.f32 %v1891, 0.0
        %v2146 = vmax.f32 %v1893, 0.0
        %v2147 = vmax.f32 %v1932, 0.0
        %v2148 = vmax.f32 %v1934, 0.0
        %v2149 = vmax.f32 %v1973, 0.0
        %v2150 = vmax.f32 %v1975, 0.0
        %v2151 = vmax.f32 %v2014, 0.0
        %v2152 = vmax.f32 %v2016, 0.0
        %v2153 = vmax.f32 %v2055, 0.0
        %v2154 = vmax.f32 %v2057, 0.0
        %v2155 = vmax.f32 %v2096, 0.0
        %v2156 = vmax.f32 %v2098, 0.0
        %v2157 = vmax.f32 %v2137, 0.0
        %v2158 = vmax.f32 %v2139, 0.0
        %v2159 = vpack.c.bf16 %v2143, %v2143
        %v2160 = vpack.c.bf16 %v2144, %v2144
        %v2161 = vpack.c.bf16 %v2145, %v2145
        %v2162 = vpack.c.bf16 %v2146, %v2146
        %v2163 = vpack.c.bf16 %v2147, %v2147
        %v2164 = vpack.c.bf16 %v2148, %v2148
        %v2165 = vpack.c.bf16 %v2149, %v2149
        %v2166 = vpack.c.bf16 %v2150, %v2150
        %v2167 = vpack.c.bf16 %v2151, %v2151
        %v2168 = vpack.c.bf16 %v2152, %v2152
        %v2169 = vpack.c.bf16 %v2153, %v2153
        %v2170 = vpack.c.bf16 %v2154, %v2154
        %v2171 = vpack.c.bf16 %v2155, %v2155
        %v2172 = vpack.c.bf16 %v2156, %v2156
        %v2173 = vpack.c.bf16 %v2157, %v2157
        %v2174 = vpack.c.bf16 %v2158, %v2158
        %v2175 = vld [vmem:[%s554] sm:$0xf]
        %v2176 = vld [vmem:[%s554 + $0x4] sm:$0xf]
        %v2177 = vld [vmem:[%s554 + $0x8] sm:$0xf]
        %v2178 = vld [vmem:[%s554 + $0xc] sm:$0xf]
        %v2179 = vld [vmem:[%s554 + $0x10] sm:$0xf]
        %v2180 = vld [vmem:[%s554 + $0x14] sm:$0xf]
        %v2181 = vld [vmem:[%s554 + $0x18] sm:$0xf]
        %v2182 = vld [vmem:[%s554 + $0x1c] sm:$0xf]
        %v2183 = vld [vmem:[%s554 + $0x20] sm:$0xf]
        %v2184 = vld [vmem:[%s554 + $0x24] sm:$0xf]
        %v2185 = vld [vmem:[%s554 + $0x28] sm:$0xf]
        %v2186 = vld [vmem:[%s554 + $0x2c] sm:$0xf]
        %v2187 = vld [vmem:[%s554 + $0x30] sm:$0xf]
        %v2188 = vld [vmem:[%s554 + $0x34] sm:$0xf]
        %v2189 = vld [vmem:[%s554 + $0x38] sm:$0xf]
        %v2190 = vld [vmem:[%s554 + $0x3c] sm:$0xf]
        %v2191 = vld [vmem:[%s554 + $0x40] sm:$0xf]
        %v2192 = vld [vmem:[%s554 + $0x44] sm:$0xf]
        %v2193 = vld [vmem:[%s554 + $0x48] sm:$0xf]
        %v2194 = vld [vmem:[%s554 + $0x4c] sm:$0xf]
        %v2195 = vld [vmem:[%s554 + $0x50] sm:$0xf]
        %v2196 = vld [vmem:[%s554 + $0x54] sm:$0xf]
        %v2197 = vld [vmem:[%s554 + $0x58] sm:$0xf]
        %v2198 = vld [vmem:[%s554 + $0x5c] sm:$0xf]
        %v2199 = vld [vmem:[%s554 + $0x60] sm:$0xf]
        %v2200 = vld [vmem:[%s554 + $0x64] sm:$0xf]
        %v2201 = vld [vmem:[%s554 + $0x68] sm:$0xf]
        %v2202 = vld [vmem:[%s554 + $0x6c] sm:$0xf]
        %v2203 = vld [vmem:[%s554 + $0x70] sm:$0xf]
        %v2204 = vld [vmem:[%s554 + $0x74] sm:$0xf]
        %v2205 = vld [vmem:[%s554 + $0x78] sm:$0xf]
        %v2206 = vld [vmem:[%s554 + $0x7c] sm:$0xf]
        %v2207 = vld [vmem:[%s554 + $0x80] sm:$0xf]
        %v2208 = vld [vmem:[%s554 + $0x84] sm:$0xf]
        %v2209 = vld [vmem:[%s554 + $0x88] sm:$0xf]
        %v2210 = vld [vmem:[%s554 + $0x8c] sm:$0xf]
        %v2211 = vld [vmem:[%s554 + $0x90] sm:$0xf]
        %v2212 = vld [vmem:[%s554 + $0x94] sm:$0xf]
        %v2213 = vld [vmem:[%s554 + $0x98] sm:$0xf]
        %v2214 = vld [vmem:[%s554 + $0x9c] sm:$0xf]
        %v2215 = vld [vmem:[%s554 + $0xa0] sm:$0xf]
        %v2216 = vld [vmem:[%s554 + $0xa4] sm:$0xf]
        %v2217 = vld [vmem:[%s554 + $0xa8] sm:$0xf]
        %v2218 = vld [vmem:[%s554 + $0xac] sm:$0xf]
        %v2219 = vld [vmem:[%s554 + $0xb0] sm:$0xf]
        %v2220 = vld [vmem:[%s554 + $0xb4] sm:$0xf]
        %v2221 = vld [vmem:[%s554 + $0xb8] sm:$0xf]
        %v2222 = vld [vmem:[%s554 + $0xbc] sm:$0xf]
        %v2223 = vld [vmem:[%s554 + $0xc0] sm:$0xf]
        %v2224 = vld [vmem:[%s554 + $0xc4] sm:$0xf]
        %v2225 = vld [vmem:[%s554 + $0xc8] sm:$0xf]
        %v2226 = vld [vmem:[%s554 + $0xcc] sm:$0xf]
        %v2227 = vld [vmem:[%s554 + $0xd0] sm:$0xf]
        %v2228 = vld [vmem:[%s554 + $0xd4] sm:$0xf]
        %v2229 = vld [vmem:[%s554 + $0xd8] sm:$0xf]
        %v2230 = vld [vmem:[%s554 + $0xdc] sm:$0xf]
        %v2231 = vld [vmem:[%s554 + $0xe0] sm:$0xf]
        %v2232 = vld [vmem:[%s554 + $0xe4] sm:$0xf]
        %v2233 = vld [vmem:[%s554 + $0xe8] sm:$0xf]
        %v2234 = vld [vmem:[%s554 + $0xec] sm:$0xf]
        %v2235 = vld [vmem:[%s554 + $0xf0] sm:$0xf]
        %v2236 = vld [vmem:[%s554 + $0xf4] sm:$0xf]
        %v2237 = vld [vmem:[%s554 + $0xf8] sm:$0xf]
        %v2238 = vld [vmem:[%s554 + $0xfc] sm:$0xf]
        %v2239 = vld [vmem:[%s554 + $0x100] sm:$0xf]
        %v2240 = vld [vmem:[%s554 + $0x104] sm:$0xf]
        %v2241 = vld [vmem:[%s554 + $0x108] sm:$0xf]
        %v2242 = vld [vmem:[%s554 + $0x10c] sm:$0xf]
        %v2243 = vld [vmem:[%s554 + $0x110] sm:$0xf]
        %v2244 = vld [vmem:[%s554 + $0x114] sm:$0xf]
        %v2245 = vld [vmem:[%s554 + $0x118] sm:$0xf]
        %v2246 = vld [vmem:[%s554 + $0x11c] sm:$0xf]
        %v2247 = vld [vmem:[%s554 + $0x120] sm:$0xf]
        %v2248 = vld [vmem:[%s554 + $0x124] sm:$0xf]
        %v2249 = vld [vmem:[%s554 + $0x128] sm:$0xf]
        %v2250 = vld [vmem:[%s554 + $0x12c] sm:$0xf]
        %v2251 = vld [vmem:[%s554 + $0x130] sm:$0xf]
        %v2252 = vld [vmem:[%s554 + $0x134] sm:$0xf]
        %v2253 = vld [vmem:[%s554 + $0x138] sm:$0xf]
        %v2254 = vld [vmem:[%s554 + $0x13c] sm:$0xf]
        %v2255 = vld [vmem:[%s554 + $0x140] sm:$0xf]
        %v2256 = vld [vmem:[%s554 + $0x144] sm:$0xf]
        %v2257 = vld [vmem:[%s554 + $0x148] sm:$0xf]
        %v2258 = vld [vmem:[%s554 + $0x14c] sm:$0xf]
        %v2259 = vld [vmem:[%s554 + $0x150] sm:$0xf]
        %v2260 = vld [vmem:[%s554 + $0x154] sm:$0xf]
        %v2261 = vld [vmem:[%s554 + $0x158] sm:$0xf]
        %v2262 = vld [vmem:[%s554 + $0x15c] sm:$0xf]
        %v2263 = vld [vmem:[%s554 + $0x160] sm:$0xf]
        %v2264 = vld [vmem:[%s554 + $0x164] sm:$0xf]
        %v2265 = vld [vmem:[%s554 + $0x168] sm:$0xf]
        %v2266 = vld [vmem:[%s554 + $0x16c] sm:$0xf]
        %v2267 = vld [vmem:[%s554 + $0x170] sm:$0xf]
        %v2268 = vld [vmem:[%s554 + $0x174] sm:$0xf]
        %v2269 = vld [vmem:[%s554 + $0x178] sm:$0xf]
        %v2270 = vld [vmem:[%s554 + $0x17c] sm:$0xf]
        %v2271 = vld [vmem:[%s554 + $0x180] sm:$0xf]
        %v2272 = vld [vmem:[%s554 + $0x184] sm:$0xf]
        %v2273 = vld [vmem:[%s554 + $0x188] sm:$0xf]
        %v2274 = vld [vmem:[%s554 + $0x18c] sm:$0xf]
        %v2275 = vld [vmem:[%s554 + $0x190] sm:$0xf]
        %v2276 = vld [vmem:[%s554 + $0x194] sm:$0xf]
        %v2277 = vld [vmem:[%s554 + $0x198] sm:$0xf]
        %v2278 = vld [vmem:[%s554 + $0x19c] sm:$0xf]
        %v2279 = vld [vmem:[%s554 + $0x1a0] sm:$0xf]
        %v2280 = vld [vmem:[%s554 + $0x1a4] sm:$0xf]
        %v2281 = vld [vmem:[%s554 + $0x1a8] sm:$0xf]
        %v2282 = vld [vmem:[%s554 + $0x1ac] sm:$0xf]
        %v2283 = vld [vmem:[%s554 + $0x1b0] sm:$0xf]
        %v2284 = vld [vmem:[%s554 + $0x1b4] sm:$0xf]
        %v2285 = vld [vmem:[%s554 + $0x1b8] sm:$0xf]
        %v2286 = vld [vmem:[%s554 + $0x1bc] sm:$0xf]
        %v2287 = vld [vmem:[%s554 + $0x1c0] sm:$0xf]
        %v2288 = vld [vmem:[%s554 + $0x1c4] sm:$0xf]
        %v2289 = vld [vmem:[%s554 + $0x1c8] sm:$0xf]
        %v2290 = vld [vmem:[%s554 + $0x1cc] sm:$0xf]
        %v2291 = vld [vmem:[%s554 + $0x1d0] sm:$0xf]
        %v2292 = vld [vmem:[%s554 + $0x1d4] sm:$0xf]
        %v2293 = vld [vmem:[%s554 + $0x1d8] sm:$0xf]
        %v2294 = vld [vmem:[%s554 + $0x1dc] sm:$0xf]
        %v2295 = vld [vmem:[%s554 + $0x1e0] sm:$0xf]
        %v2296 = vld [vmem:[%s554 + $0x1e4] sm:$0xf]
        %v2297 = vld [vmem:[%s554 + $0x1e8] sm:$0xf]
        %v2298 = vld [vmem:[%s554 + $0x1ec] sm:$0xf]
        %v2299 = vld [vmem:[%s554 + $0x1f0] sm:$0xf]
        %v2300 = vld [vmem:[%s554 + $0x1f4] sm:$0xf]
        %v2301 = vld [vmem:[%s554 + $0x1f8] sm:$0xf]
        %v2302 = vld [vmem:[%s554 + $0x1fc] sm:$0xf]
        %v2303 = vld [vmem:[%s554 + $0x200] sm:$0xf]
        %v2304 = vld [vmem:[%s554 + $0x204] sm:$0xf]
        %v2305 = vld [vmem:[%s554 + $0x208] sm:$0xf]
        %v2306 = vld [vmem:[%s554 + $0x20c] sm:$0xf]
        %v2307 = vld [vmem:[%s554 + $0x210] sm:$0xf]
        %v2308 = vld [vmem:[%s554 + $0x214] sm:$0xf]
        %v2309 = vld [vmem:[%s554 + $0x218] sm:$0xf]
        %v2310 = vld [vmem:[%s554 + $0x21c] sm:$0xf]
        %v2311 = vld [vmem:[%s554 + $0x220] sm:$0xf]
        %v2312 = vld [vmem:[%s554 + $0x224] sm:$0xf]
        %v2313 = vld [vmem:[%s554 + $0x228] sm:$0xf]
        %v2314 = vld [vmem:[%s554 + $0x22c] sm:$0xf]
        %v2315 = vld [vmem:[%s554 + $0x230] sm:$0xf]
        %v2316 = vld [vmem:[%s554 + $0x234] sm:$0xf]
        %v2317 = vld [vmem:[%s554 + $0x238] sm:$0xf]
        %v2318 = vld [vmem:[%s554 + $0x23c] sm:$0xf]
        %v2319 = vld [vmem:[%s554 + $0x240] sm:$0xf]
        %v2320 = vld [vmem:[%s554 + $0x244] sm:$0xf]
        %v2321 = vld [vmem:[%s554 + $0x248] sm:$0xf]
        %v2322 = vld [vmem:[%s554 + $0x24c] sm:$0xf]
        %v2323 = vld [vmem:[%s554 + $0x250] sm:$0xf]
        %v2324 = vld [vmem:[%s554 + $0x254] sm:$0xf]
        %v2325 = vld [vmem:[%s554 + $0x258] sm:$0xf]
        %v2326 = vld [vmem:[%s554 + $0x25c] sm:$0xf]
        %v2327 = vld [vmem:[%s554 + $0x260] sm:$0xf]
        %v2328 = vld [vmem:[%s554 + $0x264] sm:$0xf]
        %v2329 = vld [vmem:[%s554 + $0x268] sm:$0xf]
        %v2330 = vld [vmem:[%s554 + $0x26c] sm:$0xf]
        %v2331 = vld [vmem:[%s554 + $0x270] sm:$0xf]
        %v2332 = vld [vmem:[%s554 + $0x274] sm:$0xf]
        %v2333 = vld [vmem:[%s554 + $0x278] sm:$0xf]
        %v2334 = vld [vmem:[%s554 + $0x27c] sm:$0xf]
        %v2335 = vld [vmem:[%s554 + $0x280] sm:$0xf]
        %v2336 = vld [vmem:[%s554 + $0x284] sm:$0xf]
        %v2337 = vld [vmem:[%s554 + $0x288] sm:$0xf]
        %v2338 = vld [vmem:[%s554 + $0x28c] sm:$0xf]
        %v2339 = vld [vmem:[%s554 + $0x290] sm:$0xf]
        %v2340 = vld [vmem:[%s554 + $0x294] sm:$0xf]
        %v2341 = vld [vmem:[%s554 + $0x298] sm:$0xf]
        %v2342 = vld [vmem:[%s554 + $0x29c] sm:$0xf]
        %v2343 = vld [vmem:[%s554 + $0x2a0] sm:$0xf]
        %v2344 = vld [vmem:[%s554 + $0x2a4] sm:$0xf]
        %v2345 = vld [vmem:[%s554 + $0x2a8] sm:$0xf]
        %v2346 = vld [vmem:[%s554 + $0x2ac] sm:$0xf]
        %v2347 = vld [vmem:[%s554 + $0x2b0] sm:$0xf]
        %v2348 = vld [vmem:[%s554 + $0x2b4] sm:$0xf]
        %v2349 = vld [vmem:[%s554 + $0x2b8] sm:$0xf]
        %v2350 = vld [vmem:[%s554 + $0x2bc] sm:$0xf]
        %v2351 = vld [vmem:[%s554 + $0x2c0] sm:$0xf]
        %v2352 = vld [vmem:[%s554 + $0x2c4] sm:$0xf]
        %v2353 = vld [vmem:[%s554 + $0x2c8] sm:$0xf]
        %v2354 = vld [vmem:[%s554 + $0x2cc] sm:$0xf]
        %v2355 = vld [vmem:[%s554 + $0x2d0] sm:$0xf]
        %v2356 = vld [vmem:[%s554 + $0x2d4] sm:$0xf]
        %v2357 = vld [vmem:[%s554 + $0x2d8] sm:$0xf]
        %v2358 = vld [vmem:[%s554 + $0x2dc] sm:$0xf]
        %v2359 = vld [vmem:[%s554 + $0x2e0] sm:$0xf]
        %v2360 = vld [vmem:[%s554 + $0x2e4] sm:$0xf]
        %v2361 = vld [vmem:[%s554 + $0x2e8] sm:$0xf]
        %v2362 = vld [vmem:[%s554 + $0x2ec] sm:$0xf]
        %v2363 = vld [vmem:[%s554 + $0x2f0] sm:$0xf]
        %v2364 = vld [vmem:[%s554 + $0x2f4] sm:$0xf]
        %v2365 = vld [vmem:[%s554 + $0x2f8] sm:$0xf]
        %v2366 = vld [vmem:[%s554 + $0x2fc] sm:$0xf]
        %v2367 = vld [vmem:[%s554 + $0x300] sm:$0xf]
        %v2368 = vld [vmem:[%s554 + $0x304] sm:$0xf]
        %v2369 = vld [vmem:[%s554 + $0x308] sm:$0xf]
        %v2370 = vld [vmem:[%s554 + $0x30c] sm:$0xf]
        %v2371 = vld [vmem:[%s554 + $0x310] sm:$0xf]
        %v2372 = vld [vmem:[%s554 + $0x314] sm:$0xf]
        %v2373 = vld [vmem:[%s554 + $0x318] sm:$0xf]
        %v2374 = vld [vmem:[%s554 + $0x31c] sm:$0xf]
        %v2375 = vld [vmem:[%s554 + $0x320] sm:$0xf]
        %v2376 = vld [vmem:[%s554 + $0x324] sm:$0xf]
        %v2377 = vld [vmem:[%s554 + $0x328] sm:$0xf]
        %v2378 = vld [vmem:[%s554 + $0x32c] sm:$0xf]
        %v2379 = vld [vmem:[%s554 + $0x330] sm:$0xf]
        %v2380 = vld [vmem:[%s554 + $0x334] sm:$0xf]
        %v2381 = vld [vmem:[%s554 + $0x338] sm:$0xf]
        %v2382 = vld [vmem:[%s554 + $0x33c] sm:$0xf]
        %v2383 = vld [vmem:[%s554 + $0x340] sm:$0xf]
        %v2384 = vld [vmem:[%s554 + $0x344] sm:$0xf]
        %v2385 = vld [vmem:[%s554 + $0x348] sm:$0xf]
        %v2386 = vld [vmem:[%s554 + $0x34c] sm:$0xf]
        %v2387 = vld [vmem:[%s554 + $0x350] sm:$0xf]
        %v2388 = vld [vmem:[%s554 + $0x354] sm:$0xf]
        %v2389 = vld [vmem:[%s554 + $0x358] sm:$0xf]
        %v2390 = vld [vmem:[%s554 + $0x35c] sm:$0xf]
        %v2391 = vld [vmem:[%s554 + $0x360] sm:$0xf]
        %v2392 = vld [vmem:[%s554 + $0x364] sm:$0xf]
        %v2393 = vld [vmem:[%s554 + $0x368] sm:$0xf]
        %v2394 = vld [vmem:[%s554 + $0x36c] sm:$0xf]
        %v2395 = vld [vmem:[%s554 + $0x370] sm:$0xf]
        %v2396 = vld [vmem:[%s554 + $0x374] sm:$0xf]
        %v2397 = vld [vmem:[%s554 + $0x378] sm:$0xf]
        %v2398 = vld [vmem:[%s554 + $0x37c] sm:$0xf]
        %v2399 = vld [vmem:[%s554 + $0x380] sm:$0xf]
        %v2400 = vld [vmem:[%s554 + $0x384] sm:$0xf]
        %v2401 = vld [vmem:[%s554 + $0x388] sm:$0xf]
        %v2402 = vld [vmem:[%s554 + $0x38c] sm:$0xf]
        %v2403 = vld [vmem:[%s554 + $0x390] sm:$0xf]
        %v2404 = vld [vmem:[%s554 + $0x394] sm:$0xf]
        %v2405 = vld [vmem:[%s554 + $0x398] sm:$0xf]
        %v2406 = vld [vmem:[%s554 + $0x39c] sm:$0xf]
        %v2407 = vld [vmem:[%s554 + $0x3a0] sm:$0xf]
        %v2408 = vld [vmem:[%s554 + $0x3a4] sm:$0xf]
        %v2409 = vld [vmem:[%s554 + $0x3a8] sm:$0xf]
        %v2410 = vld [vmem:[%s554 + $0x3ac] sm:$0xf]
        %v2411 = vld [vmem:[%s554 + $0x3b0] sm:$0xf]
        %v2412 = vld [vmem:[%s554 + $0x3b4] sm:$0xf]
        %v2413 = vld [vmem:[%s554 + $0x3b8] sm:$0xf]
        %v2414 = vld [vmem:[%s554 + $0x3bc] sm:$0xf]
        %v2415 = vld [vmem:[%s554 + $0x3c0] sm:$0xf]
        %v2416 = vld [vmem:[%s554 + $0x3c4] sm:$0xf]
        %v2417 = vld [vmem:[%s554 + $0x3c8] sm:$0xf]
        %v2418 = vld [vmem:[%s554 + $0x3cc] sm:$0xf]
        %v2419 = vld [vmem:[%s554 + $0x3d0] sm:$0xf]
        %v2420 = vld [vmem:[%s554 + $0x3d4] sm:$0xf]
        %v2421 = vld [vmem:[%s554 + $0x3d8] sm:$0xf]
        %v2422 = vld [vmem:[%s554 + $0x3dc] sm:$0xf]
        %v2423 = vld [vmem:[%s554 + $0x3e0] sm:$0xf]
        %v2424 = vld [vmem:[%s554 + $0x3e4] sm:$0xf]
        %v2425 = vld [vmem:[%s554 + $0x3e8] sm:$0xf]
        %v2426 = vld [vmem:[%s554 + $0x3ec] sm:$0xf]
        %v2427 = vld [vmem:[%s554 + $0x3f0] sm:$0xf]
        %v2428 = vld [vmem:[%s554 + $0x3f4] sm:$0xf]
        %v2429 = vld [vmem:[%s554 + $0x3f8] sm:$0xf]
        %v2430 = vld [vmem:[%s554 + $0x3fc] sm:$0xf]
        %s2431 = scalar_lea.vmem %s12, %s29
        %v2432 = vld [vmem:[%s2431] sm:$0x1]
        %v2434 = vlaneseq
        %v2435 = vshrl.u32 %v2434, 7
        %v2436 = vsub.s32 0, %v2435
        %v2437 = vrot.slane %v2432, %v2436
        %v2695 = vunpack.c.l.b16 %v2175
        %v2696 = vunpack.c.l.b16 %v2176
        %v2697 = vunpack.c.l.b16 %v2177
        %v2698 = vunpack.c.l.b16 %v2178
        %v2699 = vunpack.c.l.b16 %v2179
        %v2700 = vunpack.c.l.b16 %v2180
        %v2701 = vunpack.c.l.b16 %v2181
        %v2702 = vunpack.c.l.b16 %v2182
        %v2703 = vunpack.c.l.b16 %v2183
        %v2704 = vunpack.c.l.b16 %v2184
        %v2705 = vunpack.c.l.b16 %v2185
        %v2706 = vunpack.c.l.b16 %v2186
        %v2707 = vunpack.c.l.b16 %v2187
        %v2708 = vunpack.c.l.b16 %v2188
        %v2709 = vunpack.c.l.b16 %v2189
        %v2710 = vunpack.c.l.b16 %v2190
        %v2711 = vunpack.c.l.b16 %v2191
        %v2712 = vunpack.c.l.b16 %v2192
        %v2713 = vunpack.c.l.b16 %v2193
        %v2714 = vunpack.c.l.b16 %v2194
        %v2715 = vunpack.c.l.b16 %v2195
        %v2716 = vunpack.c.l.b16 %v2196
        %v2717 = vunpack.c.l.b16 %v2197
        %v2718 = vunpack.c.l.b16 %v2198
        %v2719 = vunpack.c.l.b16 %v2199
        %v2720 = vunpack.c.l.b16 %v2200
        %v2721 = vunpack.c.l.b16 %v2201
        %v2722 = vunpack.c.l.b16 %v2202
        %v2723 = vunpack.c.l.b16 %v2203
        %v2724 = vunpack.c.l.b16 %v2204
        %v2725 = vunpack.c.l.b16 %v2205
        %v2726 = vunpack.c.l.b16 %v2206
        %v2727 = vunpack.c.l.b16 %v2207
        %v2728 = vunpack.c.l.b16 %v2208
        %v2729 = vunpack.c.l.b16 %v2209
        %v2730 = vunpack.c.l.b16 %v2210
        %v2731 = vunpack.c.l.b16 %v2211
        %v2732 = vunpack.c.l.b16 %v2212
        %v2733 = vunpack.c.l.b16 %v2213
        %v2734 = vunpack.c.l.b16 %v2214
        %v2735 = vunpack.c.l.b16 %v2215
        %v2736 = vunpack.c.l.b16 %v2216
        %v2737 = vunpack.c.l.b16 %v2217
        %v2738 = vunpack.c.l.b16 %v2218
        %v2739 = vunpack.c.l.b16 %v2219
        %v2740 = vunpack.c.l.b16 %v2220
        %v2741 = vunpack.c.l.b16 %v2221
        %v2742 = vunpack.c.l.b16 %v2222
        %v2743 = vunpack.c.l.b16 %v2223
        %v2744 = vunpack.c.l.b16 %v2224
        %v2745 = vunpack.c.l.b16 %v2225
        %v2746 = vunpack.c.l.b16 %v2226
        %v2747 = vunpack.c.l.b16 %v2227
        %v2748 = vunpack.c.l.b16 %v2228
        %v2749 = vunpack.c.l.b16 %v2229
        %v2750 = vunpack.c.l.b16 %v2230
        %v2751 = vunpack.c.l.b16 %v2231
        %v2752 = vunpack.c.l.b16 %v2232
        %v2753 = vunpack.c.l.b16 %v2233
        %v2754 = vunpack.c.l.b16 %v2234
        %v2755 = vunpack.c.l.b16 %v2235
        %v2756 = vunpack.c.l.b16 %v2236
        %v2757 = vunpack.c.l.b16 %v2237
        %v2758 = vunpack.c.l.b16 %v2238
        %v2759 = vunpack.c.l.b16 %v2239
        %v2760 = vunpack.c.l.b16 %v2240
        %v2761 = vunpack.c.l.b16 %v2241
        %v2762 = vunpack.c.l.b16 %v2242
        %v2763 = vunpack.c.l.b16 %v2243
        %v2764 = vunpack.c.l.b16 %v2244
        %v2765 = vunpack.c.l.b16 %v2245
        %v2766 = vunpack.c.l.b16 %v2246
        %v2767 = vunpack.c.l.b16 %v2247
        %v2768 = vunpack.c.l.b16 %v2248
        %v2769 = vunpack.c.l.b16 %v2249
        %v2770 = vunpack.c.l.b16 %v2250
        %v2771 = vunpack.c.l.b16 %v2251
        %v2772 = vunpack.c.l.b16 %v2252
        %v2773 = vunpack.c.l.b16 %v2253
        %v2774 = vunpack.c.l.b16 %v2254
        %v2775 = vunpack.c.l.b16 %v2255
        %v2776 = vunpack.c.l.b16 %v2256
        %v2777 = vunpack.c.l.b16 %v2257
        %v2778 = vunpack.c.l.b16 %v2258
        %v2779 = vunpack.c.l.b16 %v2259
        %v2780 = vunpack.c.l.b16 %v2260
        %v2781 = vunpack.c.l.b16 %v2261
        %v2782 = vunpack.c.l.b16 %v2262
        %v2783 = vunpack.c.l.b16 %v2263
        %v2784 = vunpack.c.l.b16 %v2264
        %v2785 = vunpack.c.l.b16 %v2265
        %v2786 = vunpack.c.l.b16 %v2266
        %v2787 = vunpack.c.l.b16 %v2267
        %v2788 = vunpack.c.l.b16 %v2268
        %v2789 = vunpack.c.l.b16 %v2269
        %v2790 = vunpack.c.l.b16 %v2270
        %v2791 = vunpack.c.l.b16 %v2271
        %v2792 = vunpack.c.l.b16 %v2272
        %v2793 = vunpack.c.l.b16 %v2273
        %v2794 = vunpack.c.l.b16 %v2274
        %v2795 = vunpack.c.l.b16 %v2275
        %v2796 = vunpack.c.l.b16 %v2276
        %v2797 = vunpack.c.l.b16 %v2277
        %v2798 = vunpack.c.l.b16 %v2278
        %v2799 = vunpack.c.l.b16 %v2279
        %v2800 = vunpack.c.l.b16 %v2280
        %v2801 = vunpack.c.l.b16 %v2281
        %v2802 = vunpack.c.l.b16 %v2282
        %v2803 = vunpack.c.l.b16 %v2283
        %v2804 = vunpack.c.l.b16 %v2284
        %v2805 = vunpack.c.l.b16 %v2285
        %v2806 = vunpack.c.l.b16 %v2286
        %v2807 = vunpack.c.l.b16 %v2287
        %v2808 = vunpack.c.l.b16 %v2288
        %v2809 = vunpack.c.l.b16 %v2289
        %v2810 = vunpack.c.l.b16 %v2290
        %v2811 = vunpack.c.l.b16 %v2291
        %v2812 = vunpack.c.l.b16 %v2292
        %v2813 = vunpack.c.l.b16 %v2293
        %v2814 = vunpack.c.l.b16 %v2294
        %v2815 = vunpack.c.l.b16 %v2295
        %v2816 = vunpack.c.l.b16 %v2296
        %v2817 = vunpack.c.l.b16 %v2297
        %v2818 = vunpack.c.l.b16 %v2298
        %v2819 = vunpack.c.l.b16 %v2299
        %v2820 = vunpack.c.l.b16 %v2300
        %v2821 = vunpack.c.l.b16 %v2301
        %v2822 = vunpack.c.l.b16 %v2302
        %v2823 = vunpack.c.l.b16 %v2303
        %v2824 = vunpack.c.l.b16 %v2304
        %v2825 = vunpack.c.l.b16 %v2305
        %v2826 = vunpack.c.l.b16 %v2306
        %v2827 = vunpack.c.l.b16 %v2307
        %v2828 = vunpack.c.l.b16 %v2308
        %v2829 = vunpack.c.l.b16 %v2309
        %v2830 = vunpack.c.l.b16 %v2310
        %v2831 = vunpack.c.l.b16 %v2311
        %v2832 = vunpack.c.l.b16 %v2312
        %v2833 = vunpack.c.l.b16 %v2313
        %v2834 = vunpack.c.l.b16 %v2314
        %v2835 = vunpack.c.l.b16 %v2315
        %v2836 = vunpack.c.l.b16 %v2316
        %v2837 = vunpack.c.l.b16 %v2317
        %v2838 = vunpack.c.l.b16 %v2318
        %v2839 = vunpack.c.l.b16 %v2319
        %v2840 = vunpack.c.l.b16 %v2320
        %v2841 = vunpack.c.l.b16 %v2321
        %v2842 = vunpack.c.l.b16 %v2322
        %v2843 = vunpack.c.l.b16 %v2323
        %v2844 = vunpack.c.l.b16 %v2324
        %v2845 = vunpack.c.l.b16 %v2325
        %v2846 = vunpack.c.l.b16 %v2326
        %v2847 = vunpack.c.l.b16 %v2327
        %v2848 = vunpack.c.l.b16 %v2328
        %v2849 = vunpack.c.l.b16 %v2329
        %v2850 = vunpack.c.l.b16 %v2330
        %v2851 = vunpack.c.l.b16 %v2331
        %v2852 = vunpack.c.l.b16 %v2332
        %v2853 = vunpack.c.l.b16 %v2333
        %v2854 = vunpack.c.l.b16 %v2334
        %v2855 = vunpack.c.l.b16 %v2335
        %v2856 = vunpack.c.l.b16 %v2336
        %v2857 = vunpack.c.l.b16 %v2337
        %v2858 = vunpack.c.l.b16 %v2338
        %v2859 = vunpack.c.l.b16 %v2339
        %v2860 = vunpack.c.l.b16 %v2340
        %v2861 = vunpack.c.l.b16 %v2341
        %v2862 = vunpack.c.l.b16 %v2342
        %v2863 = vunpack.c.l.b16 %v2343
        %v2864 = vunpack.c.l.b16 %v2344
        %v2865 = vunpack.c.l.b16 %v2345
        %v2866 = vunpack.c.l.b16 %v2346
        %v2867 = vunpack.c.l.b16 %v2347
        %v2868 = vunpack.c.l.b16 %v2348
        %v2869 = vunpack.c.l.b16 %v2349
        %v2870 = vunpack.c.l.b16 %v2350
        %v2871 = vunpack.c.l.b16 %v2351
        %v2872 = vunpack.c.l.b16 %v2352
        %v2873 = vunpack.c.l.b16 %v2353
        %v2874 = vunpack.c.l.b16 %v2354
        %v2875 = vunpack.c.l.b16 %v2355
        %v2876 = vunpack.c.l.b16 %v2356
        %v2877 = vunpack.c.l.b16 %v2357
        %v2878 = vunpack.c.l.b16 %v2358
        %v2879 = vunpack.c.l.b16 %v2359
        %v2880 = vunpack.c.l.b16 %v2360
        %v2881 = vunpack.c.l.b16 %v2361
        %v2882 = vunpack.c.l.b16 %v2362
        %v2883 = vunpack.c.l.b16 %v2363
        %v2884 = vunpack.c.l.b16 %v2364
        %v2885 = vunpack.c.l.b16 %v2365
        %v2886 = vunpack.c.l.b16 %v2366
        %v2887 = vunpack.c.l.b16 %v2367
        %v2888 = vunpack.c.l.b16 %v2368
        %v2889 = vunpack.c.l.b16 %v2369
        %v2890 = vunpack.c.l.b16 %v2370
        %v2891 = vunpack.c.l.b16 %v2371
        %v2892 = vunpack.c.l.b16 %v2372
        %v2893 = vunpack.c.l.b16 %v2373
        %v2894 = vunpack.c.l.b16 %v2374
        %v2895 = vunpack.c.l.b16 %v2375
        %v2896 = vunpack.c.l.b16 %v2376
        %v2897 = vunpack.c.l.b16 %v2377
        %v2898 = vunpack.c.l.b16 %v2378
        %v2899 = vunpack.c.l.b16 %v2379
        %v2900 = vunpack.c.l.b16 %v2380
        %v2901 = vunpack.c.l.b16 %v2381
        %v2902 = vunpack.c.l.b16 %v2382
        %v2903 = vunpack.c.l.b16 %v2383
        %v2904 = vunpack.c.l.b16 %v2384
        %v2905 = vunpack.c.l.b16 %v2385
        %v2906 = vunpack.c.l.b16 %v2386
        %v2907 = vunpack.c.l.b16 %v2387
        %v2908 = vunpack.c.l.b16 %v2388
        %v2909 = vunpack.c.l.b16 %v2389
        %v2910 = vunpack.c.l.b16 %v2390
        %v2911 = vunpack.c.l.b16 %v2391
        %v2912 = vunpack.c.l.b16 %v2392
        %v2913 = vunpack.c.l.b16 %v2393
        %v2914 = vunpack.c.l.b16 %v2394
        %v2915 = vunpack.c.l.b16 %v2395
        %v2916 = vunpack.c.l.b16 %v2396
        %v2917 = vunpack.c.l.b16 %v2397
        %v2918 = vunpack.c.l.b16 %v2398
        %v2919 = vunpack.c.l.b16 %v2399
        %v2920 = vunpack.c.l.b16 %v2400
        %v2921 = vunpack.c.l.b16 %v2401
        %v2922 = vunpack.c.l.b16 %v2402
        %v2923 = vunpack.c.l.b16 %v2403
        %v2924 = vunpack.c.l.b16 %v2404
        %v2925 = vunpack.c.l.b16 %v2405
        %v2926 = vunpack.c.l.b16 %v2406
        %v2927 = vunpack.c.l.b16 %v2407
        %v2928 = vunpack.c.l.b16 %v2408
        %v2929 = vunpack.c.l.b16 %v2409
        %v2930 = vunpack.c.l.b16 %v2410
        %v2931 = vunpack.c.l.b16 %v2411
        %v2932 = vunpack.c.l.b16 %v2412
        %v2933 = vunpack.c.l.b16 %v2413
        %v2934 = vunpack.c.l.b16 %v2414
        %v2935 = vunpack.c.l.b16 %v2415
        %v2936 = vunpack.c.l.b16 %v2416
        %v2937 = vunpack.c.l.b16 %v2417
        %v2938 = vunpack.c.l.b16 %v2418
        %v2939 = vunpack.c.l.b16 %v2419
        %v2940 = vunpack.c.l.b16 %v2420
        %v2941 = vunpack.c.l.b16 %v2421
        %v2942 = vunpack.c.l.b16 %v2422
        %v2943 = vunpack.c.l.b16 %v2423
        %v2944 = vunpack.c.l.b16 %v2424
        %v2945 = vunpack.c.l.b16 %v2425
        %v2946 = vunpack.c.l.b16 %v2426
        %v2947 = vunpack.c.l.b16 %v2427
        %v2948 = vunpack.c.l.b16 %v2428
        %v2949 = vunpack.c.l.b16 %v2429
        %v2950 = vunpack.c.l.b16 %v2430
        %v2951 = vpack.c.b16 %v2696, %v2695
        %v2952 = vpack.c.b16 %v2698, %v2697
        %v2953 = vpack.c.b16 %v2700, %v2699
        %v2954 = vpack.c.b16 %v2702, %v2701
        %v2955 = vpack.c.b16 %v2704, %v2703
        %v2956 = vpack.c.b16 %v2706, %v2705
        %v2957 = vpack.c.b16 %v2708, %v2707
        %v2958 = vpack.c.b16 %v2710, %v2709
        %v2959 = vpack.c.b16 %v2712, %v2711
        %v2960 = vpack.c.b16 %v2714, %v2713
        %v2961 = vpack.c.b16 %v2716, %v2715
        %v2962 = vpack.c.b16 %v2718, %v2717
        %v2963 = vpack.c.b16 %v2720, %v2719
        %v2964 = vpack.c.b16 %v2722, %v2721
        %v2965 = vpack.c.b16 %v2724, %v2723
        %v2966 = vpack.c.b16 %v2726, %v2725
        %v2967 = vpack.c.b16 %v2728, %v2727
        %v2968 = vpack.c.b16 %v2730, %v2729
        %v2969 = vpack.c.b16 %v2732, %v2731
        %v2970 = vpack.c.b16 %v2734, %v2733
        %v2971 = vpack.c.b16 %v2736, %v2735
        %v2972 = vpack.c.b16 %v2738, %v2737
        %v2973 = vpack.c.b16 %v2740, %v2739
        %v2974 = vpack.c.b16 %v2742, %v2741
        %v2975 = vpack.c.b16 %v2744, %v2743
        %v2976 = vpack.c.b16 %v2746, %v2745
        %v2977 = vpack.c.b16 %v2748, %v2747
        %v2978 = vpack.c.b16 %v2750, %v2749
        %v2979 = vpack.c.b16 %v2752, %v2751
        %v2980 = vpack.c.b16 %v2754, %v2753
        %v2981 = vpack.c.b16 %v2756, %v2755
        %v2982 = vpack.c.b16 %v2758, %v2757
        %v2983 = vpack.c.b16 %v2760, %v2759
        %v2984 = vpack.c.b16 %v2762, %v2761
        %v2985 = vpack.c.b16 %v2764, %v2763
        %v2986 = vpack.c.b16 %v2766, %v2765
        %v2987 = vpack.c.b16 %v2768, %v2767
        %v2988 = vpack.c.b16 %v2770, %v2769
        %v2989 = vpack.c.b16 %v2772, %v2771
        %v2990 = vpack.c.b16 %v2774, %v2773
        %v2991 = vpack.c.b16 %v2776, %v2775
        %v2992 = vpack.c.b16 %v2778, %v2777
        %v2993 = vpack.c.b16 %v2780, %v2779
        %v2994 = vpack.c.b16 %v2782, %v2781
        %v2995 = vpack.c.b16 %v2784, %v2783
        %v2996 = vpack.c.b16 %v2786, %v2785
        %v2997 = vpack.c.b16 %v2788, %v2787
        %v2998 = vpack.c.b16 %v2790, %v2789
        %v2999 = vpack.c.b16 %v2792, %v2791
        %v3000 = vpack.c.b16 %v2794, %v2793
        %v3001 = vpack.c.b16 %v2796, %v2795
        %v3002 = vpack.c.b16 %v2798, %v2797
        %v3003 = vpack.c.b16 %v2800, %v2799
        %v3004 = vpack.c.b16 %v2802, %v2801
        %v3005 = vpack.c.b16 %v2804, %v2803
        %v3006 = vpack.c.b16 %v2806, %v2805
        %v3007 = vpack.c.b16 %v2808, %v2807
        %v3008 = vpack.c.b16 %v2810, %v2809
        %v3009 = vpack.c.b16 %v2812, %v2811
        %v3010 = vpack.c.b16 %v2814, %v2813
        %v3011 = vpack.c.b16 %v2816, %v2815
        %v3012 = vpack.c.b16 %v2818, %v2817
        %v3013 = vpack.c.b16 %v2820, %v2819
        %v3014 = vpack.c.b16 %v2822, %v2821
        %v3015 = vpack.c.b16 %v2824, %v2823
        %v3016 = vpack.c.b16 %v2826, %v2825
        %v3017 = vpack.c.b16 %v2828, %v2827
        %v3018 = vpack.c.b16 %v2830, %v2829
        %v3019 = vpack.c.b16 %v2832, %v2831
        %v3020 = vpack.c.b16 %v2834, %v2833
        %v3021 = vpack.c.b16 %v2836, %v2835
        %v3022 = vpack.c.b16 %v2838, %v2837
        %v3023 = vpack.c.b16 %v2840, %v2839
        %v3024 = vpack.c.b16 %v2842, %v2841
        %v3025 = vpack.c.b16 %v2844, %v2843
        %v3026 = vpack.c.b16 %v2846, %v2845
        %v3027 = vpack.c.b16 %v2848, %v2847
        %v3028 = vpack.c.b16 %v2850, %v2849
        %v3029 = vpack.c.b16 %v2852, %v2851
        %v3030 = vpack.c.b16 %v2854, %v2853
        %v3031 = vpack.c.b16 %v2856, %v2855
        %v3032 = vpack.c.b16 %v2858, %v2857
        %v3033 = vpack.c.b16 %v2860, %v2859
        %v3034 = vpack.c.b16 %v2862, %v2861
        %v3035 = vpack.c.b16 %v2864, %v2863
        %v3036 = vpack.c.b16 %v2866, %v2865
        %v3037 = vpack.c.b16 %v2868, %v2867
        %v3038 = vpack.c.b16 %v2870, %v2869
        %v3039 = vpack.c.b16 %v2872, %v2871
        %v3040 = vpack.c.b16 %v2874, %v2873
        %v3041 = vpack.c.b16 %v2876, %v2875
        %v3042 = vpack.c.b16 %v2878, %v2877
        %v3043 = vpack.c.b16 %v2880, %v2879
        %v3044 = vpack.c.b16 %v2882, %v2881
        %v3045 = vpack.c.b16 %v2884, %v2883
        %v3046 = vpack.c.b16 %v2886, %v2885
        %v3047 = vpack.c.b16 %v2888, %v2887
        %v3048 = vpack.c.b16 %v2890, %v2889
        %v3049 = vpack.c.b16 %v2892, %v2891
        %v3050 = vpack.c.b16 %v2894, %v2893
        %v3051 = vpack.c.b16 %v2896, %v2895
        %v3052 = vpack.c.b16 %v2898, %v2897
        %v3053 = vpack.c.b16 %v2900, %v2899
        %v3054 = vpack.c.b16 %v2902, %v2901
        %v3055 = vpack.c.b16 %v2904, %v2903
        %v3056 = vpack.c.b16 %v2906, %v2905
        %v3057 = vpack.c.b16 %v2908, %v2907
        %v3058 = vpack.c.b16 %v2910, %v2909
        %v3059 = vpack.c.b16 %v2912, %v2911
        %v3060 = vpack.c.b16 %v2914, %v2913
        %v3061 = vpack.c.b16 %v2916, %v2915
        %v3062 = vpack.c.b16 %v2918, %v2917
        %v3063 = vpack.c.b16 %v2920, %v2919
        %v3064 = vpack.c.b16 %v2922, %v2921
        %v3065 = vpack.c.b16 %v2924, %v2923
        %v3066 = vpack.c.b16 %v2926, %v2925
        %v3067 = vpack.c.b16 %v2928, %v2927
        %v3068 = vpack.c.b16 %v2930, %v2929
        %v3069 = vpack.c.b16 %v2932, %v2931
        %v3070 = vpack.c.b16 %v2934, %v2933
        %v3071 = vpack.c.b16 %v2936, %v2935
        %v3072 = vpack.c.b16 %v2938, %v2937
        %v3073 = vpack.c.b16 %v2940, %v2939
        %v3074 = vpack.c.b16 %v2942, %v2941
        %v3075 = vpack.c.b16 %v2944, %v2943
        %v3076 = vpack.c.b16 %v2946, %v2945
        %v3077 = vpack.c.b16 %v2948, %v2947
        %v3078 = vpack.c.b16 %v2950, %v2949
        %3207 = vmatprep.subr.bf16.mxu0 0
        %3208 = vmatpush1.bf16.msra.mxu0 %v2951
        %3209 = vmatprep.subr.bf16.mxu0 0
        %3210 = vmatpush1.bf16.msra.mxu0 %v2952
        %3211 = vmatprep.subr.bf16.mxu0 0
        %3212 = vmatpush1.bf16.msra.mxu0 %v2953
        %3213 = vmatprep.subr.bf16.mxu0 0
        %3214 = vmatpush1.bf16.msra.mxu0 %v2954
        %3215 = vmatprep.subr.bf16.mxu0 0
        %3216 = vmatpush1.bf16.msra.mxu0 %v2955
        %3217 = vmatprep.subr.bf16.mxu0 0
        %3218 = vmatpush1.bf16.msra.mxu0 %v2956
        %3219 = vmatprep.subr.bf16.mxu0 0
        %3220 = vmatpush1.bf16.msra.mxu0 %v2957
        %3221 = vmatprep.subr.bf16.mxu0 0
        %3222 = vmatpush1.bf16.msra.mxu0 %v2958
        %3223 = vmatprep.subr.bf16.mxu0 0
        %3224 = vmatpush1.bf16.msra.mxu0 %v2959
        %3225 = vmatprep.subr.bf16.mxu0 0
        %3226 = vmatpush1.bf16.msra.mxu0 %v2960
        %3227 = vmatprep.subr.bf16.mxu0 0
        %3228 = vmatpush1.bf16.msra.mxu0 %v2961
        %3229 = vmatprep.subr.bf16.mxu0 0
        %3230 = vmatpush1.bf16.msra.mxu0 %v2962
        %3231 = vmatprep.subr.bf16.mxu0 0
        %3232 = vmatpush1.bf16.msra.mxu0 %v2963
        %3233 = vmatprep.subr.bf16.mxu0 0
        %3234 = vmatpush1.bf16.msra.mxu0 %v2964
        %3235 = vmatprep.subr.bf16.mxu0 0
        %3236 = vmatpush1.bf16.msra.mxu0 %v2965
        %3237 = vmatprep.subr.bf16.mxu0 0
        %3238 = vmatpush1.bf16.msra.mxu0 %v2966
        %3239 = vmatprep.mubr.bf16.mxu0 %v2160
        %3240 = vmatmul.mubr.bf16.gmra.mrb[0].mxu0 %v2159
        %v3241 = vpop.f32.mrb[0].mxu0
        %v3242 = vadd.f32 %v2437, %v3241
        %v3243 = vpop.f32.mrb[0].mxu0
        %v3244 = vpop.f32.mrb[0].mxu0
        %v3245 = vpop.f32.mrb[0].mxu0
        %3246 = vdwg.mxu0
        %3247 = vmatprep.subr.bf16.mxu0 0
        %3248 = vmatpush1.bf16.msra.mxu0 %v2967
        %3249 = vmatprep.subr.bf16.mxu0 0
        %3250 = vmatpush1.bf16.msra.mxu0 %v2968
        %3251 = vmatprep.subr.bf16.mxu0 0
        %3252 = vmatpush1.bf16.msra.mxu0 %v2969
        %3253 = vmatprep.subr.bf16.mxu0 0
        %3254 = vmatpush1.bf16.msra.mxu0 %v2970
        %3255 = vmatprep.subr.bf16.mxu0 0
        %3256 = vmatpush1.bf16.msra.mxu0 %v2971
        %3257 = vmatprep.subr.bf16.mxu0 0
        %3258 = vmatpush1.bf16.msra.mxu0 %v2972
        %3259 = vmatprep.subr.bf16.mxu0 0
        %3260 = vmatpush1.bf16.msra.mxu0 %v2973
        %3261 = vmatprep.subr.bf16.mxu0 0
        %3262 = vmatpush1.bf16.msra.mxu0 %v2974
        %3263 = vmatprep.subr.bf16.mxu0 0
        %3264 = vmatpush1.bf16.msra.mxu0 %v2975
        %3265 = vmatprep.subr.bf16.mxu0 0
        %3266 = vmatpush1.bf16.msra.mxu0 %v2976
        %3267 = vmatprep.subr.bf16.mxu0 0
        %3268 = vmatpush1.bf16.msra.mxu0 %v2977
        %3269 = vmatprep.subr.bf16.mxu0 0
        %3270 = vmatpush1.bf16.msra.mxu0 %v2978
        %3271 = vmatprep.subr.bf16.mxu0 0
        %3272 = vmatpush1.bf16.msra.mxu0 %v2979
        %3273 = vmatprep.subr.bf16.mxu0 0
        %3274 = vmatpush1.bf16.msra.mxu0 %v2980
        %3275 = vmatprep.subr.bf16.mxu0 0
        %3276 = vmatpush1.bf16.msra.mxu0 %v2981
        %3277 = vmatprep.subr.bf16.mxu0 0
        %3278 = vmatpush1.bf16.msra.mxu0 %v2982
        %3279 = vmatprep.mubr.bf16.mxu0 %v2162
        %3280 = vmatmul.mubr.bf16.gmra.mrb[0].mxu0 %v2161
        %v3281 = vpop.f32.mrb[0].mxu0
        %v3282 = vadd.f32 %v3242, %v3281
        %v3283 = vpop.f32.mrb[0].mxu0
        %v3284 = vpop.f32.mrb[0].mxu0
        %v3285 = vpop.f32.mrb[0].mxu0
        %3286 = vdwg.mxu0
        %3287 = vmatprep.subr.bf16.mxu0 0
        %3288 = vmatpush1.bf16.msra.mxu0 %v2983
        %3289 = vmatprep.subr.bf16.mxu0 0
        %3290 = vmatpush1.bf16.msra.mxu0 %v2984
        %3291 = vmatprep.subr.bf16.mxu0 0
        %3292 = vmatpush1.bf16.msra.mxu0 %v2985
        %3293 = vmatprep.subr.bf16.mxu0 0
        %3294 = vmatpush1.bf16.msra.mxu0 %v2986
        %3295 = vmatprep.subr.bf16.mxu0 0
        %3296 = vmatpush1.bf16.msra.mxu0 %v2987
        %3297 = vmatprep.subr.bf16.mxu0 0
        %3298 = vmatpush1.bf16.msra.mxu0 %v2988
        %3299 = vmatprep.subr.bf16.mxu0 0
        %3300 = vmatpush1.bf16.msra.mxu0 %v2989
        %3301 = vmatprep.subr.bf16.mxu0 0
        %3302 = vmatpush1.bf16.msra.mxu0 %v2990
        %3303 = vmatprep.subr.bf16.mxu0 0
        %3304 = vmatpush1.bf16.msra.mxu0 %v2991
        %3305 = vmatprep.subr.bf16.mxu0 0
        %3306 = vmatpush1.bf16.msra.mxu0 %v2992
        %3307 = vmatprep.subr.bf16.mxu0 0
        %3308 = vmatpush1.bf16.msra.mxu0 %v2993
        %3309 = vmatprep.subr.bf16.mxu0 0
        %3310 = vmatpush1.bf16.msra.mxu0 %v2994
        %3311 = vmatprep.subr.bf16.mxu0 0
        %3312 = vmatpush1.bf16.msra.mxu0 %v2995
        %3313 = vmatprep.subr.bf16.mxu0 0
        %3314 = vmatpush1.bf16.msra.mxu0 %v2996
        %3315 = vmatprep.subr.bf16.mxu0 0
        %3316 = vmatpush1.bf16.msra.mxu0 %v2997
        %3317 = vmatprep.subr.bf16.mxu0 0
        %3318 = vmatpush1.bf16.msra.mxu0 %v2998
        %3319 = vmatprep.mubr.bf16.mxu0 %v2164
        %3320 = vmatmul.mubr.bf16.gmra.mrb[0].mxu0 %v2163
        %v3321 = vpop.f32.mrb[0].mxu0
        %v3322 = vadd.f32 %v3282, %v3321
        %v3323 = vpop.f32.mrb[0].mxu0
        %v3324 = vpop.f32.mrb[0].mxu0
        %v3325 = vpop.f32.mrb[0].mxu0
        %3326 = vdwg.mxu0
        %3327 = vmatprep.subr.bf16.mxu0 0
        %3328 = vmatpush1.bf16.msra.mxu0 %v2999
        %3329 = vmatprep.subr.bf16.mxu0 0
        %3330 = vmatpush1.bf16.msra.mxu0 %v3000
        %3331 = vmatprep.subr.bf16.mxu0 0
        %3332 = vmatpush1.bf16.msra.mxu0 %v3001
        %3333 = vmatprep.subr.bf16.mxu0 0
        %3334 = vmatpush1.bf16.msra.mxu0 %v3002
        %3335 = vmatprep.subr.bf16.mxu0 0
        %3336 = vmatpush1.bf16.msra.mxu0 %v3003
        %3337 = vmatprep.subr.bf16.mxu0 0
        %3338 = vmatpush1.bf16.msra.mxu0 %v3004
        %3339 = vmatprep.subr.bf16.mxu0 0
        %3340 = vmatpush1.bf16.msra.mxu0 %v3005
        %3341 = vmatprep.subr.bf16.mxu0 0
        %3342 = vmatpush1.bf16.msra.mxu0 %v3006
        %3343 = vmatprep.subr.bf16.mxu0 0
        %3344 = vmatpush1.bf16.msra.mxu0 %v3007
        %3345 = vmatprep.subr.bf16.mxu0 0
        %3346 = vmatpush1.bf16.msra.mxu0 %v3008
        %3347 = vmatprep.subr.bf16.mxu0 0
        %3348 = vmatpush1.bf16.msra.mxu0 %v3009
        %3349 = vmatprep.subr.bf16.mxu0 0
        %3350 = vmatpush1.bf16.msra.mxu0 %v3010
        %3351 = vmatprep.subr.bf16.mxu0 0
        %3352 = vmatpush1.bf16.msra.mxu0 %v3011
        %3353 = vmatprep.subr.bf16.mxu0 0
        %3354 = vmatpush1.bf16.msra.mxu0 %v3012
        %3355 = vmatprep.subr.bf16.mxu0 0
        %3356 = vmatpush1.bf16.msra.mxu0 %v3013
        %3357 = vmatprep.subr.bf16.mxu0 0
        %3358 = vmatpush1.bf16.msra.mxu0 %v3014
        %3359 = vmatprep.mubr.bf16.mxu0 %v2166
        %3360 = vmatmul.mubr.bf16.gmra.mrb[0].mxu0 %v2165
        %v3361 = vpop.f32.mrb[0].mxu0
        %v3362 = vadd.f32 %v3322, %v3361
        %v3363 = vpop.f32.mrb[0].mxu0
        %v3364 = vpop.f32.mrb[0].mxu0
        %v3365 = vpop.f32.mrb[0].mxu0
        %3366 = vdwg.mxu0
        %3367 = vmatprep.subr.bf16.mxu0 0
        %3368 = vmatpush1.bf16.msra.mxu0 %v3015
        %3369 = vmatprep.subr.bf16.mxu0 0
        %3370 = vmatpush1.bf16.msra.mxu0 %v3016
        %3371 = vmatprep.subr.bf16.mxu0 0
        %3372 = vmatpush1.bf16.msra.mxu0 %v3017
        %3373 = vmatprep.subr.bf16.mxu0 0
        %3374 = vmatpush1.bf16.msra.mxu0 %v3018
        %3375 = vmatprep.subr.bf16.mxu0 0
        %3376 = vmatpush1.bf16.msra.mxu0 %v3019
        %3377 = vmatprep.subr.bf16.mxu0 0
        %3378 = vmatpush1.bf16.msra.mxu0 %v3020
        %3379 = vmatprep.subr.bf16.mxu0 0
        %3380 = vmatpush1.bf16.msra.mxu0 %v3021
        %3381 = vmatprep.subr.bf16.mxu0 0
        %3382 = vmatpush1.bf16.msra.mxu0 %v3022
        %3383 = vmatprep.subr.bf16.mxu0 0
        %3384 = vmatpush1.bf16.msra.mxu0 %v3023
        %3385 = vmatprep.subr.bf16.mxu0 0
        %3386 = vmatpush1.bf16.msra.mxu0 %v3024
        %3387 = vmatprep.subr.bf16.mxu0 0
        %3388 = vmatpush1.bf16.msra.mxu0 %v3025
        %3389 = vmatprep.subr.bf16.mxu0 0
        %3390 = vmatpush1.bf16.msra.mxu0 %v3026
        %3391 = vmatprep.subr.bf16.mxu0 0
        %3392 = vmatpush1.bf16.msra.mxu0 %v3027
        %3393 = vmatprep.subr.bf16.mxu0 0
        %3394 = vmatpush1.bf16.msra.mxu0 %v3028
        %3395 = vmatprep.subr.bf16.mxu0 0
        %3396 = vmatpush1.bf16.msra.mxu0 %v3029
        %3397 = vmatprep.subr.bf16.mxu0 0
        %3398 = vmatpush1.bf16.msra.mxu0 %v3030
        %3399 = vmatprep.mubr.bf16.mxu0 %v2168
        %3400 = vmatmul.mubr.bf16.gmra.mrb[0].mxu0 %v2167
        %v3401 = vpop.f32.mrb[0].mxu0
        %v3402 = vadd.f32 %v3362, %v3401
        %v3403 = vpop.f32.mrb[0].mxu0
        %v3404 = vpop.f32.mrb[0].mxu0
        %v3405 = vpop.f32.mrb[0].mxu0
        %3406 = vdwg.mxu0
        %3407 = vmatprep.subr.bf16.mxu0 0
        %3408 = vmatpush1.bf16.msra.mxu0 %v3031
        %3409 = vmatprep.subr.bf16.mxu0 0
        %3410 = vmatpush1.bf16.msra.mxu0 %v3032
        %3411 = vmatprep.subr.bf16.mxu0 0
        %3412 = vmatpush1.bf16.msra.mxu0 %v3033
        %3413 = vmatprep.subr.bf16.mxu0 0
        %3414 = vmatpush1.bf16.msra.mxu0 %v3034
        %3415 = vmatprep.subr.bf16.mxu0 0
        %3416 = vmatpush1.bf16.msra.mxu0 %v3035
        %3417 = vmatprep.subr.bf16.mxu0 0
        %3418 = vmatpush1.bf16.msra.mxu0 %v3036
        %3419 = vmatprep.subr.bf16.mxu0 0
        %3420 = vmatpush1.bf16.msra.mxu0 %v3037
        %3421 = vmatprep.subr.bf16.mxu0 0
        %3422 = vmatpush1.bf16.msra.mxu0 %v3038
        %3423 = vmatprep.subr.bf16.mxu0 0
        %3424 = vmatpush1.bf16.msra.mxu0 %v3039
        %3425 = vmatprep.subr.bf16.mxu0 0
        %3426 = vmatpush1.bf16.msra.mxu0 %v3040
        %3427 = vmatprep.subr.bf16.mxu0 0
        %3428 = vmatpush1.bf16.msra.mxu0 %v3041
        %3429 = vmatprep.subr.bf16.mxu0 0
        %3430 = vmatpush1.bf16.msra.mxu0 %v3042
        %3431 = vmatprep.subr.bf16.mxu0 0
        %3432 = vmatpush1.bf16.msra.mxu0 %v3043
        %3433 = vmatprep.subr.bf16.mxu0 0
        %3434 = vmatpush1.bf16.msra.mxu0 %v3044
        %3435 = vmatprep.subr.bf16.mxu0 0
        %3436 = vmatpush1.bf16.msra.mxu0 %v3045
        %3437 = vmatprep.subr.bf16.mxu0 0
        %3438 = vmatpush1.bf16.msra.mxu0 %v3046
        %3439 = vmatprep.mubr.bf16.mxu0 %v2170
        %3440 = vmatmul.mubr.bf16.gmra.mrb[0].mxu0 %v2169
        %v3441 = vpop.f32.mrb[0].mxu0
        %v3442 = vadd.f32 %v3402, %v3441
        %v3443 = vpop.f32.mrb[0].mxu0
        %v3444 = vpop.f32.mrb[0].mxu0
        %v3445 = vpop.f32.mrb[0].mxu0
        %3446 = vdwg.mxu0
        %3447 = vmatprep.subr.bf16.mxu0 0
        %3448 = vmatpush1.bf16.msra.mxu0 %v3047
        %3449 = vmatprep.subr.bf16.mxu0 0
        %3450 = vmatpush1.bf16.msra.mxu0 %v3048
        %3451 = vmatprep.subr.bf16.mxu0 0
        %3452 = vmatpush1.bf16.msra.mxu0 %v3049
        %3453 = vmatprep.subr.bf16.mxu0 0
        %3454 = vmatpush1.bf16.msra.mxu0 %v3050
        %3455 = vmatprep.subr.bf16.mxu0 0
        %3456 = vmatpush1.bf16.msra.mxu0 %v3051
        %3457 = vmatprep.subr.bf16.mxu0 0
        %3458 = vmatpush1.bf16.msra.mxu0 %v3052
        %3459 = vmatprep.subr.bf16.mxu0 0
        %3460 = vmatpush1.bf16.msra.mxu0 %v3053
        %3461 = vmatprep.subr.bf16.mxu0 0
        %3462 = vmatpush1.bf16.msra.mxu0 %v3054
        %3463 = vmatprep.subr.bf16.mxu0 0
        %3464 = vmatpush1.bf16.msra.mxu0 %v3055
        %3465 = vmatprep.subr.bf16.mxu0 0
        %3466 = vmatpush1.bf16.msra.mxu0 %v3056
        %3467 = vmatprep.subr.bf16.mxu0 0
        %3468 = vmatpush1.bf16.msra.mxu0 %v3057
        %3469 = vmatprep.subr.bf16.mxu0 0
        %3470 = vmatpush1.bf16.msra.mxu0 %v3058
        %3471 = vmatprep.subr.bf16.mxu0 0
        %3472 = vmatpush1.bf16.msra.mxu0 %v3059
        %3473 = vmatprep.subr.bf16.mxu0 0
        %3474 = vmatpush1.bf16.msra.mxu0 %v3060
        %3475 = vmatprep.subr.bf16.mxu0 0
        %3476 = vmatpush1.bf16.msra.mxu0 %v3061
        %3477 = vmatprep.subr.bf16.mxu0 0
        %3478 = vmatpush1.bf16.msra.mxu0 %v3062
        %3479 = vmatprep.mubr.bf16.mxu0 %v2172
        %3480 = vmatmul.mubr.bf16.gmra.mrb[0].mxu0 %v2171
        %v3481 = vpop.f32.mrb[0].mxu0
        %v3482 = vadd.f32 %v3442, %v3481
        %v3483 = vpop.f32.mrb[0].mxu0
        %v3484 = vpop.f32.mrb[0].mxu0
        %v3485 = vpop.f32.mrb[0].mxu0
        %3486 = vdwg.mxu0
        %3487 = vmatprep.subr.bf16.mxu0 0
        %3488 = vmatpush1.bf16.msra.mxu0 %v3063
        %3489 = vmatprep.subr.bf16.mxu0 0
        %3490 = vmatpush1.bf16.msra.mxu0 %v3064
        %3491 = vmatprep.subr.bf16.mxu0 0
        %3492 = vmatpush1.bf16.msra.mxu0 %v3065
        %3493 = vmatprep.subr.bf16.mxu0 0
        %3494 = vmatpush1.bf16.msra.mxu0 %v3066
        %3495 = vmatprep.subr.bf16.mxu0 0
        %3496 = vmatpush1.bf16.msra.mxu0 %v3067
        %3497 = vmatprep.subr.bf16.mxu0 0
        %3498 = vmatpush1.bf16.msra.mxu0 %v3068
        %3499 = vmatprep.subr.bf16.mxu0 0
        %3500 = vmatpush1.bf16.msra.mxu0 %v3069
        %3501 = vmatprep.subr.bf16.mxu0 0
        %3502 = vmatpush1.bf16.msra.mxu0 %v3070
        %3503 = vmatprep.subr.bf16.mxu0 0
        %3504 = vmatpush1.bf16.msra.mxu0 %v3071
        %3505 = vmatprep.subr.bf16.mxu0 0
        %3506 = vmatpush1.bf16.msra.mxu0 %v3072
        %3507 = vmatprep.subr.bf16.mxu0 0
        %3508 = vmatpush1.bf16.msra.mxu0 %v3073
        %3509 = vmatprep.subr.bf16.mxu0 0
        %3510 = vmatpush1.bf16.msra.mxu0 %v3074
        %3511 = vmatprep.subr.bf16.mxu0 0
        %3512 = vmatpush1.bf16.msra.mxu0 %v3075
        %3513 = vmatprep.subr.bf16.mxu0 0
        %3514 = vmatpush1.bf16.msra.mxu0 %v3076
        %3515 = vmatprep.subr.bf16.mxu0 0
        %3516 = vmatpush1.bf16.msra.mxu0 %v3077
        %3517 = vmatprep.subr.bf16.mxu0 0
        %3518 = vmatpush1.bf16.msra.mxu0 %v3078
        %3519 = vmatprep.mubr.bf16.mxu0 %v2174
        %3520 = vmatmul.mubr.bf16.gmra.mrb[0].mxu0 %v2173
        %v3521 = vpop.f32.mrb[0].mxu0
        %v3522 = vadd.f32 %v3482, %v3521
        %v3523 = vpop.f32.mrb[0].mxu0
        %v3524 = vpop.f32.mrb[0].mxu0
        %v3525 = vpop.f32.mrb[0].mxu0
        %3526 = vdwg.mxu0
        %v3527 = vadd.f32 %v1532, %v3522
        %s3528 = scalar_lea.vmem %s9, %s29
        %v3529 = vld [vmem:[%s3528] sm:$0x1]
        %s3530 = scalar_lea.vmem %s10, %s29
        %v3531 = vld [vmem:[%s3530] sm:$0x1]
        %v3532 = vsel %vm661, %v3527, 0.0
        %3533 = vadd.xlane.f32.xlu0 %v3532
        %v3534 = vpop.xlane.xlu0 %3533
        %v3535 = vmul.f32 %v3534, %v1508
        %v3536 = vsub.f32 %v3527, %v3535
        %v3537 = vmul.f32 %v3536, %v3536
        %v3538 = vsel %vm661, %v3537, 0.0
        %3539 = vadd.xlane.f32.xlu0 %v3538
        %v3540 = vpop.xlane.xlu0 %3539
        %v3541 = vmul.f32 %v3540, %v1508
        %v3542 = vadd.f32 %v3541, 1e-05
        %v3543 = vrsqrt.pop %v3542
        %v3544 = vmul.f32 %v3536, %v3543
        %v3546 = vlaneseq
        %v3547 = vshrl.u32 %v3546, 7
        %v3548 = vsub.s32 0, %v3547
        %v3549 = vrot.slane %v3529, %v3548
        %v3551 = vmul.f32 %v3544, %v3549
        %v3553 = vlaneseq
        %v3554 = vshrl.u32 %v3553, 7
        %v3555 = vsub.s32 0, %v3554
        %v3556 = vrot.slane %v3531, %v3555
        %v3558 = vadd.f32 %v3551, %v3556
        %3559 = vst.msk [vmem:[#allocation2] sm:$0xff] %vm661, %v3558
        %p3560 = scmp.eq.s32.totalorder %s29, 1
        // Predicated region
        $region93: #{tpu_custom_call.1} parent=87 // pred_check
          %p3561 = pneg %p3560
        $region94: #{tpu_custom_call.1} parent=87 // pred_check_branch
          %3563 = sbr.rel (%p3561) target = $region96
        $region95: #{tpu_custom_call.1} parent=87 // pred_region
          %v3564 = vld [vmem:[%s15] sm:$0xff]
          %v3565 = vld [vmem:[%s15 + $0x8] sm:$0xff]
          %v3566 = vld [vmem:[%s15 + $0x10] sm:$0xff]
          %v3567 = vld [vmem:[%s15 + $0x18] sm:$0xff]
          %v3568 = vld [vmem:[%s16] sm:$0x1]
          %v3570 = vlaneseq
          %v3571 = vshrl.u32 %v3570, 7
          %v3572 = vsub.s32 0, %v3571
          %v3573 = vrot.slane %v3568, %v3572
          %v3576 = vsel %vm661, %v3558, 0
          %3578 = vmatprep.subr.mxu0 0.0
          %3579 = vmatpush1.msra.mxu0 %v3564
          %3580 = vmatprep.subr.mxu0 0.0
          %3581 = vmatpush1.msra.mxu0 %v3565
          %3582 = vmatprep.subr.mxu0 0.0
          %3583 = vmatpush1.msra.mxu0 %v3566
          %3584 = vmatprep.subr.mxu0 0.0
          %3585 = vmatpush1.msra.mxu0 %v3567
          %3586 = vmatprep.subr.mxu0 0.0
          %3587 = vmatpush1.msra.mxu0 0.0
          %3588 = vmatprep.subr.mxu0 0.0
          %3589 = vmatpush1.msra.mxu0 0.0
          %3590 = vmatprep.subr.mxu0 0.0
          %3591 = vmatpush1.msra.mxu0 0.0
          %3592 = vmatprep.subr.mxu0 0.0
          %3593 = vmatpush1.msra.mxu0 0.0
          %3594 = vmatprep.subr.mxu0 0.0
          %3595 = vmatpush1.msra.mxu0 0.0
          %3596 = vmatprep.subr.mxu0 0.0
          %3597 = vmatpush1.msra.mxu0 0.0
          %3598 = vmatprep.subr.mxu0 0.0
          %3599 = vmatpush1.msra.mxu0 0.0
          %3600 = vmatprep.subr.mxu0 0.0
          %3601 = vmatpush1.msra.mxu0 0.0
          %3602 = vmatprep.subr.mxu0 0.0
          %3603 = vmatpush1.msra.mxu0 0.0
          %3604 = vmatprep.subr.mxu0 0.0
          %3605 = vmatpush1.msra.mxu0 0.0
          %3606 = vmatprep.subr.mxu0 0.0
          %3607 = vmatpush1.msra.mxu0 0.0
          %3608 = vmatprep.subr.mxu0 0.0
          %3609 = vmatpush1.msra.mxu0 0.0
          %3610 = vmatprep.subr.mxu0 0.0
          %3611 = vmatpush1.msra.mxu0 0.0
          %3612 = vmatprep.subr.mxu0 0.0
          %3613 = vmatpush1.msra.mxu0 0.0
          %3614 = vmatprep.subr.mxu0 0.0
          %3615 = vmatpush1.msra.mxu0 0.0
          %3616 = vmatprep.subr.mxu0 0.0
          %3617 = vmatpush1.msra.mxu0 0.0
          %3618 = vmatprep.subr.mxu0 0.0
          %3619 = vmatpush1.msra.mxu0 0.0
          %3620 = vmatprep.subr.mxu0 0.0
          %3621 = vmatpush1.msra.mxu0 0.0
          %3622 = vmatprep.subr.mxu0 0.0
          %3623 = vmatpush1.msra.mxu0 0.0
          %3624 = vmatprep.subr.mxu0 0.0
          %3625 = vmatpush1.msra.mxu0 0.0
          %3626 = vmatprep.subr.mxu0 0.0
          %3627 = vmatpush1.msra.mxu0 0.0
          %3628 = vmatprep.subr.mxu0 0.0
          %3629 = vmatpush1.msra.mxu0 0.0
          %3630 = vmatprep.subr.mxu0 0.0
          %3631 = vmatpush1.msra.mxu0 0.0
          %3632 = vmatprep.subr.mxu0 0.0
          %3633 = vmatpush1.msra.mxu0 0.0
          %3634 = vmatprep.subr.mxu0 0.0
          %3635 = vmatpush1.msra.mxu0 0.0
          %3636 = vmatprep.subr.mxu0 0.0
          %3637 = vmatpush1.msra.mxu0 0.0
          %3638 = vmatprep.subr.mxu0 0.0
          %3639 = vmatpush1.msra.mxu0 0.0
          %3640 = vmatprep.subr.mxu0 0.0
          %3641 = vmatpush1.msra.mxu0 0.0
          %3642 = vmatprep.mubr.f32.mxu0 0.0
          %3643 = vmatmul.mubr.f32.gmra.mrb[0].mxu0 %v3576
          %v3644 = vpop.f32.mrb[0].mxu0
          %v3645 = vadd.f32 %v3573, %v3644
          %v3646 = vpop.f32.mrb[0].mxu0
          %3647 = vdwg.mxu0
          %3648 = vst [vmem:[#allocation3] sm:$0xff] %v3645
        $region96: #{tpu_custom_call.1} parent=87 // pred_fallthru
          _
        // Predicated region
        $region97: #{tpu_custom_call.1} parent=87 // pred_check
          %p3649 = pneg %p409
        $region98: #{tpu_custom_call.1} parent=87 // pred_check_branch
          %3651 = sbr.rel (%p3649) target = $region100
        $region99: #{tpu_custom_call.1} parent=87 // pred_region
          %s3653 = ssub.s32 128, 128
          %3654 = vsyncadd [#allocation4], %s3653
          %s3656 = sshll.u32 [#allocation3], 4
          %s3657 = int_to_ptr.vmem [resolvable:$true] %s3656
          %3659 = dma.vmem_to_hbm [thread:$0]  %s3657, 128, %s17, [#allocation4]
        $region100: #{tpu_custom_call.1} parent=87 // pred_fallthru
          _
        // Predicated region
        $region101: #{tpu_custom_call.1} parent=87 // pred_check
          %p3660 = pneg %p409
        $region102: #{tpu_custom_call.1} parent=87 // pred_check_branch
          %3662 = sbr.rel (%p3660) target = $region104
        $region103: #{tpu_custom_call.1} parent=87 // pred_region
          %3663 = dma.done [#allocation4], 128
        $region104: #{tpu_custom_call.1} parent=87 // pred_fallthru
          _
      $region88: #{tpu_custom_call.1} parent=5 // pred_fallthru
        _
      %p3664 = scmp.le.s32.totalorder 2, %s24
      // Predicated region
      $region105: #{tpu_custom_call.1} parent=5 // pred_check
        %p3665 = pneg %p3664
      $region106: #{tpu_custom_call.1} parent=5 // pred_check_branch
        %3667 = sbr.rel (%p3665) target = $region108
      $region107: #{tpu_custom_call.1} parent=5 // pred_region
        %s3668 = ssub.s32 %s24, 2
      $region108: #{tpu_custom_call.1} parent=5 // pred_fallthru
        _
    $region6: #{tpu_custom_call.1} parent=1 // loop_footer
      %s28 = sadd.s32 1, %s24
    $region7: #{tpu_custom_call.1} parent=1 // loop_footer_branch
      %23 = sbr.rel target = $region3
    $region8: #{tpu_custom_call.1} parent=1 // loop_exit
      _
    %3669 = vsyncpa [#allocation4], 1
    %s3670 = scalar_lea.sflag [#allocation4], 1
    %3671 = vsyncpa %s3670, 1

</llo_original>
